<compile_context>
chip_gen: v7x
topology: tpu7x:2x2x1
jax: 0.10.0
libtpu: 0.0.40
codegen_flags: <defaults>
</compile_context>

<pallas_src>
import jax
import jax.numpy as jnp
from jax.experimental import pallas as pl
from jax.experimental.pallas import tpu as pltpu

EDGE_FEATURE_DIM = 32           # d_model of the transformer / EdgeFeatureNet output
ATTN_HEADS = 4
HEAD_DIM = EDGE_FEATURE_DIM // ATTN_HEADS
HIDDEN_EDGE1 = 64
HIDDEN_MLP1 = 256
HIDDEN_MLP2 = 128
LN_EPS = 1e-5
BN_EPS = 1e-5

D3 = 3 * EDGE_FEATURE_DIM       # 96  : 3 edge tokens lane-packed
H3 = 3 * ATTN_HEADS             # 12  : packed per-(edge, head) scores
E1_3 = 3 * HIDDEN_EDGE1         # 192 : packed EdgeFeatureNet hidden
FF3 = 3 * 2 * EDGE_FEATURE_DIM  # 192 : packed FFN hidden
PW = 128                        # 128-lane-aligned slot width in the fused projection
NPROJ = 7 * PW                  # [ q | k_rot0..2 | v_rot0..2 ]

# rows of the packed bias / affine slab
(_B1E, _B2E, _S2E, _T2E, _BPROJ, _BO, _G1, _BE1, _BF1, _BF2, _G2, _BE2,
 _B1M, _B2M, _BOUT) = range(15)
_NBIAS = 15


def _round_up(x, m):
    return (x + m - 1) // m * m


def _block_diag3(w):
    r, c = w.shape
    out = jnp.zeros((3 * r, 3 * c), w.dtype)
    for i in range(3):
        out = out.at[i * r:(i + 1) * r, i * c:(i + 1) * c].set(w)
    return out


# ---------------------------------------------------------------------------
# Fused kernel: edge MLP -> transformer layer -> final MLP, one batch tile.
# ---------------------------------------------------------------------------
def fused_ordtri_kernel(
        tail_ref,        # (TB, TAIL_PAD)   f32   [eq|ea|eh|raw|prev|0-pad]
        w1e_ref,         # (TAIL_PAD, 192)  bf16  edge layer-1, 3 edges stacked
        w2e_ref,         # (192, 96)        bf16  edge layer-2 (BN1 folded), block-diag
        wproj_ref,       # (96, 896)        bf16  q | rotated k(x3) | rotated v(x3)
        hsum_ref,        # (96, 12)         bf16  per-(edge,head) sum
        hexp_ref,        # (12, 96)         bf16  broadcast head weight to 8 lanes
        wo_ref,          # (96, 96)         bf16  attn out-proj, block-diag
        mavg_ref,        # (96, 96)         bf16  per-edge 1/32 averaging, block-diag
        wf1_ref,         # (96, 192)        bf16  FFN up, block-diag
        wf2_ref,         # (192, 96)        bf16  FFN down, block-diag
        w1mc_ref,        # (96, 256)        bf16  final MLP layer-1 (ctx part)
        w1mt_ref,        # (TAIL_PAD, 256)  bf16  final MLP layer-1 (tail part)
        w2m_ref,         # (256, 128)       bf16  final MLP layer-2 (BN1 folded)
        w3m_ref,         # (128, OUT_PAD)   bf16  final MLP layer-3 (BN2 folded), padded
        wle_ref,         # (96, OUT_PAD)    bf16  initial edge-logit predictor, placed
        bias_ref,        # (15, SLABW)      f32   packed biases / affines
        out_ref):        # (TB, OUT_PAD)    f32
    f32, bf16 = jnp.float32, jnp.bfloat16

    def mm(a_bf16, w_ref):          # bf16 MXU matmul, f32 accumulation
        return jnp.dot(a_bf16, w_ref[...], preferred_element_type=f32)

    def bias(row, width):           # static slice of the packed bias slab
        return bias_ref[row:row + 1, 0:width]

    tail_bf = tail_ref[...].astype(bf16)             # cast once, used twice

    # ---- Stage 1: EdgeFeatureNet, 3 edges lane-packed ----------------------
    h1 = jnp.maximum(mm(tail_bf, w1e_ref) + bias(_B1E, E1_3), 0.0)
    h2 = jnp.maximum(mm(h1.astype(bf16), w2e_ref) + bias(_B2E, D3), 0.0)
    feats = h2 * bias(_S2E, D3) + bias(_T2E, D3)     # BN2 eval affine
    feats_bf = feats.astype(bf16)                    # used twice (proj + wle)

    # ---- Stage 2: one transformer encoder layer over the 3 edge tokens -----
    # One fused matmul produces q and rotated copies of k / v: rotation r puts
    # key/value of edge (e+r)%3 into query-edge e's 32-lane slot, so every
    # (query, key) pair is a plain elementwise product on (TB, 96).
    proj = mm(feats_bf, wproj_ref) + bias(_BPROJ, NPROJ)          # (TB, 896)
    q = proj[:, 0:D3]
    s = []
    for r in range(3):
        kr = proj[:, (1 + r) * PW:(1 + r) * PW + D3]
        s.append(mm((q * kr).astype(bf16), hsum_ref))             # (TB, 12)
    smax = jnp.maximum(jnp.maximum(s[0], s[1]), s[2])
    p = [jnp.exp(sr - smax) for sr in s]
    inv_z = pl.reciprocal(p[0] + p[1] + p[2])                     # exact, f32
    o = None
    for r in range(3):
        wgt = mm((p[r] * inv_z).astype(bf16), hexp_ref)           # (TB, 96)
        vr = proj[:, (4 + r) * PW:(4 + r) * PW + D3]
        o = wgt * vr if o is None else o + wgt * vr

    y = feats + mm(o.astype(bf16), wo_ref) + bias(_BO, D3)
    # per-edge LayerNorm via block-diagonal averaging matmuls (stays on MXU)
    mu = mm(y.astype(bf16), mavg_ref)
    yc = y - mu
    var = mm((yc * yc).astype(bf16), mavg_ref)
    y = yc * jax.lax.rsqrt(var + LN_EPS) * bias(_G1, D3) + bias(_BE1, D3)
    y_bf = y.astype(bf16)
    ff = jnp.maximum(mm(y_bf, wf1_ref) + bias(_BF1, FF3), 0.0)
    z = y + mm(ff.astype(bf16), wf2_ref) + bias(_BF2, D3)
    mu2 = mm(z.astype(bf16), mavg_ref)
    zc = z - mu2
    var2 = mm((zc * zc).astype(bf16), mavg_ref)
    ctx = zc * jax.lax.rsqrt(var2 + LN_EPS) * bias(_G2, D3) + bias(_BE2, D3)

    # ---- Stage 3: final MLP + all six logit groups into one 128-wide slab --
    h1m = (mm(ctx.astype(bf16), w1mc_ref) + mm(tail_bf, w1mt_ref)
           + bias(_B1M, HIDDEN_MLP1))
    h1m = jnp.maximum(h1m, 0.0)
    h2m = jnp.maximum(mm(h1m.astype(bf16), w2m_ref) + bias(_B2M, HIDDEN_MLP2),
                      0.0)
    out_w = out_ref.shape[-1]
    out = (mm(h2m.astype(bf16), w3m_ref) + mm(feats_bf, wle_ref)
           + bias(_BOUT, out_w))
    out_ref[...] = out


# ---------------------------------------------------------------------------
# Offline parameter preparation: fold, lane-pack, block-diagonalize, pad, cast.
# ---------------------------------------------------------------------------
def prepare_fused_params(params, node_emb_dim, k_classes):
    nd, d, k = node_emb_dim, EDGE_FEATURE_DIM, k_classes
    H, hd = ATTN_HEADS, HEAD_DIM
    tailw = 3 * nd + 6 + 3 * k
    tail_pad = _round_up(tailw, 128)
    out_pad = max(128, _round_up(6 * k, 128))
    slabw = max(NPROJ, out_pad, HIDDEN_MLP1)
    bf16, f32 = jnp.bfloat16, jnp.float32

    e, t, m = params["edge"], params["attn"], params["mlp"]

    def tile3(v):                                     # (1, w) -> (1, 3w)
        return jnp.concatenate([v, v, v], axis=-1)

    # ---- Stage 1: EdgeFeatureNet -------------------------------------------
    # edge_input = [xa, xb, xa-xb, raw2]  ->  xa@(Wa+Wd) + xb@(Wb-Wd) + raw2@Wr
    w1 = e["w1"]
    Wa, Wb, Wd, Wr = w1[:nd], w1[nd:2 * nd], w1[2 * nd:3 * nd], w1[3 * nd:]
    WP, WM = Wa + Wd, Wb - Wd
    w1e = jnp.zeros((tail_pad, E1_3), f32)
    # (xa row, xb row, raw row) in the tail layout [eq|ea|eh|raw(6)|prev(3k)]
    placement = [(0, nd, 3 * nd + 0),       # qr1 : (eq, ea, raw[:, 0:2])
                 (0, 2 * nd, 3 * nd + 2),   # qr2 : (eq, eh, raw[:, 2:4])
                 (nd, 2 * nd, 3 * nd + 4)]  # r1r2: (ea, eh, raw[:, 4:6])
    for ei, (ra, rb, rr) in enumerate(placement):
        c0 = ei * HIDDEN_EDGE1
        w1e = w1e.at[ra:ra + nd, c0:c0 + HIDDEN_EDGE1].set(WP)
        w1e = w1e.at[rb:rb + nd, c0:c0 + HIDDEN_EDGE1].set(WM)
        w1e = w1e.at[rr:rr + 2, c0:c0 + HIDDEN_EDGE1].set(Wr)
    b1e_t = tile3(e["b1"])
    w2f = e["s1"].reshape(-1, 1) * e["w2"]             # fold BN1 (post-ReLU) into lin2
    b2f = e["t1"] @ e["w2"] + e["b2"]
    w2e = _block_diag3(w2f)
    b2e_t, s2e_t, t2e_t = tile3(b2f), tile3(e["s2"]), tile3(e["t2"])

    # ---- Stage 2: transformer layer ----------------------------------------
    scale = 1.0 / float(hd) ** 0.5
    wq_s, bq_s = t["wq"] * scale, t["bq"] * scale       # fold attention scale
    wproj = jnp.zeros((D3, NPROJ), f32)
    bproj = jnp.zeros((1, NPROJ), f32)
    for ei in range(3):                                 # slot 0: q (block diag)
        wproj = wproj.at[ei * d:(ei + 1) * d, ei * d:(ei + 1) * d].set(wq_s)
        bproj = bproj.at[:, ei * d:(ei + 1) * d].set(bq_s)
    for r in range(3):                                  # slots 1-3: k, 4-6: v (rotated)
        ck, cv = (1 + r) * PW, (4 + r) * PW
        for ei in range(3):
            fi = (ei + r) % 3
            wproj = wproj.at[fi * d:(fi + 1) * d,
                             ck + ei * d:ck + (ei + 1) * d].set(t["wk"])
            wproj = wproj.at[fi * d:(fi + 1) * d,
                             cv + ei * d:cv + (ei + 1) * d].set(t["wv"])
            bproj = bproj.at[:, ck + ei * d:ck + (ei + 1) * d].set(t["bk"])
            bproj = bproj.at[:, cv + ei * d:cv + (ei + 1) * d].set(t["bv"])
    hsum = jnp.zeros((D3, H3), f32)
    hexp = jnp.zeros((H3, D3), f32)
    for ei in range(3):
        for h in range(H):
            hsum = hsum.at[ei * d + h * hd:ei * d + (h + 1) * hd,
                           ei * H + h].set(1.0)
            hexp = hexp.at[ei * H + h,
                           ei * d + h * hd:ei * d + (h + 1) * hd].set(1.0)
    wo_bd = _block_diag3(t["wo"])
    mavg = _block_diag3(jnp.full((d, d), 1.0 / d, f32))
    wf1_bd, wf2_bd = _block_diag3(t["wf1"]), _block_diag3(t["wf2"])
    bo_t, bf1_t, bf2_t = tile3(t["bo"]), tile3(t["bf1"]), tile3(t["bf2"])
    g1_t, be1_t = tile3(t["g1"]), tile3(t["be1"])
    g2_t, be2_t = tile3(t["g2"]), tile3(t["be2"])

    # ---- Stage 3: final MLP + initial edge logits ---------------------------
    w1m = m["w1"]                      # rows: [ctx0|ctx1|ctx2 | eq|ea|eh|raw|prev]
    w1mc = w1m[0:D3]
    w1mt = jnp.zeros((tail_pad, HIDDEN_MLP1), f32).at[0:tailw].set(w1m[D3:])
    b1m = m["b1"]
    w2m = m["s1"].reshape(-1, 1) * m["w2"]              # fold BN1
    b2m = m["t1"] @ m["w2"] + m["b2"]
    w3f = m["s2"].reshape(-1, 1) * m["w3"]              # fold BN2
    b3f = m["t2"] @ m["w3"] + m["b3"]
    w3m = jnp.zeros((HIDDEN_MLP2, out_pad), f32).at[:, 0:3 * k].set(w3f)
    wle = jnp.zeros((D3, out_pad), f32)
    bout = jnp.zeros((1, out_pad), f32).at[:, 0:3 * k].set(b3f)
    for ei in range(3):
        c0 = 3 * k + ei * k
        wle = wle.at[ei * d:(ei + 1) * d, c0:c0 + k].set(e["wl"])
        bout = bout.at[:, c0:c0 + k].set(e["bl"])

    # ---- One packed bias / affine slab --------------------------------------
    rows = [b1e_t, b2e_t, s2e_t, t2e_t, bproj, bo_t, g1_t, be1_t,
            bf1_t, bf2_t, g2_t, be2_t, b1m, b2m, bout]
    slab = jnp.zeros((_NBIAS, slabw), f32)
    for r, v in enumerate(rows):
        slab = slab.at[r, 0:v.shape[-1]].set(v.reshape(-1))

    return (w1e.astype(bf16), w2e.astype(bf16), wproj.astype(bf16),
            hsum.astype(bf16), hexp.astype(bf16), wo_bd.astype(bf16),
            mavg.astype(bf16), wf1_bd.astype(bf16), wf2_bd.astype(bf16),
            w1mc.astype(bf16), w1mt.astype(bf16), w2m.astype(bf16),
            w3m.astype(bf16), wle.astype(bf16), slab)


# ---------------------------------------------------------------------------
# Forward wrapper: one pallas_call, batch-tiled grid (>= 2 steps for megacore).
# ---------------------------------------------------------------------------
def ord_tri_forward(fused, eq_emb, ea_emb, eh_emb,
                    triangle_all_edge_raw_feats, prev_pass_refined_adj_probs,
                    k_classes):
    B, nd = eq_emb.shape
    k = k_classes
    tailw = 3 * nd + 6 + 3 * k
    tail_pad = fused[0].shape[0]           # rows of w1e
    out_pad = fused[-2].shape[-1]          # cols of wle / w3m

    # one fused concat builds the lane-dense, 128-aligned tail slab
    pad_cols = tail_pad - tailw
    pieces = [eq_emb, ea_emb, eh_emb, triangle_all_edge_raw_feats,
              prev_pass_refined_adj_probs]
    if pad_cols:
        pieces.append(jnp.zeros((B, pad_cols), eq_emb.dtype))
    tail = jnp.concatenate(pieces, axis=-1)

    # batch tile: cap 512 rows/step, keep >= 2 steps so ("parallel",) can
    # shard the grid across both v7x TensorCores.  VMEM stays ~5 MB.
    TB = min(512, _round_up((B + 1) // 2, 8))
    Bp = _round_up(B, TB)
    if Bp // TB < 2:
        Bp = 2 * TB
    if Bp != B:
        tail = jnp.pad(tail, ((0, Bp - B), (0, 0)))

    in_specs = [pl.BlockSpec((TB, tail_pad), lambda i: (i, 0))]
    in_specs += [pl.BlockSpec(w.shape, lambda i, n=w.ndim: (0,) * n)
                 for w in fused]
    out_specs = pl.BlockSpec((TB, out_pad), lambda i: (i, 0))

    out = pl.pallas_call(
        fused_ordtri_kernel,
        grid=(Bp // TB,),
        in_specs=in_specs,
        out_specs=out_specs,
        out_shape=jax.ShapeDtypeStruct((Bp, out_pad), jnp.float32),
        compiler_params=pltpu.CompilerParams(
            dimension_semantics=("parallel",)),
    )(tail, *fused)

    out = out[:B]
    la_final = out[:, 0:k]
    lh_final = out[:, k:2 * k]
    lr_final = out[:, 2 * k:3 * k]
    qr1_logits = out[:, 3 * k:4 * k]
    qr2_logits = out[:, 4 * k:5 * k]
    r1r2_logits = out[:, 5 * k:6 * k]
    return la_final, lh_final, lr_final, qr1_logits, qr2_logits, r1r2_logits


# ---------------------------------------------------------------------------
# Deterministic synthetic parameters (x @ W orientation, W = (in, out)).
# ---------------------------------------------------------------------------
def init_params(key, node_emb_dim, k_classes):
    d = EDGE_FEATURE_DIM
    keys = jax.random.split(key, 48)
    it = iter(keys)

    def w(shape, s=0.05):
        return (s * jax.random.normal(next(it), shape)).astype(jnp.float32)

    def bn(n):
        gamma = 1.0 + 0.1 * jax.random.normal(next(it), (1, n))
        beta = 0.05 * jax.random.normal(next(it), (1, n))
        mean = jnp.zeros((1, n))
        var = jnp.ones((1, n))
        scale = gamma / jnp.sqrt(var + BN_EPS)
        shift = beta - mean * scale
        return scale.astype(jnp.float32), shift.astype(jnp.float32)

    in_edge = 3 * node_emb_dim + 2
    edge = dict(
        w1=w((in_edge, HIDDEN_EDGE1)), b1=w((1, HIDDEN_EDGE1)),
        w2=w((HIDDEN_EDGE1, d)), b2=w((1, d)),
        wl=w((d, k_classes)), bl=w((1, k_classes)))
    edge["s1"], edge["t1"] = bn(HIDDEN_EDGE1)
    edge["s2"], edge["t2"] = bn(d)

    attn = dict(
        wq=w((d, d)), bq=w((1, d)),
        wk=w((d, d)), bk=w((1, d)),
        wv=w((d, d)), bv=w((1, d)),
        wo=w((d, d)), bo=w((1, d)),
        g1=jnp.ones((1, d), jnp.float32), be1=jnp.zeros((1, d), jnp.float32),
        wf1=w((d, 2 * d)), bf1=w((1, 2 * d)),
        wf2=w((2 * d, d)), bf2=w((1, d)),
        g2=jnp.ones((1, d), jnp.float32), be2=jnp.zeros((1, d), jnp.float32))

    mlp_in = 3 * d + 3 * node_emb_dim + 6 + 3 * k_classes
    mlp = dict(
        w1=w((mlp_in, HIDDEN_MLP1)), b1=w((1, HIDDEN_MLP1)),
        w2=w((HIDDEN_MLP1, HIDDEN_MLP2)), b2=w((1, HIDDEN_MLP2)),
        w3=w((HIDDEN_MLP2, 3 * k_classes)), b3=w((1, 3 * k_classes)))
    mlp["s1"], mlp["t1"] = bn(HIDDEN_MLP1)
    mlp["s2"], mlp["t2"] = bn(HIDDEN_MLP2)

    return dict(edge=edge, attn=attn, mlp=mlp)


# ---------------------------------------------------------------------------
# Pure-JAX eval-mode reference, mirroring the PyTorch module.
# ---------------------------------------------------------------------------
def _layer_norm(x, g, b):
    mu = jnp.mean(x, axis=-1, keepdims=True)
    var = jnp.mean((x - mu) ** 2, axis=-1, keepdims=True)
    return (x - mu) * jax.lax.rsqrt(var + LN_EPS) * g + b


def reference_forward(params, eq, ea, eh, raw, prev, k_classes):
    e, t, m = params["edge"], params["attn"], params["mlp"]
    d, H, hd = EDGE_FEATURE_DIM, ATTN_HEADS, HEAD_DIM

    def edge_net(xa, xb, raw2):
        x = jnp.concatenate([xa, xb, xa - xb, raw2], axis=-1)
        h1 = jnp.maximum(x @ e["w1"] + e["b1"], 0.0) * e["s1"] + e["t1"]
        h2 = jnp.maximum(h1 @ e["w2"] + e["b2"], 0.0) * e["s2"] + e["t2"]
        return h2 @ e["wl"] + e["bl"], h2

    l0, f0 = edge_net(eq, ea, raw[:, 0:2])
    l1, f1 = edge_net(eq, eh, raw[:, 2:4])
    l2, f2 = edge_net(ea, eh, raw[:, 4:6])
    x = jnp.stack([f0, f1, f2], axis=0)                    # (3, B, d)

    B = x.shape[1]
    q = (x @ t["wq"] + t["bq"]).reshape(3, B, H, hd) * (1.0 / float(hd) ** 0.5)
    kk = (x @ t["wk"] + t["bk"]).reshape(3, B, H, hd)
    v = (x @ t["wv"] + t["bv"]).reshape(3, B, H, hd)
    sc = jnp.einsum("ebhd,fbhd->ebhf", q, kk)
    w = jax.nn.softmax(sc, axis=-1)
    o = jnp.einsum("ebhf,fbhd->ebhd", w, v).reshape(3, B, d)
    y = _layer_norm(x + o @ t["wo"] + t["bo"], t["g1"], t["be1"])
    ff = jnp.maximum(y @ t["wf1"] + t["bf1"], 0.0) @ t["wf2"] + t["bf2"]
    ctx = _layer_norm(y + ff, t["g2"], t["be2"])           # (3, B, d)

    ctx_flat = jnp.transpose(ctx, (1, 0, 2)).reshape(B, 3 * d)
    comb = jnp.concatenate([ctx_flat, eq, ea, eh, raw, prev], axis=-1)
    h1 = jnp.maximum(comb @ m["w1"] + m["b1"], 0.0) * m["s1"] + m["t1"]
    h2 = jnp.maximum(h1 @ m["w2"] + m["b2"], 0.0) * m["s2"] + m["t2"]
    refined = h2 @ m["w3"] + m["b3"]
    k = k_classes
    return (refined[:, 0:k], refined[:, k:2 * k], refined[:, 2 * k:3 * k],
            l0, l1, l2)


# ---------------------------------------------------------------------------
if __name__ == "__main__":
    key = jax.random.PRNGKey(0)
    node_emb_dim, k_classes, B = 16, 4, 8

    pkey, dkey = jax.random.split(key)
    raw_params = init_params(pkey, node_emb_dim, k_classes)
    fused_params = prepare_fused_params(raw_params, node_emb_dim, k_classes)

    ks = jax.random.split(dkey, 5)
    eq_emb = jax.random.normal(ks[0], (B, node_emb_dim), jnp.float32)
    ea_emb = jax.random.normal(ks[1], (B, node_emb_dim), jnp.float32)
    eh_emb = jax.random.normal(ks[2], (B, node_emb_dim), jnp.float32)
    raw_feats = jax.random.normal(ks[3], (B, 6), jnp.float32)
    prev_probs = jax.nn.softmax(
        jax.random.normal(ks[4], (B, 3, k_classes), jnp.float32),
        axis=-1).reshape(B, 3 * k_classes)

    fwd = jax.jit(ord_tri_forward, static_argnames=("k_classes",))
    outs = fwd(fused_params, eq_emb, ea_emb, eh_emb, raw_feats, prev_probs,
               k_classes=k_classes)
    outs = jax.block_until_ready(outs)

    refs = reference_forward(raw_params, eq_emb, ea_emb, eh_emb, raw_feats,
                             prev_probs, k_classes)
    max_err = 0.0
    for o, r in zip(outs, refs):
        assert o.shape == (B, k_classes)
        assert bool(jnp.all(jnp.isfinite(o)))
        max_err = max(max_err, float(jnp.max(jnp.abs(o - r))))
    assert max_err < 3e-2, f"max abs err vs reference: {max_err}"
    print("KERNEL_OK")
</pallas_src>

<mosaic_0001>
module attributes {stable_mosaic.version = 11 : i64} {
  func.func @fused_ordtri_kernel(%arg0: i32, %arg1: memref<8x128xf32, #tpu.memory_space<vmem>>, %arg2: memref<128x192xbf16, #tpu.memory_space<vmem>>, %arg3: memref<192x96xbf16, #tpu.memory_space<vmem>>, %arg4: memref<96x896xbf16, #tpu.memory_space<vmem>>, %arg5: memref<96x12xbf16, #tpu.memory_space<vmem>>, %arg6: memref<12x96xbf16, #tpu.memory_space<vmem>>, %arg7: memref<96x96xbf16, #tpu.memory_space<vmem>>, %arg8: memref<96x96xbf16, #tpu.memory_space<vmem>>, %arg9: memref<96x192xbf16, #tpu.memory_space<vmem>>, %arg10: memref<192x96xbf16, #tpu.memory_space<vmem>>, %arg11: memref<96x256xbf16, #tpu.memory_space<vmem>>, %arg12: memref<128x256xbf16, #tpu.memory_space<vmem>>, %arg13: memref<256x128xbf16, #tpu.memory_space<vmem>>, %arg14: memref<128x128xbf16, #tpu.memory_space<vmem>>, %arg15: memref<96x128xbf16, #tpu.memory_space<vmem>>, %arg16: memref<15x896xf32, #tpu.memory_space<vmem>>, %arg17: memref<8x128xf32, #tpu.memory_space<vmem>>) attributes {dimension_semantics = [#tpu.dimension_semantics<parallel>], iteration_bounds = array<i64: 2>, scalar_prefetch = 0 : i64, scratch_operands = 0 : i64, tpu.core_type = #tpu.core_type<tc>, window_params = [{transform_indices = @transform_0, window_bounds = array<i64: 8, 128>}, {pipeline_mode = #tpu.pipeline_mode<synchronous>, transform_indices = @transform_1, window_bounds = array<i64: 128, 192>}, {pipeline_mode = #tpu.pipeline_mode<synchronous>, transform_indices = @transform_2, window_bounds = array<i64: 192, 96>}, {pipeline_mode = #tpu.pipeline_mode<synchronous>, transform_indices = @transform_3, window_bounds = array<i64: 96, 896>}, {pipeline_mode = #tpu.pipeline_mode<synchronous>, transform_indices = @transform_4, window_bounds = array<i64: 96, 12>}, {pipeline_mode = #tpu.pipeline_mode<synchronous>, transform_indices = @transform_5, window_bounds = array<i64: 12, 96>}, {pipeline_mode = #tpu.pipeline_mode<synchronous>, transform_indices = @transform_6, window_bounds = array<i64: 96, 96>}, {pipeline_mode = #tpu.pipeline_mode<synchronous>, transform_indices = @transform_7, window_bounds = array<i64: 96, 96>}, {pipeline_mode = #tpu.pipeline_mode<synchronous>, transform_indices = @transform_8, window_bounds = array<i64: 96, 192>}, {pipeline_mode = #tpu.pipeline_mode<synchronous>, transform_indices = @transform_9, window_bounds = array<i64: 192, 96>}, {pipeline_mode = #tpu.pipeline_mode<synchronous>, transform_indices = @transform_10, window_bounds = array<i64: 96, 256>}, {pipeline_mode = #tpu.pipeline_mode<synchronous>, transform_indices = @transform_11, window_bounds = array<i64: 128, 256>}, {pipeline_mode = #tpu.pipeline_mode<synchronous>, transform_indices = @transform_12, window_bounds = array<i64: 256, 128>}, {pipeline_mode = #tpu.pipeline_mode<synchronous>, transform_indices = @transform_13, window_bounds = array<i64: 128, 128>}, {pipeline_mode = #tpu.pipeline_mode<synchronous>, transform_indices = @transform_14, window_bounds = array<i64: 96, 128>}, {pipeline_mode = #tpu.pipeline_mode<synchronous>, transform_indices = @transform_15, window_bounds = array<i64: 15, 896>}, {transform_indices = @transform_16, window_bounds = array<i64: 8, 128>}]} {
    %c0 = arith.constant 0 : index
    %c0_0 = arith.constant 0 : index
    %0 = vector.load %arg1[%c0, %c0_0] : memref<8x128xf32, #tpu.memory_space<vmem>>, vector<8x128xf32>
    %1 = arith.truncf %0 : vector<8x128xf32> to vector<8x128xbf16>
    %c0_1 = arith.constant 0 : index
    %c0_2 = arith.constant 0 : index
    %2 = vector.load %arg2[%c0_1, %c0_2] : memref<128x192xbf16, #tpu.memory_space<vmem>>, vector<128x192xbf16>
    %cst = arith.constant dense<0.000000e+00> : vector<8x192xf32>
    %3 = tpu.matmul %1, %2, %cst {dimension_numbers = #tpu.dot_dimension_numbers<[1], [0], [0], [1], [0, 0, 1, 1], [], []>} : vector<8x128xbf16>, vector<128x192xbf16>, vector<8x192xf32> -> vector<8x192xf32>
    %c0_3 = arith.constant 0 : index
    %c0_4 = arith.constant 0 : index
    %4 = vector.load %arg16[%c0_3, %c0_4] : memref<15x896xf32, #tpu.memory_space<vmem>>, vector<1x192xf32>
    %5 = vector.broadcast %4 : vector<1x192xf32> to vector<8x192xf32>
    %6 = arith.addf %3, %5 : vector<8x192xf32>
    %cst_5 = arith.constant 0.000000e+00 : f32
    %7 = vector.broadcast %cst_5 : f32 to vector<8x192xf32>
    %8 = arith.maximumf %6, %7 : vector<8x192xf32>
    %9 = arith.truncf %8 : vector<8x192xf32> to vector<8x192xbf16>
    %c0_6 = arith.constant 0 : index
    %c0_7 = arith.constant 0 : index
    %10 = vector.load %arg3[%c0_6, %c0_7] : memref<192x96xbf16, #tpu.memory_space<vmem>>, vector<192x96xbf16>
    %cst_8 = arith.constant dense<0.000000e+00> : vector<8x96xf32>
    %11 = tpu.matmul %9, %10, %cst_8 {dimension_numbers = #tpu.dot_dimension_numbers<[1], [0], [0], [1], [0, 0, 1, 1], [], []>} : vector<8x192xbf16>, vector<192x96xbf16>, vector<8x96xf32> -> vector<8x96xf32>
    %c1 = arith.constant 1 : index
    %c0_9 = arith.constant 0 : index
    %12 = vector.load %arg16[%c1, %c0_9] : memref<15x896xf32, #tpu.memory_space<vmem>>, vector<1x96xf32>
    %13 = vector.broadcast %12 : vector<1x96xf32> to vector<8x96xf32>
    %14 = arith.addf %11, %13 : vector<8x96xf32>
    %cst_10 = arith.constant 0.000000e+00 : f32
    %15 = vector.broadcast %cst_10 : f32 to vector<8x96xf32>
    %16 = arith.maximumf %14, %15 : vector<8x96xf32>
    %c2 = arith.constant 2 : index
    %c0_11 = arith.constant 0 : index
    %17 = vector.load %arg16[%c2, %c0_11] : memref<15x896xf32, #tpu.memory_space<vmem>>, vector<1x96xf32>
    %18 = vector.broadcast %17 : vector<1x96xf32> to vector<8x96xf32>
    %19 = arith.mulf %16, %18 : vector<8x96xf32>
    %c3 = arith.constant 3 : index
    %c0_12 = arith.constant 0 : index
    %20 = vector.load %arg16[%c3, %c0_12] : memref<15x896xf32, #tpu.memory_space<vmem>>, vector<1x96xf32>
    %21 = vector.broadcast %20 : vector<1x96xf32> to vector<8x96xf32>
    %22 = arith.addf %19, %21 : vector<8x96xf32>
    %23 = arith.truncf %22 : vector<8x96xf32> to vector<8x96xbf16>
    %c0_13 = arith.constant 0 : index
    %c0_14 = arith.constant 0 : index
    %24 = vector.load %arg4[%c0_13, %c0_14] : memref<96x896xbf16, #tpu.memory_space<vmem>>, vector<96x896xbf16>
    %cst_15 = arith.constant dense<0.000000e+00> : vector<8x896xf32>
    %25 = tpu.matmul %23, %24, %cst_15 {dimension_numbers = #tpu.dot_dimension_numbers<[1], [0], [0], [1], [0, 0, 1, 1], [], []>} : vector<8x96xbf16>, vector<96x896xbf16>, vector<8x896xf32> -> vector<8x896xf32>
    %c4 = arith.constant 4 : index
    %c0_16 = arith.constant 0 : index
    %26 = vector.load %arg16[%c4, %c0_16] : memref<15x896xf32, #tpu.memory_space<vmem>>, vector<1x896xf32>
    %27 = vector.broadcast %26 : vector<1x896xf32> to vector<8x896xf32>
    %28 = arith.addf %25, %27 : vector<8x896xf32>
    %29 = vector.extract_strided_slice %28 {offsets = [0, 0], sizes = [8, 96], strides = [1, 1]} : vector<8x896xf32> to vector<8x96xf32>
    %30 = vector.extract_strided_slice %28 {offsets = [0, 128], sizes = [8, 96], strides = [1, 1]} : vector<8x896xf32> to vector<8x96xf32>
    %31 = arith.mulf %29, %30 : vector<8x96xf32>
    %32 = arith.truncf %31 : vector<8x96xf32> to vector<8x96xbf16>
    %c0_17 = arith.constant 0 : index
    %c0_18 = arith.constant 0 : index
    %33 = vector.load %arg5[%c0_17, %c0_18] : memref<96x12xbf16, #tpu.memory_space<vmem>>, vector<96x12xbf16>
    %cst_19 = arith.constant dense<0.000000e+00> : vector<8x12xf32>
    %34 = tpu.matmul %32, %33, %cst_19 {dimension_numbers = #tpu.dot_dimension_numbers<[1], [0], [0], [1], [0, 0, 1, 1], [], []>} : vector<8x96xbf16>, vector<96x12xbf16>, vector<8x12xf32> -> vector<8x12xf32>
    %35 = vector.extract_strided_slice %28 {offsets = [0, 256], sizes = [8, 96], strides = [1, 1]} : vector<8x896xf32> to vector<8x96xf32>
    %36 = arith.mulf %29, %35 : vector<8x96xf32>
    %37 = arith.truncf %36 : vector<8x96xf32> to vector<8x96xbf16>
    %c0_20 = arith.constant 0 : index
    %c0_21 = arith.constant 0 : index
    %38 = vector.load %arg5[%c0_20, %c0_21] : memref<96x12xbf16, #tpu.memory_space<vmem>>, vector<96x12xbf16>
    %cst_22 = arith.constant dense<0.000000e+00> : vector<8x12xf32>
    %39 = tpu.matmul %37, %38, %cst_22 {dimension_numbers = #tpu.dot_dimension_numbers<[1], [0], [0], [1], [0, 0, 1, 1], [], []>} : vector<8x96xbf16>, vector<96x12xbf16>, vector<8x12xf32> -> vector<8x12xf32>
    %40 = vector.extract_strided_slice %28 {offsets = [0, 384], sizes = [8, 96], strides = [1, 1]} : vector<8x896xf32> to vector<8x96xf32>
    %41 = arith.mulf %29, %40 : vector<8x96xf32>
    %42 = arith.truncf %41 : vector<8x96xf32> to vector<8x96xbf16>
    %c0_23 = arith.constant 0 : index
    %c0_24 = arith.constant 0 : index
    %43 = vector.load %arg5[%c0_23, %c0_24] : memref<96x12xbf16, #tpu.memory_space<vmem>>, vector<96x12xbf16>
    %cst_25 = arith.constant dense<0.000000e+00> : vector<8x12xf32>
    %44 = tpu.matmul %42, %43, %cst_25 {dimension_numbers = #tpu.dot_dimension_numbers<[1], [0], [0], [1], [0, 0, 1, 1], [], []>} : vector<8x96xbf16>, vector<96x12xbf16>, vector<8x12xf32> -> vector<8x12xf32>
    %45 = arith.maximumf %34, %39 : vector<8x12xf32>
    %46 = arith.maximumf %45, %44 : vector<8x12xf32>
    %47 = arith.subf %34, %46 : vector<8x12xf32>
    %48 = math.exp %47 : vector<8x12xf32>
    %49 = arith.subf %39, %46 : vector<8x12xf32>
    %50 = math.exp %49 : vector<8x12xf32>
    %51 = arith.subf %44, %46 : vector<8x12xf32>
    %52 = math.exp %51 : vector<8x12xf32>
    %53 = arith.addf %48, %50 : vector<8x12xf32>
    %54 = arith.addf %53, %52 : vector<8x12xf32>
    %55 = tpu.reciprocal %54 : vector<8x12xf32> -> vector<8x12xf32>
    %56 = arith.mulf %48, %55 : vector<8x12xf32>
    %57 = arith.truncf %56 : vector<8x12xf32> to vector<8x12xbf16>
    %c0_26 = arith.constant 0 : index
    %c0_27 = arith.constant 0 : index
    %58 = vector.load %arg6[%c0_26, %c0_27] : memref<12x96xbf16, #tpu.memory_space<vmem>>, vector<12x96xbf16>
    %cst_28 = arith.constant dense<0.000000e+00> : vector<8x96xf32>
    %59 = tpu.matmul %57, %58, %cst_28 {dimension_numbers = #tpu.dot_dimension_numbers<[1], [0], [0], [1], [0, 0, 1, 1], [], []>} : vector<8x12xbf16>, vector<12x96xbf16>, vector<8x96xf32> -> vector<8x96xf32>
    %60 = vector.extract_strided_slice %28 {offsets = [0, 512], sizes = [8, 96], strides = [1, 1]} : vector<8x896xf32> to vector<8x96xf32>
    %61 = arith.mulf %59, %60 : vector<8x96xf32>
    %62 = arith.mulf %50, %55 : vector<8x12xf32>
    %63 = arith.truncf %62 : vector<8x12xf32> to vector<8x12xbf16>
    %c0_29 = arith.constant 0 : index
    %c0_30 = arith.constant 0 : index
    %64 = vector.load %arg6[%c0_29, %c0_30] : memref<12x96xbf16, #tpu.memory_space<vmem>>, vector<12x96xbf16>
    %cst_31 = arith.constant dense<0.000000e+00> : vector<8x96xf32>
    %65 = tpu.matmul %63, %64, %cst_31 {dimension_numbers = #tpu.dot_dimension_numbers<[1], [0], [0], [1], [0, 0, 1, 1], [], []>} : vector<8x12xbf16>, vector<12x96xbf16>, vector<8x96xf32> -> vector<8x96xf32>
    %66 = vector.extract_strided_slice %28 {offsets = [0, 640], sizes = [8, 96], strides = [1, 1]} : vector<8x896xf32> to vector<8x96xf32>
    %67 = arith.mulf %65, %66 : vector<8x96xf32>
    %68 = arith.addf %61, %67 : vector<8x96xf32>
    %69 = arith.mulf %52, %55 : vector<8x12xf32>
    %70 = arith.truncf %69 : vector<8x12xf32> to vector<8x12xbf16>
    %c0_32 = arith.constant 0 : index
    %c0_33 = arith.constant 0 : index
    %71 = vector.load %arg6[%c0_32, %c0_33] : memref<12x96xbf16, #tpu.memory_space<vmem>>, vector<12x96xbf16>
    %cst_34 = arith.constant dense<0.000000e+00> : vector<8x96xf32>
    %72 = tpu.matmul %70, %71, %cst_34 {dimension_numbers = #tpu.dot_dimension_numbers<[1], [0], [0], [1], [0, 0, 1, 1], [], []>} : vector<8x12xbf16>, vector<12x96xbf16>, vector<8x96xf32> -> vector<8x96xf32>
    %73 = vector.extract_strided_slice %28 {offsets = [0, 768], sizes = [8, 96], strides = [1, 1]} : vector<8x896xf32> to vector<8x96xf32>
    %74 = arith.mulf %72, %73 : vector<8x96xf32>
    %75 = arith.addf %68, %74 : vector<8x96xf32>
    %76 = arith.truncf %75 : vector<8x96xf32> to vector<8x96xbf16>
    %c0_35 = arith.constant 0 : index
    %c0_36 = arith.constant 0 : index
    %77 = vector.load %arg7[%c0_35, %c0_36] : memref<96x96xbf16, #tpu.memory_space<vmem>>, vector<96x96xbf16>
    %cst_37 = arith.constant dense<0.000000e+00> : vector<8x96xf32>
    %78 = tpu.matmul %76, %77, %cst_37 {dimension_numbers = #tpu.dot_dimension_numbers<[1], [0], [0], [1], [0, 0, 1, 1], [], []>} : vector<8x96xbf16>, vector<96x96xbf16>, vector<8x96xf32> -> vector<8x96xf32>
    %79 = arith.addf %22, %78 : vector<8x96xf32>
    %c5 = arith.constant 5 : index
    %c0_38 = arith.constant 0 : index
    %80 = vector.load %arg16[%c5, %c0_38] : memref<15x896xf32, #tpu.memory_space<vmem>>, vector<1x96xf32>
    %81 = vector.broadcast %80 : vector<1x96xf32> to vector<8x96xf32>
    %82 = arith.addf %79, %81 : vector<8x96xf32>
    %83 = arith.truncf %82 : vector<8x96xf32> to vector<8x96xbf16>
    %c0_39 = arith.constant 0 : index
    %c0_40 = arith.constant 0 : index
    %84 = vector.load %arg8[%c0_39, %c0_40] : memref<96x96xbf16, #tpu.memory_space<vmem>>, vector<96x96xbf16>
    %cst_41 = arith.constant dense<0.000000e+00> : vector<8x96xf32>
    %85 = tpu.matmul %83, %84, %cst_41 {dimension_numbers = #tpu.dot_dimension_numbers<[1], [0], [0], [1], [0, 0, 1, 1], [], []>} : vector<8x96xbf16>, vector<96x96xbf16>, vector<8x96xf32> -> vector<8x96xf32>
    %86 = arith.subf %82, %85 : vector<8x96xf32>
    %87 = arith.mulf %86, %86 : vector<8x96xf32>
    %88 = arith.truncf %87 : vector<8x96xf32> to vector<8x96xbf16>
    %c0_42 = arith.constant 0 : index
    %c0_43 = arith.constant 0 : index
    %89 = vector.load %arg8[%c0_42, %c0_43] : memref<96x96xbf16, #tpu.memory_space<vmem>>, vector<96x96xbf16>
    %cst_44 = arith.constant dense<0.000000e+00> : vector<8x96xf32>
    %90 = tpu.matmul %88, %89, %cst_44 {dimension_numbers = #tpu.dot_dimension_numbers<[1], [0], [0], [1], [0, 0, 1, 1], [], []>} : vector<8x96xbf16>, vector<96x96xbf16>, vector<8x96xf32> -> vector<8x96xf32>
    %cst_45 = arith.constant 9.99999974E-6 : f32
    %91 = vector.broadcast %cst_45 : f32 to vector<8x96xf32>
    %92 = arith.addf %90, %91 : vector<8x96xf32>
    %93 = math.rsqrt %92 : vector<8x96xf32>
    %94 = arith.mulf %86, %93 : vector<8x96xf32>
    %c6 = arith.constant 6 : index
    %c0_46 = arith.constant 0 : index
    %95 = vector.load %arg16[%c6, %c0_46] : memref<15x896xf32, #tpu.memory_space<vmem>>, vector<1x96xf32>
    %96 = vector.broadcast %95 : vector<1x96xf32> to vector<8x96xf32>
    %97 = arith.mulf %94, %96 : vector<8x96xf32>
    %c7 = arith.constant 7 : index
    %c0_47 = arith.constant 0 : index
    %98 = vector.load %arg16[%c7, %c0_47] : memref<15x896xf32, #tpu.memory_space<vmem>>, vector<1x96xf32>
    %99 = vector.broadcast %98 : vector<1x96xf32> to vector<8x96xf32>
    %100 = arith.addf %97, %99 : vector<8x96xf32>
    %101 = arith.truncf %100 : vector<8x96xf32> to vector<8x96xbf16>
    %c0_48 = arith.constant 0 : index
    %c0_49 = arith.constant 0 : index
    %102 = vector.load %arg9[%c0_48, %c0_49] : memref<96x192xbf16, #tpu.memory_space<vmem>>, vector<96x192xbf16>
    %cst_50 = arith.constant dense<0.000000e+00> : vector<8x192xf32>
    %103 = tpu.matmul %101, %102, %cst_50 {dimension_numbers = #tpu.dot_dimension_numbers<[1], [0], [0], [1], [0, 0, 1, 1], [], []>} : vector<8x96xbf16>, vector<96x192xbf16>, vector<8x192xf32> -> vector<8x192xf32>
    %c8 = arith.constant 8 : index
    %c0_51 = arith.constant 0 : index
    %104 = vector.load %arg16[%c8, %c0_51] : memref<15x896xf32, #tpu.memory_space<vmem>>, vector<1x192xf32>
    %105 = vector.broadcast %104 : vector<1x192xf32> to vector<8x192xf32>
    %106 = arith.addf %103, %105 : vector<8x192xf32>
    %cst_52 = arith.constant 0.000000e+00 : f32
    %107 = vector.broadcast %cst_52 : f32 to vector<8x192xf32>
    %108 = arith.maximumf %106, %107 : vector<8x192xf32>
    %109 = arith.truncf %108 : vector<8x192xf32> to vector<8x192xbf16>
    %c0_53 = arith.constant 0 : index
    %c0_54 = arith.constant 0 : index
    %110 = vector.load %arg10[%c0_53, %c0_54] : memref<192x96xbf16, #tpu.memory_space<vmem>>, vector<192x96xbf16>
    %cst_55 = arith.constant dense<0.000000e+00> : vector<8x96xf32>
    %111 = tpu.matmul %109, %110, %cst_55 {dimension_numbers = #tpu.dot_dimension_numbers<[1], [0], [0], [1], [0, 0, 1, 1], [], []>} : vector<8x192xbf16>, vector<192x96xbf16>, vector<8x96xf32> -> vector<8x96xf32>
    %112 = arith.addf %100, %111 : vector<8x96xf32>
    %c9 = arith.constant 9 : index
    %c0_56 = arith.constant 0 : index
    %113 = vector.load %arg16[%c9, %c0_56] : memref<15x896xf32, #tpu.memory_space<vmem>>, vector<1x96xf32>
    %114 = vector.broadcast %113 : vector<1x96xf32> to vector<8x96xf32>
    %115 = arith.addf %112, %114 : vector<8x96xf32>
    %116 = arith.truncf %115 : vector<8x96xf32> to vector<8x96xbf16>
    %c0_57 = arith.constant 0 : index
    %c0_58 = arith.constant 0 : index
    %117 = vector.load %arg8[%c0_57, %c0_58] : memref<96x96xbf16, #tpu.memory_space<vmem>>, vector<96x96xbf16>
    %cst_59 = arith.constant dense<0.000000e+00> : vector<8x96xf32>
    %118 = tpu.matmul %116, %117, %cst_59 {dimension_numbers = #tpu.dot_dimension_numbers<[1], [0], [0], [1], [0, 0, 1, 1], [], []>} : vector<8x96xbf16>, vector<96x96xbf16>, vector<8x96xf32> -> vector<8x96xf32>
    %119 = arith.subf %115, %118 : vector<8x96xf32>
    %120 = arith.mulf %119, %119 : vector<8x96xf32>
    %121 = arith.truncf %120 : vector<8x96xf32> to vector<8x96xbf16>
    %c0_60 = arith.constant 0 : index
    %c0_61 = arith.constant 0 : index
    %122 = vector.load %arg8[%c0_60, %c0_61] : memref<96x96xbf16, #tpu.memory_space<vmem>>, vector<96x96xbf16>
    %cst_62 = arith.constant dense<0.000000e+00> : vector<8x96xf32>
    %123 = tpu.matmul %121, %122, %cst_62 {dimension_numbers = #tpu.dot_dimension_numbers<[1], [0], [0], [1], [0, 0, 1, 1], [], []>} : vector<8x96xbf16>, vector<96x96xbf16>, vector<8x96xf32> -> vector<8x96xf32>
    %cst_63 = arith.constant 9.99999974E-6 : f32
    %124 = vector.broadcast %cst_63 : f32 to vector<8x96xf32>
    %125 = arith.addf %123, %124 : vector<8x96xf32>
    %126 = math.rsqrt %125 : vector<8x96xf32>
    %127 = arith.mulf %119, %126 : vector<8x96xf32>
    %c10 = arith.constant 10 : index
    %c0_64 = arith.constant 0 : index
    %128 = vector.load %arg16[%c10, %c0_64] : memref<15x896xf32, #tpu.memory_space<vmem>>, vector<1x96xf32>
    %129 = vector.broadcast %128 : vector<1x96xf32> to vector<8x96xf32>
    %130 = arith.mulf %127, %129 : vector<8x96xf32>
    %c11 = arith.constant 11 : index
    %c0_65 = arith.constant 0 : index
    %131 = vector.load %arg16[%c11, %c0_65] : memref<15x896xf32, #tpu.memory_space<vmem>>, vector<1x96xf32>
    %132 = vector.broadcast %131 : vector<1x96xf32> to vector<8x96xf32>
    %133 = arith.addf %130, %132 : vector<8x96xf32>
    %134 = arith.truncf %133 : vector<8x96xf32> to vector<8x96xbf16>
    %c0_66 = arith.constant 0 : index
    %c0_67 = arith.constant 0 : index
    %135 = vector.load %arg11[%c0_66, %c0_67] : memref<96x256xbf16, #tpu.memory_space<vmem>>, vector<96x256xbf16>
    %cst_68 = arith.constant dense<0.000000e+00> : vector<8x256xf32>
    %136 = tpu.matmul %134, %135, %cst_68 {dimension_numbers = #tpu.dot_dimension_numbers<[1], [0], [0], [1], [0, 0, 1, 1], [], []>} : vector<8x96xbf16>, vector<96x256xbf16>, vector<8x256xf32> -> vector<8x256xf32>
    %c0_69 = arith.constant 0 : index
    %c0_70 = arith.constant 0 : index
    %137 = vector.load %arg12[%c0_69, %c0_70] : memref<128x256xbf16, #tpu.memory_space<vmem>>, vector<128x256xbf16>
    %cst_71 = arith.constant dense<0.000000e+00> : vector<8x256xf32>
    %138 = tpu.matmul %1, %137, %cst_71 {dimension_numbers = #tpu.dot_dimension_numbers<[1], [0], [0], [1], [0, 0, 1, 1], [], []>} : vector<8x128xbf16>, vector<128x256xbf16>, vector<8x256xf32> -> vector<8x256xf32>
    %139 = arith.addf %136, %138 : vector<8x256xf32>
    %c12 = arith.constant 12 : index
    %c0_72 = arith.constant 0 : index
    %140 = vector.load %arg16[%c12, %c0_72] : memref<15x896xf32, #tpu.memory_space<vmem>>, vector<1x256xf32>
    %141 = vector.broadcast %140 : vector<1x256xf32> to vector<8x256xf32>
    %142 = arith.addf %139, %141 : vector<8x256xf32>
    %cst_73 = arith.constant 0.000000e+00 : f32
    %143 = vector.broadcast %cst_73 : f32 to vector<8x256xf32>
    %144 = arith.maximumf %142, %143 : vector<8x256xf32>
    %145 = arith.truncf %144 : vector<8x256xf32> to vector<8x256xbf16>
    %c0_74 = arith.constant 0 : index
    %c0_75 = arith.constant 0 : index
    %146 = vector.load %arg13[%c0_74, %c0_75] : memref<256x128xbf16, #tpu.memory_space<vmem>>, vector<256x128xbf16>
    %cst_76 = arith.constant dense<0.000000e+00> : vector<8x128xf32>
    %147 = tpu.matmul %145, %146, %cst_76 {dimension_numbers = #tpu.dot_dimension_numbers<[1], [0], [0], [1], [0, 0, 1, 1], [], []>} : vector<8x256xbf16>, vector<256x128xbf16>, vector<8x128xf32> -> vector<8x128xf32>
    %c13 = arith.constant 13 : index
    %c0_77 = arith.constant 0 : index
    %148 = vector.load %arg16[%c13, %c0_77] : memref<15x896xf32, #tpu.memory_space<vmem>>, vector<1x128xf32>
    %149 = vector.broadcast %148 : vector<1x128xf32> to vector<8x128xf32>
    %150 = arith.addf %147, %149 : vector<8x128xf32>
    %cst_78 = arith.constant 0.000000e+00 : f32
    %151 = vector.broadcast %cst_78 : f32 to vector<8x128xf32>
    %152 = arith.maximumf %150, %151 : vector<8x128xf32>
    %153 = arith.truncf %152 : vector<8x128xf32> to vector<8x128xbf16>
    %c0_79 = arith.constant 0 : index
    %c0_80 = arith.constant 0 : index
    %154 = vector.load %arg14[%c0_79, %c0_80] : memref<128x128xbf16, #tpu.memory_space<vmem>>, vector<128x128xbf16>
    %cst_81 = arith.constant dense<0.000000e+00> : vector<8x128xf32>
    %155 = tpu.matmul %153, %154, %cst_81 {dimension_numbers = #tpu.dot_dimension_numbers<[1], [0], [0], [1], [0, 0, 1, 1], [], []>} : vector<8x128xbf16>, vector<128x128xbf16>, vector<8x128xf32> -> vector<8x128xf32>
    %c0_82 = arith.constant 0 : index
    %c0_83 = arith.constant 0 : index
    %156 = vector.load %arg15[%c0_82, %c0_83] : memref<96x128xbf16, #tpu.memory_space<vmem>>, vector<96x128xbf16>
    %cst_84 = arith.constant dense<0.000000e+00> : vector<8x128xf32>
    %157 = tpu.matmul %23, %156, %cst_84 {dimension_numbers = #tpu.dot_dimension_numbers<[1], [0], [0], [1], [0, 0, 1, 1], [], []>} : vector<8x96xbf16>, vector<96x128xbf16>, vector<8x128xf32> -> vector<8x128xf32>
    %158 = arith.addf %155, %157 : vector<8x128xf32>
    %c14 = arith.constant 14 : index
    %c0_85 = arith.constant 0 : index
    %159 = vector.load %arg16[%c14, %c0_85] : memref<15x896xf32, #tpu.memory_space<vmem>>, vector<1x128xf32>
    %160 = vector.broadcast %159 : vector<1x128xf32> to vector<8x128xf32>
    %161 = arith.addf %158, %160 : vector<8x128xf32>
    %c0_86 = arith.constant 0 : index
    %c0_87 = arith.constant 0 : index
    %162 = vector.load %arg17[%c0_86, %c0_87] : memref<8x128xf32, #tpu.memory_space<vmem>>, vector<8x128xf32>
    tpu.vector_store %arg17[%c0_86, %c0_87], %161 {strides = array<i32>} : memref<8x128xf32, #tpu.memory_space<vmem>>, vector<8x128xf32>,
    return
  }
  func.func @transform_0(%arg0: i32) -> (i32, i32) {
    %c0_i32 = arith.constant 0 : i32
    %c0_i32_0 = arith.constant 0 : i32
    return %arg0, %c0_i32 : i32, i32
  }
  func.func @transform_1(%arg0: i32) -> (i32, i32) {
    %c0_i32 = arith.constant 0 : i32
    %c0_i32_0 = arith.constant 0 : i32
    %c0_i32_1 = arith.constant 0 : i32
    return %c0_i32, %c0_i32_0 : i32, i32
  }
  func.func @transform_2(%arg0: i32) -> (i32, i32) {
    %c0_i32 = arith.constant 0 : i32
    %c0_i32_0 = arith.constant 0 : i32
    %c0_i32_1 = arith.constant 0 : i32
    return %c0_i32, %c0_i32_0 : i32, i32
  }
  func.func @transform_3(%arg0: i32) -> (i32, i32) {
    %c0_i32 = arith.constant 0 : i32
    %c0_i32_0 = arith.constant 0 : i32
    %c0_i32_1 = arith.constant 0 : i32
    return %c0_i32, %c0_i32_0 : i32, i32
  }
  func.func @transform_4(%arg0: i32) -> (i32, i32) {
    %c0_i32 = arith.constant 0 : i32
    %c0_i32_0 = arith.constant 0 : i32
    %c0_i32_1 = arith.constant 0 : i32
    return %c0_i32, %c0_i32_0 : i32, i32
  }
  func.func @transform_5(%arg0: i32) -> (i32, i32) {
    %c0_i32 = arith.constant 0 : i32
    %c0_i32_0 = arith.constant 0 : i32
    %c0_i32_1 = arith.constant 0 : i32
    return %c0_i32, %c0_i32_0 : i32, i32
  }
  func.func @transform_6(%arg0: i32) -> (i32, i32) {
    %c0_i32 = arith.constant 0 : i32
    %c0_i32_0 = arith.constant 0 : i32
    %c0_i32_1 = arith.constant 0 : i32
    return %c0_i32, %c0_i32_0 : i32, i32
  }
  func.func @transform_7(%arg0: i32) -> (i32, i32) {
    %c0_i32 = arith.constant 0 : i32
    %c0_i32_0 = arith.constant 0 : i32
    %c0_i32_1 = arith.constant 0 : i32
    return %c0_i32, %c0_i32_0 : i32, i32
  }
  func.func @transform_8(%arg0: i32) -> (i32, i32) {
    %c0_i32 = arith.constant 0 : i32
    %c0_i32_0 = arith.constant 0 : i32
    %c0_i32_1 = arith.constant 0 : i32
    return %c0_i32, %c0_i32_0 : i32, i32
  }
  func.func @transform_9(%arg0: i32) -> (i32, i32) {
    %c0_i32 = arith.constant 0 : i32
    %c0_i32_0 = arith.constant 0 : i32
    %c0_i32_1 = arith.constant 0 : i32
    return %c0_i32, %c0_i32_0 : i32, i32
  }
  func.func @transform_10(%arg0: i32) -> (i32, i32) {
    %c0_i32 = arith.constant 0 : i32
    %c0_i32_0 = arith.constant 0 : i32
    %c0_i32_1 = arith.constant 0 : i32
    return %c0_i32, %c0_i32_0 : i32, i32
  }
  func.func @transform_11(%arg0: i32) -> (i32, i32) {
    %c0_i32 = arith.constant 0 : i32
    %c0_i32_0 = arith.constant 0 : i32
    %c0_i32_1 = arith.constant 0 : i32
    return %c0_i32, %c0_i32_0 : i32, i32
  }
  func.func @transform_12(%arg0: i32) -> (i32, i32) {
    %c0_i32 = arith.constant 0 : i32
    %c0_i32_0 = arith.constant 0 : i32
    %c0_i32_1 = arith.constant 0 : i32
    return %c0_i32, %c0_i32_0 : i32, i32
  }
  func.func @transform_13(%arg0: i32) -> (i32, i32) {
    %c0_i32 = arith.constant 0 : i32
    %c0_i32_0 = arith.constant 0 : i32
    %c0_i32_1 = arith.constant 0 : i32
    return %c0_i32, %c0_i32_0 : i32, i32
  }
  func.func @transform_14(%arg0: i32) -> (i32, i32) {
    %c0_i32 = arith.constant 0 : i32
    %c0_i32_0 = arith.constant 0 : i32
    %c0_i32_1 = arith.constant 0 : i32
    return %c0_i32, %c0_i32_0 : i32, i32
  }
  func.func @transform_15(%arg0: i32) -> (i32, i32) {
    %c0_i32 = arith.constant 0 : i32
    %c0_i32_0 = arith.constant 0 : i32
    %c0_i32_1 = arith.constant 0 : i32
    return %c0_i32, %c0_i32_0 : i32, i32
  }
  func.func @transform_16(%arg0: i32) -> (i32, i32) {
    %c0_i32 = arith.constant 0 : i32
    %c0_i32_0 = arith.constant 0 : i32
    return %arg0, %c0_i32 : i32, i32
  }
}

</mosaic_0001>

<llo_original>
// kernel: ord_tri_forward.1
$region0: #{ord_tri_forward.1}
  #allocation0 [shape = 'u32[]', space=smem, size = 0x4, offset = 0x4, fixed_abs, tag = 'smem constant byte address 0x4 - core index']
  #allocation1 [shape = 'u32[144,128]{1,0:T(1,128)}', space=vmem, size = 0x12000, scoped, tag = 'internal scratch']
  %s0 = inlined_call_operand.vmem [shape: f32[16,128], index: 0, kind: input, shape index: {}]
  %s1 = inlined_call_operand.vmem [shape: bf16[128,192], index: 1, kind: input, shape index: {}]
  %s2 = inlined_call_operand.hbm [shape: bf16[192,96], index: 2, kind: input, shape index: {}]
  %s3 = inlined_call_operand.vmem [shape: bf16[96,896], index: 3, kind: input, shape index: {}]
  %s4 = inlined_call_operand.vmem [shape: bf16[96,12], index: 4, kind: input, shape index: {}]
  %s5 = inlined_call_operand.hbm [shape: bf16[12,96], index: 5, kind: input, shape index: {}]
  %s6 = inlined_call_operand.hbm [shape: bf16[96,96], index: 6, kind: input, shape index: {}]
  %s7 = inlined_call_operand.hbm [shape: bf16[96,96], index: 7, kind: input, shape index: {}]
  %s8 = inlined_call_operand.hbm [shape: bf16[96,192], index: 8, kind: input, shape index: {}]
  %s9 = inlined_call_operand.hbm [shape: bf16[192,96], index: 9, kind: input, shape index: {}]
  %s10 = inlined_call_operand.hbm [shape: bf16[96,256], index: 10, kind: input, shape index: {}]
  %s11 = inlined_call_operand.hbm [shape: bf16[128,256], index: 11, kind: input, shape index: {}]
  %s12 = inlined_call_operand.hbm [shape: bf16[256,128], index: 12, kind: input, shape index: {}]
  %s13 = inlined_call_operand.vmem [shape: bf16[128,128], index: 13, kind: input, shape index: {}]
  %s14 = inlined_call_operand.hbm [shape: bf16[96,128], index: 14, kind: input, shape index: {}]
  %s15 = inlined_call_operand.hbm [shape: f32[15,896], index: 15, kind: input, shape index: {}]
  %s16 = inlined_call_operand.vmem [shape: f32[16,128], index: 16, kind: output, shape index: {}]
  %s17 = sld [smem:[#allocation0]]
  $region141: #{ord_tri_forward.1} parent=0
    _
  %s19 = ssub.s32 1, %s17
  %s20 = scalar_select 0, %s19, %s17
  $region1: #{ord_tri_forward.1} parent=0
    #allocation2 [shape = 'u8[49152]{0}', space=vmem, size = 0xc000, scoped, tag = 'input window, operand 2, single buffered']
    #allocation3 [shape = 's32[2]{0}', space=sflag, size = 0x8, scoped, tag = 'scoped memory for ord_tri_forward.1']
    #allocation4 [shape = 'u8[4096]{0}', space=vmem, size = 0x1000, scoped, tag = 'input window, operand 5, single buffered']
    #allocation5 [shape = 's32[1]{0}', space=sflag, size = 0x4, scoped, tag = 'scoped memory for ord_tri_forward.1']
    #allocation6 [shape = 'u8[24576]{0}', space=vmem, size = 0x6000, scoped, tag = 'input window, operand 6, single buffered']
    #allocation7 [shape = 'u8[24576]{0}', space=vmem, size = 0x6000, scoped, tag = 'input window, operand 7, single buffered']
    #allocation8 [shape = 's32[1]{0}', space=sflag, size = 0x4, scoped, tag = 'scoped memory for ord_tri_forward.1']
    #allocation9 [shape = 'u8[49152]{0}', space=vmem, size = 0xc000, scoped, tag = 'input window, operand 8, single buffered']
    #allocation10 [shape = 'u8[49152]{0}', space=vmem, size = 0xc000, scoped, tag = 'input window, operand 9, single buffered']
    #allocation11 [shape = 's32[1]{0}', space=sflag, size = 0x4, scoped, tag = 'scoped memory for ord_tri_forward.1']
    #allocation12 [shape = 'u8[49152]{0}', space=vmem, size = 0xc000, scoped, tag = 'input window, operand 10, single buffered']
    #allocation13 [shape = 'u8[65536]{0}', space=vmem, size = 0x10000, scoped, tag = 'input window, operand 11, single buffered']
    #allocation14 [shape = 's32[1]{0}', space=sflag, size = 0x4, scoped, tag = 'scoped memory for ord_tri_forward.1']
    #allocation15 [shape = 'u8[65536]{0}', space=vmem, size = 0x10000, scoped, tag = 'input window, operand 12, single buffered']
    #allocation16 [shape = 'u8[24576]{0}', space=vmem, size = 0x6000, scoped, tag = 'input window, operand 14, single buffered']
    #allocation17 [shape = 's32[1]{0}', space=sflag, size = 0x4, scoped, tag = 'scoped memory for ord_tri_forward.1']
    #allocation18 [shape = 'u8[57344]{0}', space=vmem, size = 0xe000, scoped, tag = 'input window, operand 15, single buffered']
    %21 = vsyncpa [#allocation3], 0
    %22 = vsyncpa [#allocation5], 0
    %23 = vsyncpa [#allocation8], 0
    %24 = vsyncpa [#allocation11], 0
    %25 = vsyncpa [#allocation14], 0
    %26 = vsyncpa [#allocation17], 0
    loop: start=0, step=1, limit=4
    $region2: #{ord_tri_forward.1} parent=1 // loop_pre_header
      _
    $region3: #{ord_tri_forward.1} parent=1 // loop_header
      %s28 = sphi 0, %s32
      %p29 = scmp.ge.s32.totalorder %s28, 4
      %s38 = sphi 0, %s40
      %s41 = sphi 0, %s38
      %s42 = sphi 0, %s41
      %s58 = sphi 0, %s42
      %s62 = sphi 0, %s62
      %s64 = sphi 0, %s62
      %s65 = sphi 0, %s64
      %s79 = sphi 0, %s65
      %s83 = sphi 0, %s83
      %s85 = sphi 0, %s83
      %s86 = sphi 0, %s85
      %s100 = sphi 0, %s86
      %s104 = sphi 0, %s104
      %s106 = sphi 0, %s104
      %s107 = sphi 0, %s106
      %s121 = sphi 0, %s107
      %s125 = sphi 0, %s125
      %s127 = sphi 0, %s125
      %s128 = sphi 0, %s127
      %s142 = sphi 0, %s128
      %s146 = sphi 0, %s146
      %s148 = sphi 0, %s146
      %s149 = sphi 0, %s148
      %s163 = sphi 0, %s149
      %s167 = sphi 0, %s167
      %s169 = sphi 0, %s167
      %s170 = sphi 0, %s169
      %s184 = sphi 0, %s170
      %s188 = sphi 0, %s188
      %s190 = sphi 0, %s188
      %s191 = sphi 0, %s190
      %s205 = sphi 0, %s191
      %s209 = sphi 0, %s209
      %s211 = sphi 0, %s209
      %s212 = sphi 0, %s211
      %s226 = sphi 0, %s212
      %s230 = sphi 0, %s230
      %s232 = sphi 0, %s230
      %s233 = sphi 0, %s232
      %s247 = sphi 0, %s233
      %s251 = sphi 0, %s251
      %s253 = sphi 0, %s251
      %s254 = sphi 0, %s253
      %s268 = sphi 0, %s254
      %s272 = sphi 0, %s272
      %s274 = sphi 0, %s272
      %s275 = sphi 0, %s274
      %s289 = sphi 0, %s275
      %s293 = sphi 0, %s293
      %s295 = sphi 0, %s293
      %s296 = sphi 0, %s295
      %s310 = sphi 0, %s296
      %s314 = sphi 0, %s314
      %s316 = sphi 0, %s314
      %s317 = sphi 0, %s316
      %s331 = sphi 0, %s317
      %s335 = sphi 0, %s335
      %s337 = sphi 0, %s335
      %s338 = sphi 0, %s337
      %s352 = sphi 0, %s338
      %s356 = sphi 0, %s356
      %s358 = sphi 0, %s356
      %s359 = sphi 0, %s358
      %s373 = sphi 0, %s359
      %s379 = sphi 0, %s381
      %s382 = sphi 0, %s379
      %s383 = sphi 0, %s382
      %s399 = sphi 0, %s383
    $region4: #{ord_tri_forward.1} parent=1 // loop_header_branch
      %31 = sbr.rel (%p29) target = $region8
    $region5: #{ord_tri_forward.1} parent=1 // loop_body
      %s33 = ssub.s32 %s28, 1
      %s34 = ssub.s32 %s28, 2
      %s35 = sadd.s32 %s28, 1
      %s36 = ssub.s32 %s28, %s35
      %p37 = scmp.eq.s32.totalorder %s36, 0
      %s39 = sadd.s32 %s38, 1
      %s40 = scalar_select %p37, %s38, %s39
      %p43 = pneg %p37
      %p44 = scmp.eq.s32.totalorder %s28, 1
      %p45 = por %p43, %p44
      %p46 = scmp.ne.s32.totalorder %s38, %s41
      %p47 = scmp.eq.s32.totalorder %s28, 0
      %p48 = por %p46, %p47
      %p49 = scmp.ne.s32.totalorder %s38, %s41
      %p50 = scmp.eq.s32.totalorder %s33, 1
      %p51 = por %p49, %p50
      %p52 = scmp.ne.s32.totalorder %s41, %s42
      %p53 = scmp.eq.s32.totalorder %s33, 0
      %p54 = por %p52, %p53
      %p55 = scmp.ne.s32.totalorder %s41, %s42
      %p56 = scmp.eq.s32.totalorder %s34, 1
      %p57 = por %p55, %p56
      %p59 = scmp.ne.s32.totalorder %s42, %s58
      %p60 = scmp.eq.s32.totalorder %s34, 0
      %p61 = por %p59, %p60
      %s63 = sadd.s32 %s62, 1
      %p66 = scmp.eq.s32.totalorder %s28, 1
      %p67 = scmp.ne.s32.totalorder %s62, %s64
      %p68 = scmp.eq.s32.totalorder %s28, 0
      %p69 = por %p67, %p68
      %p70 = scmp.ne.s32.totalorder %s62, %s64
      %p71 = scmp.eq.s32.totalorder %s33, 1
      %p72 = por %p70, %p71
      %p73 = scmp.ne.s32.totalorder %s64, %s65
      %p74 = scmp.eq.s32.totalorder %s33, 0
      %p75 = por %p73, %p74
      %p76 = scmp.ne.s32.totalorder %s64, %s65
      %p77 = scmp.eq.s32.totalorder %s34, 1
      %p78 = por %p76, %p77
      %p80 = scmp.ne.s32.totalorder %s65, %s79
      %p81 = scmp.eq.s32.totalorder %s34, 0
      %p82 = por %p80, %p81
      %s84 = sadd.s32 %s83, 1
      %p87 = scmp.eq.s32.totalorder %s28, 1
      %p88 = scmp.ne.s32.totalorder %s83, %s85
      %p89 = scmp.eq.s32.totalorder %s28, 0
      %p90 = por %p88, %p89
      %p91 = scmp.ne.s32.totalorder %s83, %s85
      %p92 = scmp.eq.s32.totalorder %s33, 1
      %p93 = por %p91, %p92
      %p94 = scmp.ne.s32.totalorder %s85, %s86
      %p95 = scmp.eq.s32.totalorder %s33, 0
      %p96 = por %p94, %p95
      %p97 = scmp.ne.s32.totalorder %s85, %s86
      %p98 = scmp.eq.s32.totalorder %s34, 1
      %p99 = por %p97, %p98
      %p101 = scmp.ne.s32.totalorder %s86, %s100
      %p102 = scmp.eq.s32.totalorder %s34, 0
      %p103 = por %p101, %p102
      %s105 = sadd.s32 %s104, 1
      %p108 = scmp.eq.s32.totalorder %s28, 1
      %p109 = scmp.ne.s32.totalorder %s104, %s106
      %p110 = scmp.eq.s32.totalorder %s28, 0
      %p111 = por %p109, %p110
      %p112 = scmp.ne.s32.totalorder %s104, %s106
      %p113 = scmp.eq.s32.totalorder %s33, 1
      %p114 = por %p112, %p113
      %p115 = scmp.ne.s32.totalorder %s106, %s107
      %p116 = scmp.eq.s32.totalorder %s33, 0
      %p117 = por %p115, %p116
      %p118 = scmp.ne.s32.totalorder %s106, %s107
      %p119 = scmp.eq.s32.totalorder %s34, 1
      %p120 = por %p118, %p119
      %p122 = scmp.ne.s32.totalorder %s107, %s121
      %p123 = scmp.eq.s32.totalorder %s34, 0
      %p124 = por %p122, %p123
      %s126 = sadd.s32 %s125, 1
      %p129 = scmp.eq.s32.totalorder %s28, 1
      %p130 = scmp.ne.s32.totalorder %s125, %s127
      %p131 = scmp.eq.s32.totalorder %s28, 0
      %p132 = por %p130, %p131
      %p133 = scmp.ne.s32.totalorder %s125, %s127
      %p134 = scmp.eq.s32.totalorder %s33, 1
      %p135 = por %p133, %p134
      %p136 = scmp.ne.s32.totalorder %s127, %s128
      %p137 = scmp.eq.s32.totalorder %s33, 0
      %p138 = por %p136, %p137
      %p139 = scmp.ne.s32.totalorder %s127, %s128
      %p140 = scmp.eq.s32.totalorder %s34, 1
      %p141 = por %p139, %p140
      %p143 = scmp.ne.s32.totalorder %s128, %s142
      %p144 = scmp.eq.s32.totalorder %s34, 0
      %p145 = por %p143, %p144
      %s147 = sadd.s32 %s146, 1
      %p150 = scmp.eq.s32.totalorder %s28, 1
      %p151 = scmp.ne.s32.totalorder %s146, %s148
      %p152 = scmp.eq.s32.totalorder %s28, 0
      %p153 = por %p151, %p152
      %p154 = scmp.ne.s32.totalorder %s146, %s148
      %p155 = scmp.eq.s32.totalorder %s33, 1
      %p156 = por %p154, %p155
      %p157 = scmp.ne.s32.totalorder %s148, %s149
      %p158 = scmp.eq.s32.totalorder %s33, 0
      %p159 = por %p157, %p158
      %p160 = scmp.ne.s32.totalorder %s148, %s149
      %p161 = scmp.eq.s32.totalorder %s34, 1
      %p162 = por %p160, %p161
      %p164 = scmp.ne.s32.totalorder %s149, %s163
      %p165 = scmp.eq.s32.totalorder %s34, 0
      %p166 = por %p164, %p165
      %s168 = sadd.s32 %s167, 1
      %p171 = scmp.eq.s32.totalorder %s28, 1
      %p172 = scmp.ne.s32.totalorder %s167, %s169
      %p173 = scmp.eq.s32.totalorder %s28, 0
      %p174 = por %p172, %p173
      %p175 = scmp.ne.s32.totalorder %s167, %s169
      %p176 = scmp.eq.s32.totalorder %s33, 1
      %p177 = por %p175, %p176
      %p178 = scmp.ne.s32.totalorder %s169, %s170
      %p179 = scmp.eq.s32.totalorder %s33, 0
      %p180 = por %p178, %p179
      %p181 = scmp.ne.s32.totalorder %s169, %s170
      %p182 = scmp.eq.s32.totalorder %s34, 1
      %p183 = por %p181, %p182
      %p185 = scmp.ne.s32.totalorder %s170, %s184
      %p186 = scmp.eq.s32.totalorder %s34, 0
      %p187 = por %p185, %p186
      %s189 = sadd.s32 %s188, 1
      %p192 = scmp.eq.s32.totalorder %s28, 1
      %p193 = scmp.ne.s32.totalorder %s188, %s190
      %p194 = scmp.eq.s32.totalorder %s28, 0
      %p195 = por %p193, %p194
      %p196 = scmp.ne.s32.totalorder %s188, %s190
      %p197 = scmp.eq.s32.totalorder %s33, 1
      %p198 = por %p196, %p197
      %p199 = scmp.ne.s32.totalorder %s190, %s191
      %p200 = scmp.eq.s32.totalorder %s33, 0
      %p201 = por %p199, %p200
      %p202 = scmp.ne.s32.totalorder %s190, %s191
      %p203 = scmp.eq.s32.totalorder %s34, 1
      %p204 = por %p202, %p203
      %p206 = scmp.ne.s32.totalorder %s191, %s205
      %p207 = scmp.eq.s32.totalorder %s34, 0
      %p208 = por %p206, %p207
      %s210 = sadd.s32 %s209, 1
      %p213 = scmp.eq.s32.totalorder %s28, 1
      %p214 = scmp.ne.s32.totalorder %s209, %s211
      %p215 = scmp.eq.s32.totalorder %s28, 0
      %p216 = por %p214, %p215
      %p217 = scmp.ne.s32.totalorder %s209, %s211
      %p218 = scmp.eq.s32.totalorder %s33, 1
      %p219 = por %p217, %p218
      %p220 = scmp.ne.s32.totalorder %s211, %s212
      %p221 = scmp.eq.s32.totalorder %s33, 0
      %p222 = por %p220, %p221
      %p223 = scmp.ne.s32.totalorder %s211, %s212
      %p224 = scmp.eq.s32.totalorder %s34, 1
      %p225 = por %p223, %p224
      %p227 = scmp.ne.s32.totalorder %s212, %s226
      %p228 = scmp.eq.s32.totalorder %s34, 0
      %p229 = por %p227, %p228
      %s231 = sadd.s32 %s230, 1
      %p234 = scmp.eq.s32.totalorder %s28, 1
      %p235 = scmp.ne.s32.totalorder %s230, %s232
      %p236 = scmp.eq.s32.totalorder %s28, 0
      %p237 = por %p235, %p236
      %p238 = scmp.ne.s32.totalorder %s230, %s232
      %p239 = scmp.eq.s32.totalorder %s33, 1
      %p240 = por %p238, %p239
      %p241 = scmp.ne.s32.totalorder %s232, %s233
      %p242 = scmp.eq.s32.totalorder %s33, 0
      %p243 = por %p241, %p242
      %p244 = scmp.ne.s32.totalorder %s232, %s233
      %p245 = scmp.eq.s32.totalorder %s34, 1
      %p246 = por %p244, %p245
      %p248 = scmp.ne.s32.totalorder %s233, %s247
      %p249 = scmp.eq.s32.totalorder %s34, 0
      %p250 = por %p248, %p249
      %s252 = sadd.s32 %s251, 1
      %p255 = scmp.eq.s32.totalorder %s28, 1
      %p256 = scmp.ne.s32.totalorder %s251, %s253
      %p257 = scmp.eq.s32.totalorder %s28, 0
      %p258 = por %p256, %p257
      %p259 = scmp.ne.s32.totalorder %s251, %s253
      %p260 = scmp.eq.s32.totalorder %s33, 1
      %p261 = por %p259, %p260
      %p262 = scmp.ne.s32.totalorder %s253, %s254
      %p263 = scmp.eq.s32.totalorder %s33, 0
      %p264 = por %p262, %p263
      %p265 = scmp.ne.s32.totalorder %s253, %s254
      %p266 = scmp.eq.s32.totalorder %s34, 1
      %p267 = por %p265, %p266
      %p269 = scmp.ne.s32.totalorder %s254, %s268
      %p270 = scmp.eq.s32.totalorder %s34, 0
      %p271 = por %p269, %p270
      %s273 = sadd.s32 %s272, 1
      %p276 = scmp.eq.s32.totalorder %s28, 1
      %p277 = scmp.ne.s32.totalorder %s272, %s274
      %p278 = scmp.eq.s32.totalorder %s28, 0
      %p279 = por %p277, %p278
      %p280 = scmp.ne.s32.totalorder %s272, %s274
      %p281 = scmp.eq.s32.totalorder %s33, 1
      %p282 = por %p280, %p281
      %p283 = scmp.ne.s32.totalorder %s274, %s275
      %p284 = scmp.eq.s32.totalorder %s33, 0
      %p285 = por %p283, %p284
      %p286 = scmp.ne.s32.totalorder %s274, %s275
      %p287 = scmp.eq.s32.totalorder %s34, 1
      %p288 = por %p286, %p287
      %p290 = scmp.ne.s32.totalorder %s275, %s289
      %p291 = scmp.eq.s32.totalorder %s34, 0
      %p292 = por %p290, %p291
      %s294 = sadd.s32 %s293, 1
      %p297 = scmp.eq.s32.totalorder %s28, 1
      %p298 = scmp.ne.s32.totalorder %s293, %s295
      %p299 = scmp.eq.s32.totalorder %s28, 0
      %p300 = por %p298, %p299
      %p301 = scmp.ne.s32.totalorder %s293, %s295
      %p302 = scmp.eq.s32.totalorder %s33, 1
      %p303 = por %p301, %p302
      %p304 = scmp.ne.s32.totalorder %s295, %s296
      %p305 = scmp.eq.s32.totalorder %s33, 0
      %p306 = por %p304, %p305
      %p307 = scmp.ne.s32.totalorder %s295, %s296
      %p308 = scmp.eq.s32.totalorder %s34, 1
      %p309 = por %p307, %p308
      %p311 = scmp.ne.s32.totalorder %s296, %s310
      %p312 = scmp.eq.s32.totalorder %s34, 0
      %p313 = por %p311, %p312
      %s315 = sadd.s32 %s314, 1
      %p318 = scmp.eq.s32.totalorder %s28, 1
      %p319 = scmp.ne.s32.totalorder %s314, %s316
      %p320 = scmp.eq.s32.totalorder %s28, 0
      %p321 = por %p319, %p320
      %p322 = scmp.ne.s32.totalorder %s314, %s316
      %p323 = scmp.eq.s32.totalorder %s33, 1
      %p324 = por %p322, %p323
      %p325 = scmp.ne.s32.totalorder %s316, %s317
      %p326 = scmp.eq.s32.totalorder %s33, 0
      %p327 = por %p325, %p326
      %p328 = scmp.ne.s32.totalorder %s316, %s317
      %p329 = scmp.eq.s32.totalorder %s34, 1
      %p330 = por %p328, %p329
      %p332 = scmp.ne.s32.totalorder %s317, %s331
      %p333 = scmp.eq.s32.totalorder %s34, 0
      %p334 = por %p332, %p333
      %s336 = sadd.s32 %s335, 1
      %p339 = scmp.eq.s32.totalorder %s28, 1
      %p340 = scmp.ne.s32.totalorder %s335, %s337
      %p341 = scmp.eq.s32.totalorder %s28, 0
      %p342 = por %p340, %p341
      %p343 = scmp.ne.s32.totalorder %s335, %s337
      %p344 = scmp.eq.s32.totalorder %s33, 1
      %p345 = por %p343, %p344
      %p346 = scmp.ne.s32.totalorder %s337, %s338
      %p347 = scmp.eq.s32.totalorder %s33, 0
      %p348 = por %p346, %p347
      %p349 = scmp.ne.s32.totalorder %s337, %s338
      %p350 = scmp.eq.s32.totalorder %s34, 1
      %p351 = por %p349, %p350
      %p353 = scmp.ne.s32.totalorder %s338, %s352
      %p354 = scmp.eq.s32.totalorder %s34, 0
      %p355 = por %p353, %p354
      %s357 = sadd.s32 %s356, 1
      %p360 = scmp.eq.s32.totalorder %s28, 1
      %p361 = scmp.ne.s32.totalorder %s356, %s358
      %p362 = scmp.eq.s32.totalorder %s28, 0
      %p363 = por %p361, %p362
      %p364 = scmp.ne.s32.totalorder %s356, %s358
      %p365 = scmp.eq.s32.totalorder %s33, 1
      %p366 = por %p364, %p365
      %p367 = scmp.ne.s32.totalorder %s358, %s359
      %p368 = scmp.eq.s32.totalorder %s33, 0
      %p369 = por %p367, %p368
      %p370 = scmp.ne.s32.totalorder %s358, %s359
      %p371 = scmp.eq.s32.totalorder %s34, 1
      %p372 = por %p370, %p371
      %p374 = scmp.ne.s32.totalorder %s359, %s373
      %p375 = scmp.eq.s32.totalorder %s34, 0
      %p376 = por %p374, %p375
      %s377 = ssub.s32 %s28, %s35
      %p378 = scmp.eq.s32.totalorder %s377, 0
      %s380 = sadd.s32 %s379, 1
      %s381 = scalar_select %p378, %s379, %s380
      %p384 = pneg %p378
      %p385 = scmp.eq.s32.totalorder %s28, 1
      %p386 = por %p384, %p385
      %p387 = scmp.ne.s32.totalorder %s379, %s382
      %p388 = scmp.eq.s32.totalorder %s28, 0
      %p389 = por %p387, %p388
      %p390 = scmp.ne.s32.totalorder %s379, %s382
      %p391 = scmp.eq.s32.totalorder %s33, 1
      %p392 = por %p390, %p391
      %p393 = scmp.ne.s32.totalorder %s382, %s383
      %p394 = scmp.eq.s32.totalorder %s33, 0
      %p395 = por %p393, %p394
      %p396 = scmp.ne.s32.totalorder %s382, %s383
      %p397 = scmp.eq.s32.totalorder %s34, 1
      %p398 = por %p396, %p397
      %p400 = scmp.ne.s32.totalorder %s383, %s399
      %p401 = scmp.eq.s32.totalorder %s34, 0
      %p402 = por %p400, %p401
      %p403 = scmp.le.s32.totalorder 1, %s28
      %p404 = scmp.lt.s32.totalorder %s28, 3
      %p405 = pnand %p403, %p404
      %p406 = pneg %p405
      // Predicated region
      $region9: #{ord_tri_forward.1} parent=5 // pred_check
        _
      $region10: #{ord_tri_forward.1} parent=5 // pred_check_branch
        %408 = sbr.rel (%p405) target = $region12
      $region11: #{ord_tri_forward.1} parent=5 // pred_region
        %s409 = ssub.s32 %s28, 1
        // Predicated region
        $region13: #{ord_tri_forward.1} parent=11 // pred_check
          %p410 = pneg %p75
        $region14: #{ord_tri_forward.1} parent=11 // pred_check_branch
          %412 = sbr.rel (%p410) target = $region16
        $region15: #{ord_tri_forward.1} parent=11 // pred_region
          _
        $region16: #{ord_tri_forward.1} parent=11 // pred_fallthru
          _
        // Predicated region
        $region17: #{ord_tri_forward.1} parent=11 // pred_check
          %p413 = pneg %p96
        $region18: #{ord_tri_forward.1} parent=11 // pred_check_branch
          %415 = sbr.rel (%p413) target = $region20
        $region19: #{ord_tri_forward.1} parent=11 // pred_region
          %s417 = ssub.s32 1536, 1536
          %418 = vsyncadd [#allocation3], %s417
          %s419 = sshll.u32 [#allocation2], 4
          %s420 = int_to_ptr.vmem [resolvable:$true] %s419
          %425 = dma.hbm_to_vmem [thread:$0]  %s2, 1536, %s420, [#allocation3], 64, 64, 4
        $region20: #{ord_tri_forward.1} parent=11 // pred_fallthru
          _
        // Predicated region
        $region21: #{ord_tri_forward.1} parent=11 // pred_check
          %p426 = pneg %p117
        $region22: #{ord_tri_forward.1} parent=11 // pred_check_branch
          %428 = sbr.rel (%p426) target = $region24
        $region23: #{ord_tri_forward.1} parent=11 // pred_region
          _
        $region24: #{ord_tri_forward.1} parent=11 // pred_fallthru
          _
        // Predicated region
        $region25: #{ord_tri_forward.1} parent=11 // pred_check
          %p429 = pneg %p138
        $region26: #{ord_tri_forward.1} parent=11 // pred_check_branch
          %431 = sbr.rel (%p429) target = $region28
        $region27: #{ord_tri_forward.1} parent=11 // pred_region
          _
        $region28: #{ord_tri_forward.1} parent=11 // pred_fallthru
          _
        // Predicated region
        $region29: #{ord_tri_forward.1} parent=11 // pred_check
          %p432 = pneg %p159
        $region30: #{ord_tri_forward.1} parent=11 // pred_check_branch
          %434 = sbr.rel (%p432) target = $region32
        $region31: #{ord_tri_forward.1} parent=11 // pred_region
          %s436 = ssub.s32 128, 128
          %437 = vsyncadd [#allocation5], %s436
          %s438 = sshll.u32 [#allocation4], 4
          %s439 = int_to_ptr.vmem [resolvable:$true] %s438
          %444 = dma.hbm_to_vmem [thread:$0]  %s5, 128, %s439, [#allocation5], 64, 64, 4
        $region32: #{ord_tri_forward.1} parent=11 // pred_fallthru
          _
        // Predicated region
        $region33: #{ord_tri_forward.1} parent=11 // pred_check
          %p445 = pneg %p180
        $region34: #{ord_tri_forward.1} parent=11 // pred_check_branch
          %447 = sbr.rel (%p445) target = $region36
        $region35: #{ord_tri_forward.1} parent=11 // pred_region
          %s449 = ssub.s32 768, 768
          %450 = vsyncadd [#allocation5], %s449
          %s451 = sshll.u32 [#allocation6], 4
          %s452 = int_to_ptr.vmem [resolvable:$true] %s451
          %457 = dma.hbm_to_vmem [thread:$0]  %s6, 768, %s452, [#allocation5], 64, 64, 4
        $region36: #{ord_tri_forward.1} parent=11 // pred_fallthru
          _
        // Predicated region
        $region37: #{ord_tri_forward.1} parent=11 // pred_check
          %p458 = pneg %p201
        $region38: #{ord_tri_forward.1} parent=11 // pred_check_branch
          %460 = sbr.rel (%p458) target = $region40
        $region39: #{ord_tri_forward.1} parent=11 // pred_region
          %s462 = ssub.s32 768, 768
          %463 = vsyncadd [#allocation8], %s462
          %s464 = sshll.u32 [#allocation7], 4
          %s465 = int_to_ptr.vmem [resolvable:$true] %s464
          %470 = dma.hbm_to_vmem [thread:$0]  %s7, 768, %s465, [#allocation8], 64, 64, 4
        $region40: #{ord_tri_forward.1} parent=11 // pred_fallthru
          _
        // Predicated region
        $region41: #{ord_tri_forward.1} parent=11 // pred_check
          %p471 = pneg %p222
        $region42: #{ord_tri_forward.1} parent=11 // pred_check_branch
          %473 = sbr.rel (%p471) target = $region44
        $region43: #{ord_tri_forward.1} parent=11 // pred_region
          %s475 = ssub.s32 1536, 1536
          %476 = vsyncadd [#allocation8], %s475
          %s477 = sshll.u32 [#allocation9], 4
          %s478 = int_to_ptr.vmem [resolvable:$true] %s477
          %483 = dma.hbm_to_vmem [thread:$0]  %s8, 1536, %s478, [#allocation8], 128, 128, 8
        $region44: #{ord_tri_forward.1} parent=11 // pred_fallthru
          _
        // Predicated region
        $region45: #{ord_tri_forward.1} parent=11 // pred_check
          %p484 = pneg %p243
        $region46: #{ord_tri_forward.1} parent=11 // pred_check_branch
          %486 = sbr.rel (%p484) target = $region48
        $region47: #{ord_tri_forward.1} parent=11 // pred_region
          %s488 = ssub.s32 1536, 1536
          %489 = vsyncadd [#allocation11], %s488
          %s490 = sshll.u32 [#allocation10], 4
          %s491 = int_to_ptr.vmem [resolvable:$true] %s490
          %496 = dma.hbm_to_vmem [thread:$0]  %s9, 1536, %s491, [#allocation11], 64, 64, 4
        $region48: #{ord_tri_forward.1} parent=11 // pred_fallthru
          _
        // Predicated region
        $region49: #{ord_tri_forward.1} parent=11 // pred_check
          %p497 = pneg %p264
        $region50: #{ord_tri_forward.1} parent=11 // pred_check_branch
          %499 = sbr.rel (%p497) target = $region52
        $region51: #{ord_tri_forward.1} parent=11 // pred_region
          %s501 = ssub.s32 1536, 1536
          %502 = vsyncadd [#allocation11], %s501
          %s503 = sshll.u32 [#allocation12], 4
          %s504 = int_to_ptr.vmem [resolvable:$true] %s503
          %509 = dma.hbm_to_vmem [thread:$0]  %s10, 1536, %s504, [#allocation11], 128, 128, 8
        $region52: #{ord_tri_forward.1} parent=11 // pred_fallthru
          _
        // Predicated region
        $region53: #{ord_tri_forward.1} parent=11 // pred_check
          %p510 = pneg %p285
        $region54: #{ord_tri_forward.1} parent=11 // pred_check_branch
          %512 = sbr.rel (%p510) target = $region56
        $region55: #{ord_tri_forward.1} parent=11 // pred_region
          %s514 = ssub.s32 2048, 2048
          %515 = vsyncadd [#allocation14], %s514
          %s516 = sshll.u32 [#allocation13], 4
          %s517 = int_to_ptr.vmem [resolvable:$true] %s516
          %522 = dma.hbm_to_vmem [thread:$0]  %s11, 2048, %s517, [#allocation14], 128, 128, 8
        $region56: #{ord_tri_forward.1} parent=11 // pred_fallthru
          _
        // Predicated region
        $region57: #{ord_tri_forward.1} parent=11 // pred_check
          %p523 = pneg %p306
        $region58: #{ord_tri_forward.1} parent=11 // pred_check_branch
          %525 = sbr.rel (%p523) target = $region60
        $region59: #{ord_tri_forward.1} parent=11 // pred_region
          %s527 = ssub.s32 2048, 2048
          %528 = vsyncadd [#allocation14], %s527
          %s529 = sshll.u32 [#allocation15], 4
          %s530 = int_to_ptr.vmem [resolvable:$true] %s529
          %535 = dma.hbm_to_vmem [thread:$0]  %s12, 2048, %s530, [#allocation14], 64, 64, 4
        $region60: #{ord_tri_forward.1} parent=11 // pred_fallthru
          _
        // Predicated region
        $region61: #{ord_tri_forward.1} parent=11 // pred_check
          %p536 = pneg %p327
        $region62: #{ord_tri_forward.1} parent=11 // pred_check_branch
          %538 = sbr.rel (%p536) target = $region64
        $region63: #{ord_tri_forward.1} parent=11 // pred_region
          _
        $region64: #{ord_tri_forward.1} parent=11 // pred_fallthru
          _
        // Predicated region
        $region65: #{ord_tri_forward.1} parent=11 // pred_check
          %p539 = pneg %p348
        $region66: #{ord_tri_forward.1} parent=11 // pred_check_branch
          %541 = sbr.rel (%p539) target = $region68
        $region67: #{ord_tri_forward.1} parent=11 // pred_region
          %s543 = ssub.s32 768, 768
          %544 = vsyncadd [#allocation17], %s543
          %s545 = sshll.u32 [#allocation16], 4
          %s546 = int_to_ptr.vmem [resolvable:$true] %s545
          %551 = dma.hbm_to_vmem [thread:$0]  %s14, 768, %s546, [#allocation17], 64, 64, 4
        $region68: #{ord_tri_forward.1} parent=11 // pred_fallthru
          _
        // Predicated region
        $region69: #{ord_tri_forward.1} parent=11 // pred_check
          %p552 = pneg %p369
        $region70: #{ord_tri_forward.1} parent=11 // pred_check_branch
          %554 = sbr.rel (%p552) target = $region72
        $region71: #{ord_tri_forward.1} parent=11 // pred_region
          %s556 = ssub.s32 1792, 1792
          %557 = vsyncadd [#allocation17], %s556
          %s558 = sshll.u32 [#allocation18], 4
          %s559 = int_to_ptr.vmem [resolvable:$true] %s558
          %564 = dma.hbm_to_vmem [thread:$0]  %s15, 1792, %s559, [#allocation17], 896, 896, 56
        $region72: #{ord_tri_forward.1} parent=11 // pred_fallthru
          _
      $region12: #{ord_tri_forward.1} parent=5 // pred_fallthru
        _
      %p565 = scmp.lt.s32.totalorder %s28, 2
      // Predicated region
      $region73: #{ord_tri_forward.1} parent=5 // pred_check
        %p566 = pneg %p565
      $region74: #{ord_tri_forward.1} parent=5 // pred_check_branch
        %568 = sbr.rel (%p566) target = $region76
      $region75: #{ord_tri_forward.1} parent=5 // pred_region
        // Predicated region
        $region77: #{ord_tri_forward.1} parent=75 // pred_check
          %p569 = pneg %p48
        $region78: #{ord_tri_forward.1} parent=75 // pred_check_branch
          %571 = sbr.rel (%p569) target = $region80
        $region79: #{ord_tri_forward.1} parent=75 // pred_region
          %p572 = scmp.lt.s32.totalorder %s28, 1
          %s573 = scalar_select %p572, %s28, 1
          %s574 = smul.addr %s573, 8
          %s575 = scalar_lea.vmem %s0, %s574
        $region80: #{ord_tri_forward.1} parent=75 // pred_fallthru
          _
      $region76: #{ord_tri_forward.1} parent=5 // pred_fallthru
        _
      %p576 = scmp.le.s32.totalorder 1, %s28
      %p577 = scmp.lt.s32.totalorder %s28, 3
      %p578 = pnand %p576, %p577
      %p579 = pneg %p578
      // Predicated region
      $region81: #{ord_tri_forward.1} parent=5 // pred_check
        _
      $region82: #{ord_tri_forward.1} parent=5 // pred_check_branch
        %581 = sbr.rel (%p578) target = $region84
      $region83: #{ord_tri_forward.1} parent=5 // pred_region
        %s582 = ssub.s32 %s28, 1
        // Predicated region
        $region85: #{ord_tri_forward.1} parent=83 // pred_check
          %p583 = pneg %p96
        $region86: #{ord_tri_forward.1} parent=83 // pred_check_branch
          %585 = sbr.rel (%p583) target = $region88
        $region87: #{ord_tri_forward.1} parent=83 // pred_region
          %586 = dma.done [#allocation3], 1536
        $region88: #{ord_tri_forward.1} parent=83 // pred_fallthru
          _
        // Predicated region
        $region89: #{ord_tri_forward.1} parent=83 // pred_check
          %p587 = pneg %p159
        $region90: #{ord_tri_forward.1} parent=83 // pred_check_branch
          %589 = sbr.rel (%p587) target = $region92
        $region91: #{ord_tri_forward.1} parent=83 // pred_region
          %590 = dma.done [#allocation5], 128
        $region92: #{ord_tri_forward.1} parent=83 // pred_fallthru
          _
        // Predicated region
        $region93: #{ord_tri_forward.1} parent=83 // pred_check
          %p591 = pneg %p180
        $region94: #{ord_tri_forward.1} parent=83 // pred_check_branch
          %593 = sbr.rel (%p591) target = $region96
        $region95: #{ord_tri_forward.1} parent=83 // pred_region
          %594 = dma.done [#allocation5], 768
        $region96: #{ord_tri_forward.1} parent=83 // pred_fallthru
          _
        // Predicated region
        $region97: #{ord_tri_forward.1} parent=83 // pred_check
          %p595 = pneg %p201
        $region98: #{ord_tri_forward.1} parent=83 // pred_check_branch
          %597 = sbr.rel (%p595) target = $region100
        $region99: #{ord_tri_forward.1} parent=83 // pred_region
          %598 = dma.done [#allocation8], 768
        $region100: #{ord_tri_forward.1} parent=83 // pred_fallthru
          _
        // Predicated region
        $region101: #{ord_tri_forward.1} parent=83 // pred_check
          %p599 = pneg %p222
        $region102: #{ord_tri_forward.1} parent=83 // pred_check_branch
          %601 = sbr.rel (%p599) target = $region104
        $region103: #{ord_tri_forward.1} parent=83 // pred_region
          %602 = dma.done [#allocation8], 1536
        $region104: #{ord_tri_forward.1} parent=83 // pred_fallthru
          _
        // Predicated region
        $region105: #{ord_tri_forward.1} parent=83 // pred_check
          %p603 = pneg %p243
        $region106: #{ord_tri_forward.1} parent=83 // pred_check_branch
          %605 = sbr.rel (%p603) target = $region108
        $region107: #{ord_tri_forward.1} parent=83 // pred_region
          %606 = dma.done [#allocation11], 1536
        $region108: #{ord_tri_forward.1} parent=83 // pred_fallthru
          _
        // Predicated region
        $region109: #{ord_tri_forward.1} parent=83 // pred_check
          %p607 = pneg %p264
        $region110: #{ord_tri_forward.1} parent=83 // pred_check_branch
          %609 = sbr.rel (%p607) target = $region112
        $region111: #{ord_tri_forward.1} parent=83 // pred_region
          %610 = dma.done [#allocation11], 1536
        $region112: #{ord_tri_forward.1} parent=83 // pred_fallthru
          _
        // Predicated region
        $region113: #{ord_tri_forward.1} parent=83 // pred_check
          %p611 = pneg %p285
        $region114: #{ord_tri_forward.1} parent=83 // pred_check_branch
          %613 = sbr.rel (%p611) target = $region116
        $region115: #{ord_tri_forward.1} parent=83 // pred_region
          %614 = dma.done [#allocation14], 2048
        $region116: #{ord_tri_forward.1} parent=83 // pred_fallthru
          _
        // Predicated region
        $region117: #{ord_tri_forward.1} parent=83 // pred_check
          %p615 = pneg %p306
        $region118: #{ord_tri_forward.1} parent=83 // pred_check_branch
          %617 = sbr.rel (%p615) target = $region120
        $region119: #{ord_tri_forward.1} parent=83 // pred_region
          %618 = dma.done [#allocation14], 2048
        $region120: #{ord_tri_forward.1} parent=83 // pred_fallthru
          _
        // Predicated region
        $region121: #{ord_tri_forward.1} parent=83 // pred_check
          %p619 = pneg %p348
        $region122: #{ord_tri_forward.1} parent=83 // pred_check_branch
          %621 = sbr.rel (%p619) target = $region124
        $region123: #{ord_tri_forward.1} parent=83 // pred_region
          %622 = dma.done [#allocation17], 768
        $region124: #{ord_tri_forward.1} parent=83 // pred_fallthru
          _
        // Predicated region
        $region125: #{ord_tri_forward.1} parent=83 // pred_check
          %p623 = pneg %p369
        $region126: #{ord_tri_forward.1} parent=83 // pred_check_branch
          %625 = sbr.rel (%p623) target = $region128
        $region127: #{ord_tri_forward.1} parent=83 // pred_region
          %626 = dma.done [#allocation17], 1792
        $region128: #{ord_tri_forward.1} parent=83 // pred_fallthru
          _
        %p627 = scmp.lt.s32.totalorder %s33, 1
        %s628 = scalar_select %p627, %s33, 1
        %s629 = smul.addr %s628, 8
        %s630 = scalar_lea.vmem %s0, %s629
        %p631 = pneg %p54
        %p632 = pneg %p51
        %p633 = pneg %p75
        %p634 = pneg %p72
        %p635 = pneg %p96
        %p636 = pneg %p93
        %p637 = pneg %p117
        %p638 = pneg %p114
        %p639 = pneg %p138
        %p640 = pneg %p135
        %p641 = pneg %p159
        %p642 = pneg %p156
        %p643 = pneg %p180
        %p644 = pneg %p177
        %p645 = pneg %p201
        %p646 = pneg %p198
        %p647 = pneg %p222
        %p648 = pneg %p219
        %p649 = pneg %p243
        %p650 = pneg %p240
        %p651 = pneg %p264
        %p652 = pneg %p261
        %p653 = pneg %p285
        %p654 = pneg %p282
        %p655 = pneg %p306
        %p656 = pneg %p303
        %p657 = pneg %p327
        %p658 = pneg %p324
        %p659 = pneg %p348
        %p660 = pneg %p345
        %p661 = pneg %p369
        %p662 = pneg %p366
        %p663 = pneg %p395
        %p664 = pneg %p392
        %p665 = scmp.lt.s32.totalorder %s33, 1
        %s666 = scalar_select %p665, %s33, 1
        %s667 = smul.addr %s666, 8
        %s668 = scalar_lea.vmem %s16, %s667
        %p669 = scmp.lt.s32.totalorder %s33, 1
        %s670 = scalar_select %p669, %s33, 1
        %s671 = smul.addr %s670, 8
        %s672 = scalar_lea.vmem %s0, %s671
        %p673 = scmp.lt.s32.totalorder %s33, 1
        %s674 = scalar_select %p673, %s33, 1
        %s675 = smul.addr %s674, 8
        %s676 = scalar_lea.vmem %s16, %s675
        %v678 = vld [vmem:[%s672] sm:$0xff]
        %v679 = vpack.c.bf16 %v678, %v678
        %v680 = vld [vmem:[%s1] sm:$0xff]
        %v681 = vld [vmem:[%s1 + $0x8] sm:$0xff]
        %v682 = vld [vmem:[%s1 + $0x10] sm:$0xff]
        %v683 = vld [vmem:[%s1 + $0x18] sm:$0xff]
        %v684 = vld [vmem:[%s1 + $0x20] sm:$0xff]
        %v685 = vld [vmem:[%s1 + $0x28] sm:$0xff]
        %v686 = vld [vmem:[%s1 + $0x30] sm:$0xff]
        %v687 = vld [vmem:[%s1 + $0x38] sm:$0xff]
        %v688 = vld [vmem:[%s1 + $0x40] sm:$0xff]
        %v689 = vld [vmem:[%s1 + $0x48] sm:$0xff]
        %v690 = vld [vmem:[%s1 + $0x50] sm:$0xff]
        %v691 = vld [vmem:[%s1 + $0x58] sm:$0xff]
        %v692 = vld [vmem:[%s1 + $0x60] sm:$0xff]
        %v693 = vld [vmem:[%s1 + $0x68] sm:$0xff]
        %v694 = vld [vmem:[%s1 + $0x70] sm:$0xff]
        %v695 = vld [vmem:[%s1 + $0x78] sm:$0xff]
        %v696 = vld [vmem:[#allocation18] ss:$8 sm:$0x3]
        %v698 = vlaneseq
        %v699 = vshrl.u32 %v698, 7
        %v700 = vsub.s32 0, %v699
        %v701 = vrot.slane %v696, %v700
        %v702 = vlaneseq
        %v703 = vshrl.u32 %v702, 7
        %v704 = vsub.s32 1, %v703
        %v705 = vrot.slane %v696, %v704
        %v724 = vunpack.c.l.b16 %v680
        %v725 = vunpack.c.h.b16 %v680
        %v726 = vunpack.c.l.b16 %v681
        %v727 = vunpack.c.h.b16 %v681
        %v728 = vunpack.c.l.b16 %v682
        %v729 = vunpack.c.h.b16 %v682
        %v730 = vunpack.c.l.b16 %v683
        %v731 = vunpack.c.h.b16 %v683
        %v732 = vunpack.c.l.b16 %v684
        %v733 = vunpack.c.h.b16 %v684
        %v734 = vunpack.c.l.b16 %v685
        %v735 = vunpack.c.h.b16 %v685
        %v736 = vunpack.c.l.b16 %v686
        %v737 = vunpack.c.h.b16 %v686
        %v738 = vunpack.c.l.b16 %v687
        %v739 = vunpack.c.h.b16 %v687
        %v740 = vunpack.c.l.b16 %v688
        %v741 = vunpack.c.h.b16 %v688
        %v742 = vunpack.c.l.b16 %v689
        %v743 = vunpack.c.h.b16 %v689
        %v744 = vunpack.c.l.b16 %v690
        %v745 = vunpack.c.h.b16 %v690
        %v746 = vunpack.c.l.b16 %v691
        %v747 = vunpack.c.h.b16 %v691
        %v748 = vunpack.c.l.b16 %v692
        %v749 = vunpack.c.h.b16 %v692
        %v750 = vunpack.c.l.b16 %v693
        %v751 = vunpack.c.h.b16 %v693
        %v752 = vunpack.c.l.b16 %v694
        %v753 = vunpack.c.h.b16 %v694
        %v754 = vunpack.c.l.b16 %v695
        %v755 = vunpack.c.h.b16 %v695
        %v756 = vpack.c.b16 %v726, %v724
        %v757 = vpack.c.b16 %v727, %v725
        %v758 = vpack.c.b16 %v730, %v728
        %v759 = vpack.c.b16 %v731, %v729
        %v760 = vpack.c.b16 %v734, %v732
        %v761 = vpack.c.b16 %v735, %v733
        %v762 = vpack.c.b16 %v738, %v736
        %v763 = vpack.c.b16 %v739, %v737
        %v764 = vpack.c.b16 %v742, %v740
        %v765 = vpack.c.b16 %v743, %v741
        %v766 = vpack.c.b16 %v746, %v744
        %v767 = vpack.c.b16 %v747, %v745
        %v768 = vpack.c.b16 %v750, %v748
        %v769 = vpack.c.b16 %v751, %v749
        %v770 = vpack.c.b16 %v754, %v752
        %v771 = vpack.c.b16 %v755, %v753
        %788 = vmatprep.subr.bf16.mxu0 %v757
        %789 = vmatpush1.bf16.msra.mxu0 %v756
        %790 = vmatprep.subr.bf16.mxu0 %v759
        %791 = vmatpush1.bf16.msra.mxu0 %v758
        %792 = vmatprep.subr.bf16.mxu0 %v761
        %793 = vmatpush1.bf16.msra.mxu0 %v760
        %794 = vmatprep.subr.bf16.mxu0 %v763
        %795 = vmatpush1.bf16.msra.mxu0 %v762
        %796 = vmatprep.subr.bf16.mxu0 %v765
        %797 = vmatpush1.bf16.msra.mxu0 %v764
        %798 = vmatprep.subr.bf16.mxu0 %v767
        %799 = vmatpush1.bf16.msra.mxu0 %v766
        %800 = vmatprep.subr.bf16.mxu0 %v769
        %801 = vmatpush1.bf16.msra.mxu0 %v768
        %802 = vmatprep.subr.bf16.mxu0 %v771
        %803 = vmatpush1.bf16.msra.mxu0 %v770
        %804 = vmatprep.subr.bf16.mxu0 0
        %805 = vmatpush1.bf16.msra.mxu0 0
        %806 = vmatprep.subr.bf16.mxu0 0
        %807 = vmatpush1.bf16.msra.mxu0 0
        %808 = vmatprep.subr.bf16.mxu0 0
        %809 = vmatpush1.bf16.msra.mxu0 0
        %810 = vmatprep.subr.bf16.mxu0 0
        %811 = vmatpush1.bf16.msra.mxu0 0
        %812 = vmatprep.subr.bf16.mxu0 0
        %813 = vmatpush1.bf16.msra.mxu0 0
        %814 = vmatprep.subr.bf16.mxu0 0
        %815 = vmatpush1.bf16.msra.mxu0 0
        %816 = vmatprep.subr.bf16.mxu0 0
        %817 = vmatpush1.bf16.msra.mxu0 0
        %818 = vmatprep.subr.bf16.mxu0 0
        %819 = vmatpush1.bf16.msra.mxu0 0
        %820 = vmatprep.mubr.bf16.mxu0 0
        %821 = vmatmul.mubr.bf16.gmra.mrb[0].mxu0 %v679
        %v822 = vpop.f32.mrb[0].mxu0
        %v823 = vadd.f32 %v701, %v822
        %v824 = vpop.f32.mrb[0].mxu0
        %v825 = vadd.f32 %v705, %v824
        %v826 = vpop.f32.mrb[0].mxu0
        %v827 = vpop.f32.mrb[0].mxu0
        %828 = vdwg.mxu0
        %v829 = vmax.f32 %v823, 0.0
        %v830 = vmax.f32 %v825, 0.0
        %v831 = vpack.c.bf16 %v829, %v829
        %v832 = vpack.c.bf16 %v830, %v830
        %v833 = vld [vmem:[#allocation2] sm:$0xf]
        %v834 = vld [vmem:[#allocation2 + $0x4] sm:$0xf]
        %v835 = vld [vmem:[#allocation2 + $0x8] sm:$0xf]
        %v836 = vld [vmem:[#allocation2 + $0xc] sm:$0xf]
        %v837 = vld [vmem:[#allocation2 + $0x10] sm:$0xf]
        %v838 = vld [vmem:[#allocation2 + $0x14] sm:$0xf]
        %v839 = vld [vmem:[#allocation2 + $0x18] sm:$0xf]
        %v840 = vld [vmem:[#allocation2 + $0x1c] sm:$0xf]
        %v841 = vld [vmem:[#allocation2 + $0x20] sm:$0xf]
        %v842 = vld [vmem:[#allocation2 + $0x24] sm:$0xf]
        %v843 = vld [vmem:[#allocation2 + $0x28] sm:$0xf]
        %v844 = vld [vmem:[#allocation2 + $0x2c] sm:$0xf]
        %v845 = vld [vmem:[#allocation2 + $0x30] sm:$0xf]
        %v846 = vld [vmem:[#allocation2 + $0x34] sm:$0xf]
        %v847 = vld [vmem:[#allocation2 + $0x38] sm:$0xf]
        %v848 = vld [vmem:[#allocation2 + $0x3c] sm:$0xf]
        %v849 = vld [vmem:[#allocation2 + $0x40] sm:$0xf]
        %v850 = vld [vmem:[#allocation2 + $0x44] sm:$0xf]
        %v851 = vld [vmem:[#allocation2 + $0x48] sm:$0xf]
        %v852 = vld [vmem:[#allocation2 + $0x4c] sm:$0xf]
        %v853 = vld [vmem:[#allocation2 + $0x50] sm:$0xf]
        %v854 = vld [vmem:[#allocation2 + $0x54] sm:$0xf]
        %v855 = vld [vmem:[#allocation2 + $0x58] sm:$0xf]
        %v856 = vld [vmem:[#allocation2 + $0x5c] sm:$0xf]
        %v857 = vld [vmem:[#allocation18 + $0x1] ss:$0 sm:$0xff]
        %v882 = vunpack.c.l.b16 %v833
        %v883 = vunpack.c.l.b16 %v834
        %v884 = vunpack.c.l.b16 %v835
        %v885 = vunpack.c.l.b16 %v836
        %v886 = vunpack.c.l.b16 %v837
        %v887 = vunpack.c.l.b16 %v838
        %v888 = vunpack.c.l.b16 %v839
        %v889 = vunpack.c.l.b16 %v840
        %v890 = vunpack.c.l.b16 %v841
        %v891 = vunpack.c.l.b16 %v842
        %v892 = vunpack.c.l.b16 %v843
        %v893 = vunpack.c.l.b16 %v844
        %v894 = vunpack.c.l.b16 %v845
        %v895 = vunpack.c.l.b16 %v846
        %v896 = vunpack.c.l.b16 %v847
        %v897 = vunpack.c.l.b16 %v848
        %v898 = vunpack.c.l.b16 %v849
        %v899 = vunpack.c.l.b16 %v850
        %v900 = vunpack.c.l.b16 %v851
        %v901 = vunpack.c.l.b16 %v852
        %v902 = vunpack.c.l.b16 %v853
        %v903 = vunpack.c.l.b16 %v854
        %v904 = vunpack.c.l.b16 %v855
        %v905 = vunpack.c.l.b16 %v856
        %v906 = vpack.c.b16 %v883, %v882
        %v907 = vpack.c.b16 %v885, %v884
        %v908 = vpack.c.b16 %v887, %v886
        %v909 = vpack.c.b16 %v889, %v888
        %v910 = vpack.c.b16 %v891, %v890
        %v911 = vpack.c.b16 %v893, %v892
        %v912 = vpack.c.b16 %v895, %v894
        %v913 = vpack.c.b16 %v897, %v896
        %v914 = vpack.c.b16 %v899, %v898
        %v915 = vpack.c.b16 %v901, %v900
        %v916 = vpack.c.b16 %v903, %v902
        %v917 = vpack.c.b16 %v905, %v904
        %vm930 = vcmask 523264
        %v932 = vsel %vm930, %v832, 0
        %934 = vmatprep.subr.bf16.mxu0 0
        %935 = vmatpush1.bf16.msra.mxu0 %v906
        %936 = vmatprep.subr.bf16.mxu0 0
        %937 = vmatpush1.bf16.msra.mxu0 %v907
        %938 = vmatprep.subr.bf16.mxu0 0
        %939 = vmatpush1.bf16.msra.mxu0 %v908
        %940 = vmatprep.subr.bf16.mxu0 0
        %941 = vmatpush1.bf16.msra.mxu0 %v909
        %942 = vmatprep.subr.bf16.mxu0 0
        %943 = vmatpush1.bf16.msra.mxu0 %v910
        %944 = vmatprep.subr.bf16.mxu0 0
        %945 = vmatpush1.bf16.msra.mxu0 %v911
        %946 = vmatprep.subr.bf16.mxu0 0
        %947 = vmatpush1.bf16.msra.mxu0 %v912
        %948 = vmatprep.subr.bf16.mxu0 0
        %949 = vmatpush1.bf16.msra.mxu0 %v913
        %950 = vmatprep.subr.bf16.mxu0 0
        %951 = vmatpush1.bf16.msra.mxu0 %v914
        %952 = vmatprep.subr.bf16.mxu0 0
        %953 = vmatpush1.bf16.msra.mxu0 %v915
        %954 = vmatprep.subr.bf16.mxu0 0
        %955 = vmatpush1.bf16.msra.mxu0 %v916
        %956 = vmatprep.subr.bf16.mxu0 0
        %957 = vmatpush1.bf16.msra.mxu0 %v917
        %958 = vmatprep.subr.bf16.mxu0 0
        %959 = vmatpush1.bf16.msra.mxu0 0
        %960 = vmatprep.subr.bf16.mxu0 0
        %961 = vmatpush1.bf16.msra.mxu0 0
        %962 = vmatprep.subr.bf16.mxu0 0
        %963 = vmatpush1.bf16.msra.mxu0 0
        %964 = vmatprep.subr.bf16.mxu0 0
        %965 = vmatpush1.bf16.msra.mxu0 0
        %966 = vmatprep.mubr.bf16.mxu0 %v932
        %967 = vmatmul.mubr.bf16.gmra.mrb[0].mxu0 %v831
        %v968 = vpop.f32.mrb[0].mxu0
        %v969 = vadd.f32 %v857, %v968
        %v970 = vpop.f32.mrb[0].mxu0
        %v971 = vpop.f32.mrb[0].mxu0
        %v972 = vpop.f32.mrb[0].mxu0
        %973 = vdwg.mxu0
        %v974 = vmax.f32 %v969, 0.0
        %v975 = vld [vmem:[#allocation18 + $0x2] ss:$0 sm:$0xff]
        %v976 = vmul.f32 %v974, %v975
        %v977 = vld [vmem:[#allocation18 + $0x3] ss:$0 sm:$0xff]
        %v978 = vadd.f32 %v976, %v977
        %v979 = vpack.c.bf16 %v978, %v978
        %v980 = vld [vmem:[%s3] sm:$0xff]
        %v981 = vld [vmem:[%s3 + $0x8] sm:$0xff]
        %v982 = vld [vmem:[%s3 + $0x10] sm:$0xff]
        %v983 = vld [vmem:[%s3 + $0x18] sm:$0xf]
        %v984 = vld [vmem:[%s3 + $0x1c] sm:$0xff]
        %v985 = vld [vmem:[%s3 + $0x24] sm:$0xff]
        %v986 = vld [vmem:[%s3 + $0x2c] sm:$0xff]
        %v987 = vld [vmem:[%s3 + $0x34] sm:$0xf]
        %v988 = vld [vmem:[%s3 + $0x38] sm:$0xff]
        %v989 = vld [vmem:[%s3 + $0x40] sm:$0xff]
        %v990 = vld [vmem:[%s3 + $0x48] sm:$0xff]
        %v991 = vld [vmem:[%s3 + $0x50] sm:$0xf]
        %v992 = vld [vmem:[%s3 + $0x54] sm:$0xff]
        %v993 = vld [vmem:[%s3 + $0x5c] sm:$0xff]
        %v994 = vld [vmem:[%s3 + $0x64] sm:$0xff]
        %v995 = vld [vmem:[%s3 + $0x6c] sm:$0xf]
        %v996 = vld [vmem:[%s3 + $0x70] sm:$0xff]
        %v997 = vld [vmem:[%s3 + $0x78] sm:$0xff]
        %v998 = vld [vmem:[%s3 + $0x80] sm:$0xff]
        %v999 = vld [vmem:[%s3 + $0x88] sm:$0xf]
        %v1000 = vld [vmem:[%s3 + $0x8c] sm:$0xff]
        %v1001 = vld [vmem:[%s3 + $0x94] sm:$0xff]
        %v1002 = vld [vmem:[%s3 + $0x9c] sm:$0xff]
        %v1003 = vld [vmem:[%s3 + $0xa4] sm:$0xf]
        %v1004 = vld [vmem:[%s3 + $0xa8] sm:$0xff]
        %v1005 = vld [vmem:[%s3 + $0xb0] sm:$0xff]
        %v1006 = vld [vmem:[%s3 + $0xb8] sm:$0xff]
        %v1007 = vld [vmem:[%s3 + $0xc0] sm:$0xf]
        %v1008 = vld [vmem:[%s3 + $0xc4] sm:$0xff]
        %v1009 = vld [vmem:[%s3 + $0xcc] sm:$0xff]
        %v1010 = vld [vmem:[%s3 + $0xd4] sm:$0xff]
        %v1011 = vld [vmem:[%s3 + $0xdc] sm:$0xf]
        %v1012 = vld [vmem:[%s3 + $0xe0] sm:$0xff]
        %v1013 = vld [vmem:[%s3 + $0xe8] sm:$0xff]
        %v1014 = vld [vmem:[%s3 + $0xf0] sm:$0xff]
        %v1015 = vld [vmem:[%s3 + $0xf8] sm:$0xf]
        %v1016 = vld [vmem:[%s3 + $0xfc] sm:$0xff]
        %v1017 = vld [vmem:[%s3 + $0x104] sm:$0xff]
        %v1018 = vld [vmem:[%s3 + $0x10c] sm:$0xff]
        %v1019 = vld [vmem:[%s3 + $0x114] sm:$0xf]
        %v1020 = vld [vmem:[%s3 + $0x118] sm:$0xff]
        %v1021 = vld [vmem:[%s3 + $0x120] sm:$0xff]
        %v1022 = vld [vmem:[%s3 + $0x128] sm:$0xff]
        %v1023 = vld [vmem:[%s3 + $0x130] sm:$0xf]
        %v1024 = vld [vmem:[%s3 + $0x134] sm:$0xff]
        %v1025 = vld [vmem:[%s3 + $0x13c] sm:$0xff]
        %v1026 = vld [vmem:[%s3 + $0x144] sm:$0xff]
        %v1027 = vld [vmem:[%s3 + $0x14c] sm:$0xf]
        %s1028 = scalar_lea.vmem [#allocation18], 4
        %v1029 = vld [vmem:[%s1028] ss:$8 sm:$0xf]
        %v1030 = vld [vmem:[%s1028] ss:$8 sm:$0xf0]
        %v1031 = vor.u32 %v1029, %v1030
        %v1033 = vlaneseq
        %v1034 = vshrl.u32 %v1033, 7
        %v1035 = vsub.s32 0, %v1034
        %v1036 = vrot.slane %v1031, %v1035
        %v1037 = vlaneseq
        %v1038 = vshrl.u32 %v1037, 7
        %v1039 = vsub.s32 1, %v1038
        %v1040 = vrot.slane %v1031, %v1039
        %v1041 = vlaneseq
        %v1042 = vshrl.u32 %v1041, 7
        %v1043 = vsub.s32 2, %v1042
        %v1044 = vrot.slane %v1031, %v1043
        %v1045 = vlaneseq
        %v1046 = vshrl.u32 %v1045, 7
        %v1047 = vsub.s32 3, %v1046
        %v1048 = vrot.slane %v1031, %v1047
        %v1049 = vlaneseq
        %v1050 = vshrl.u32 %v1049, 7
        %v1051 = vsub.s32 4, %v1050
        %v1052 = vrot.slane %v1031, %v1051
        %v1053 = vlaneseq
        %v1054 = vshrl.u32 %v1053, 7
        %v1055 = vsub.s32 5, %v1054
        %v1056 = vrot.slane %v1031, %v1055
        %v1057 = vlaneseq
        %v1058 = vshrl.u32 %v1057, 7
        %v1059 = vsub.s32 6, %v1058
        %v1060 = vrot.slane %v1031, %v1059
        %v1116 = vunpack.c.l.b16 %v980
        %v1117 = vunpack.c.h.b16 %v980
        %v1118 = vunpack.c.l.b16 %v981
        %v1119 = vunpack.c.h.b16 %v981
        %v1120 = vunpack.c.l.b16 %v982
        %v1121 = vunpack.c.h.b16 %v982
        %v1122 = vunpack.c.l.b16 %v983
        %v1123 = vunpack.c.l.b16 %v984
        %v1124 = vunpack.c.h.b16 %v984
        %v1125 = vunpack.c.l.b16 %v985
        %v1126 = vunpack.c.h.b16 %v985
        %v1127 = vunpack.c.l.b16 %v986
        %v1128 = vunpack.c.h.b16 %v986
        %v1129 = vunpack.c.l.b16 %v987
        %v1130 = vunpack.c.l.b16 %v988
        %v1131 = vunpack.c.h.b16 %v988
        %v1132 = vunpack.c.l.b16 %v989
        %v1133 = vunpack.c.h.b16 %v989
        %v1134 = vunpack.c.l.b16 %v990
        %v1135 = vunpack.c.h.b16 %v990
        %v1136 = vunpack.c.l.b16 %v991
        %v1137 = vunpack.c.l.b16 %v992
        %v1138 = vunpack.c.h.b16 %v992
        %v1139 = vunpack.c.l.b16 %v993
        %v1140 = vunpack.c.h.b16 %v993
        %v1141 = vunpack.c.l.b16 %v994
        %v1142 = vunpack.c.h.b16 %v994
        %v1143 = vunpack.c.l.b16 %v995
        %v1144 = vunpack.c.l.b16 %v996
        %v1145 = vunpack.c.h.b16 %v996
        %v1146 = vunpack.c.l.b16 %v997
        %v1147 = vunpack.c.h.b16 %v997
        %v1148 = vunpack.c.l.b16 %v998
        %v1149 = vunpack.c.h.b16 %v998
        %v1150 = vunpack.c.l.b16 %v999
        %v1151 = vunpack.c.l.b16 %v1000
        %v1152 = vunpack.c.h.b16 %v1000
        %v1153 = vunpack.c.l.b16 %v1001
        %v1154 = vunpack.c.h.b16 %v1001
        %v1155 = vunpack.c.l.b16 %v1002
        %v1156 = vunpack.c.h.b16 %v1002
        %v1157 = vunpack.c.l.b16 %v1003
        %v1158 = vunpack.c.l.b16 %v1004
        %v1159 = vunpack.c.h.b16 %v1004
        %v1160 = vunpack.c.l.b16 %v1005
        %v1161 = vunpack.c.h.b16 %v1005
        %v1162 = vunpack.c.l.b16 %v1006
        %v1163 = vunpack.c.h.b16 %v1006
        %v1164 = vunpack.c.l.b16 %v1007
        %v1165 = vunpack.c.l.b16 %v1008
        %v1166 = vunpack.c.h.b16 %v1008
        %v1167 = vunpack.c.l.b16 %v1009
        %v1168 = vunpack.c.h.b16 %v1009
        %v1169 = vunpack.c.l.b16 %v1010
        %v1170 = vunpack.c.h.b16 %v1010
        %v1171 = vunpack.c.l.b16 %v1011
        %v1172 = vunpack.c.l.b16 %v1012
        %v1173 = vunpack.c.h.b16 %v1012
        %v1174 = vunpack.c.l.b16 %v1013
        %v1175 = vunpack.c.h.b16 %v1013
        %v1176 = vunpack.c.l.b16 %v1014
        %v1177 = vunpack.c.h.b16 %v1014
        %v1178 = vunpack.c.l.b16 %v1015
        %v1179 = vunpack.c.l.b16 %v1016
        %v1180 = vunpack.c.h.b16 %v1016
        %v1181 = vunpack.c.l.b16 %v1017
        %v1182 = vunpack.c.h.b16 %v1017
        %v1183 = vunpack.c.l.b16 %v1018
        %v1184 = vunpack.c.h.b16 %v1018
        %v1185 = vunpack.c.l.b16 %v1019
        %v1186 = vunpack.c.l.b16 %v1020
        %v1187 = vunpack.c.h.b16 %v1020
        %v1188 = vunpack.c.l.b16 %v1021
        %v1189 = vunpack.c.h.b16 %v1021
        %v1190 = vunpack.c.l.b16 %v1022
        %v1191 = vunpack.c.h.b16 %v1022
        %v1192 = vunpack.c.l.b16 %v1023
        %v1193 = vunpack.c.l.b16 %v1024
        %v1194 = vunpack.c.h.b16 %v1024
        %v1195 = vunpack.c.l.b16 %v1025
        %v1196 = vunpack.c.h.b16 %v1025
        %v1197 = vunpack.c.l.b16 %v1026
        %v1198 = vunpack.c.h.b16 %v1026
        %v1199 = vunpack.c.l.b16 %v1027
        %v1200 = vpack.c.b16 %v1123, %v1116
        %v1201 = vpack.c.b16 %v1124, %v1117
        %v1202 = vpack.c.b16 %v1125, %v1118
        %v1203 = vpack.c.b16 %v1126, %v1119
        %v1204 = vpack.c.b16 %v1127, %v1120
        %v1205 = vpack.c.b16 %v1128, %v1121
        %v1206 = vpack.c.b16 %v1129, %v1122
        %v1207 = vpack.c.b16 %v1137, %v1130
        %v1208 = vpack.c.b16 %v1138, %v1131
        %v1209 = vpack.c.b16 %v1139, %v1132
        %v1210 = vpack.c.b16 %v1140, %v1133
        %v1211 = vpack.c.b16 %v1141, %v1134
        %v1212 = vpack.c.b16 %v1142, %v1135
        %v1213 = vpack.c.b16 %v1143, %v1136
        %v1214 = vpack.c.b16 %v1151, %v1144
        %v1215 = vpack.c.b16 %v1152, %v1145
        %v1216 = vpack.c.b16 %v1153, %v1146
        %v1217 = vpack.c.b16 %v1154, %v1147
        %v1218 = vpack.c.b16 %v1155, %v1148
        %v1219 = vpack.c.b16 %v1156, %v1149
        %v1220 = vpack.c.b16 %v1157, %v1150
        %v1221 = vpack.c.b16 %v1165, %v1158
        %v1222 = vpack.c.b16 %v1166, %v1159
        %v1223 = vpack.c.b16 %v1167, %v1160
        %v1224 = vpack.c.b16 %v1168, %v1161
        %v1225 = vpack.c.b16 %v1169, %v1162
        %v1226 = vpack.c.b16 %v1170, %v1163
        %v1227 = vpack.c.b16 %v1171, %v1164
        %v1228 = vpack.c.b16 %v1179, %v1172
        %v1229 = vpack.c.b16 %v1180, %v1173
        %v1230 = vpack.c.b16 %v1181, %v1174
        %v1231 = vpack.c.b16 %v1182, %v1175
        %v1232 = vpack.c.b16 %v1183, %v1176
        %v1233 = vpack.c.b16 %v1184, %v1177
        %v1234 = vpack.c.b16 %v1185, %v1178
        %v1235 = vpack.c.b16 %v1193, %v1186
        %v1236 = vpack.c.b16 %v1194, %v1187
        %v1237 = vpack.c.b16 %v1195, %v1188
        %v1238 = vpack.c.b16 %v1196, %v1189
        %v1239 = vpack.c.b16 %v1197, %v1190
        %v1240 = vpack.c.b16 %v1198, %v1191
        %v1241 = vpack.c.b16 %v1199, %v1192
        %vm1284 = vcmask 785408
        %v1286 = vsel %vm1284, %v979, 0
        %1288 = vmatprep.subr.bf16.mxu0 %v1201
        %1289 = vmatpush1.bf16.msra.mxu0 %v1200
        %1290 = vmatprep.subr.bf16.mxu0 %v1208
        %1291 = vmatpush1.bf16.msra.mxu0 %v1207
        %1292 = vmatprep.subr.bf16.mxu0 %v1215
        %1293 = vmatpush1.bf16.msra.mxu0 %v1214
        %1294 = vmatprep.subr.bf16.mxu0 %v1222
        %1295 = vmatpush1.bf16.msra.mxu0 %v1221
        %1296 = vmatprep.subr.bf16.mxu0 %v1229
        %1297 = vmatpush1.bf16.msra.mxu0 %v1228
        %1298 = vmatprep.subr.bf16.mxu0 %v1236
        %1299 = vmatpush1.bf16.msra.mxu0 %v1235
        %1300 = vmatprep.subr.bf16.mxu0 0
        %1301 = vmatpush1.bf16.msra.mxu0 0
        %1302 = vmatprep.subr.bf16.mxu0 0
        %1303 = vmatpush1.bf16.msra.mxu0 0
        %1304 = vmatprep.subr.bf16.mxu0 0
        %1305 = vmatpush1.bf16.msra.mxu0 0
        %1306 = vmatprep.subr.bf16.mxu0 0
        %1307 = vmatpush1.bf16.msra.mxu0 0
        %1308 = vmatprep.subr.bf16.mxu0 0
        %1309 = vmatpush1.bf16.msra.mxu0 0
        %1310 = vmatprep.subr.bf16.mxu0 0
        %1311 = vmatpush1.bf16.msra.mxu0 0
        %1312 = vmatprep.subr.bf16.mxu0 0
        %1313 = vmatpush1.bf16.msra.mxu0 0
        %1314 = vmatprep.subr.bf16.mxu0 0
        %1315 = vmatpush1.bf16.msra.mxu0 0
        %1316 = vmatprep.subr.bf16.mxu0 0
        %1317 = vmatpush1.bf16.msra.mxu0 0
        %1318 = vmatprep.subr.bf16.mxu0 0
        %1319 = vmatpush1.bf16.msra.mxu0 0
        %1320 = vmatprep.mubr.bf16.mxu0 0
        %1321 = vmatmul.mubr.bf16.gmra.mrb[0].mxu0 %v1286
        %v1322 = vpop.f32.mrb[0].mxu0
        %v1323 = vadd.f32 %v1036, %v1322
        %v1324 = vpop.f32.mrb[0].mxu0
        %v1325 = vadd.f32 %v1040, %v1324
        %v1326 = vpop.f32.mrb[0].mxu0
        %v1327 = vpop.f32.mrb[0].mxu0
        %1328 = vdwg.mxu0
        %1329 = vmatprep.subr.bf16.mxu0 %v1203
        %1330 = vmatpush1.bf16.msra.mxu0 %v1202
        %1331 = vmatprep.subr.bf16.mxu0 %v1210
        %1332 = vmatpush1.bf16.msra.mxu0 %v1209
        %1333 = vmatprep.subr.bf16.mxu0 %v1217
        %1334 = vmatpush1.bf16.msra.mxu0 %v1216
        %1335 = vmatprep.subr.bf16.mxu0 %v1224
        %1336 = vmatpush1.bf16.msra.mxu0 %v1223
        %1337 = vmatprep.subr.bf16.mxu0 %v1231
        %1338 = vmatpush1.bf16.msra.mxu0 %v1230
        %1339 = vmatprep.subr.bf16.mxu0 %v1238
        %1340 = vmatpush1.bf16.msra.mxu0 %v1237
        %1341 = vmatprep.subr.bf16.mxu0 0
        %1342 = vmatpush1.bf16.msra.mxu0 0
        %1343 = vmatprep.subr.bf16.mxu0 0
        %1344 = vmatpush1.bf16.msra.mxu0 0
        %1345 = vmatprep.subr.bf16.mxu0 0
        %1346 = vmatpush1.bf16.msra.mxu0 0
        %1347 = vmatprep.subr.bf16.mxu0 0
        %1348 = vmatpush1.bf16.msra.mxu0 0
        %1349 = vmatprep.subr.bf16.mxu0 0
        %1350 = vmatpush1.bf16.msra.mxu0 0
        %1351 = vmatprep.subr.bf16.mxu0 0
        %1352 = vmatpush1.bf16.msra.mxu0 0
        %1353 = vmatprep.subr.bf16.mxu0 0
        %1354 = vmatpush1.bf16.msra.mxu0 0
        %1355 = vmatprep.subr.bf16.mxu0 0
        %1356 = vmatpush1.bf16.msra.mxu0 0
        %1357 = vmatprep.subr.bf16.mxu0 0
        %1358 = vmatpush1.bf16.msra.mxu0 0
        %1359 = vmatprep.subr.bf16.mxu0 0
        %1360 = vmatpush1.bf16.msra.mxu0 0
        %1361 = vmatprep.mubr.bf16.mxu0 0
        %1362 = vmatmul.mubr.bf16.gmra.mrb[0].mxu0 %v1286
        %v1363 = vpop.f32.mrb[0].mxu0
        %v1364 = vadd.f32 %v1044, %v1363
        %v1365 = vpop.f32.mrb[0].mxu0
        %v1366 = vadd.f32 %v1048, %v1365
        %v1367 = vpop.f32.mrb[0].mxu0
        %v1368 = vpop.f32.mrb[0].mxu0
        %1369 = vdwg.mxu0
        %1370 = vmatprep.subr.bf16.mxu0 %v1205
        %1371 = vmatpush1.bf16.msra.mxu0 %v1204
        %1372 = vmatprep.subr.bf16.mxu0 %v1212
        %1373 = vmatpush1.bf16.msra.mxu0 %v1211
        %1374 = vmatprep.subr.bf16.mxu0 %v1219
        %1375 = vmatpush1.bf16.msra.mxu0 %v1218
        %1376 = vmatprep.subr.bf16.mxu0 %v1226
        %1377 = vmatpush1.bf16.msra.mxu0 %v1225
        %1378 = vmatprep.subr.bf16.mxu0 %v1233
        %1379 = vmatpush1.bf16.msra.mxu0 %v1232
        %1380 = vmatprep.subr.bf16.mxu0 %v1240
        %1381 = vmatpush1.bf16.msra.mxu0 %v1239
        %1382 = vmatprep.subr.bf16.mxu0 0
        %1383 = vmatpush1.bf16.msra.mxu0 0
        %1384 = vmatprep.subr.bf16.mxu0 0
        %1385 = vmatpush1.bf16.msra.mxu0 0
        %1386 = vmatprep.subr.bf16.mxu0 0
        %1387 = vmatpush1.bf16.msra.mxu0 0
        %1388 = vmatprep.subr.bf16.mxu0 0
        %1389 = vmatpush1.bf16.msra.mxu0 0
        %1390 = vmatprep.subr.bf16.mxu0 0
        %1391 = vmatpush1.bf16.msra.mxu0 0
        %1392 = vmatprep.subr.bf16.mxu0 0
        %1393 = vmatpush1.bf16.msra.mxu0 0
        %1394 = vmatprep.subr.bf16.mxu0 0
        %1395 = vmatpush1.bf16.msra.mxu0 0
        %1396 = vmatprep.subr.bf16.mxu0 0
        %1397 = vmatpush1.bf16.msra.mxu0 0
        %1398 = vmatprep.subr.bf16.mxu0 0
        %1399 = vmatpush1.bf16.msra.mxu0 0
        %1400 = vmatprep.subr.bf16.mxu0 0
        %1401 = vmatpush1.bf16.msra.mxu0 0
        %1402 = vmatprep.mubr.bf16.mxu0 0
        %1403 = vmatmul.mubr.bf16.gmra.mrb[0].mxu0 %v1286
        %v1404 = vpop.f32.mrb[0].mxu0
        %v1405 = vadd.f32 %v1052, %v1404
        %v1406 = vpop.f32.mrb[0].mxu0
        %v1407 = vadd.f32 %v1056, %v1406
        %v1408 = vpop.f32.mrb[0].mxu0
        %v1409 = vpop.f32.mrb[0].mxu0
        %1410 = vdwg.mxu0
        %1411 = vmatprep.subr.bf16.mxu0 0
        %1412 = vmatpush1.bf16.msra.mxu0 %v1206
        %1413 = vmatprep.subr.bf16.mxu0 0
        %1414 = vmatpush1.bf16.msra.mxu0 %v1213
        %1415 = vmatprep.subr.bf16.mxu0 0
        %1416 = vmatpush1.bf16.msra.mxu0 %v1220
        %1417 = vmatprep.subr.bf16.mxu0 0
        %1418 = vmatpush1.bf16.msra.mxu0 %v1227
        %1419 = vmatprep.subr.bf16.mxu0 0
        %1420 = vmatpush1.bf16.msra.mxu0 %v1234
        %1421 = vmatprep.subr.bf16.mxu0 0
        %1422 = vmatpush1.bf16.msra.mxu0 %v1241
        %1423 = vmatprep.subr.bf16.mxu0 0
        %1424 = vmatpush1.bf16.msra.mxu0 0
        %1425 = vmatprep.subr.bf16.mxu0 0
        %1426 = vmatpush1.bf16.msra.mxu0 0
        %1427 = vmatprep.subr.bf16.mxu0 0
        %1428 = vmatpush1.bf16.msra.mxu0 0
        %1429 = vmatprep.subr.bf16.mxu0 0
        %1430 = vmatpush1.bf16.msra.mxu0 0
        %1431 = vmatprep.subr.bf16.mxu0 0
        %1432 = vmatpush1.bf16.msra.mxu0 0
        %1433 = vmatprep.subr.bf16.mxu0 0
        %1434 = vmatpush1.bf16.msra.mxu0 0
        %1435 = vmatprep.subr.bf16.mxu0 0
        %1436 = vmatpush1.bf16.msra.mxu0 0
        %1437 = vmatprep.subr.bf16.mxu0 0
        %1438 = vmatpush1.bf16.msra.mxu0 0
        %1439 = vmatprep.subr.bf16.mxu0 0
        %1440 = vmatpush1.bf16.msra.mxu0 0
        %1441 = vmatprep.subr.bf16.mxu0 0
        %1442 = vmatpush1.bf16.msra.mxu0 0
        %1443 = vmatprep.mubr.bf16.mxu0 0
        %1444 = vmatmul.mubr.bf16.gmra.mrb[0].mxu0 %v1286
        %v1445 = vpop.f32.mrb[0].mxu0
        %v1446 = vadd.f32 %v1060, %v1445
        %v1447 = vpop.f32.mrb[0].mxu0
        %v1448 = vpop.f32.mrb[0].mxu0
        %v1449 = vpop.f32.mrb[0].mxu0
        %1450 = vdwg.mxu0
        %v1451 = vmul.f32 %v1323, %v1325
        %v1452 = vpack.c.bf16 %v1451, %v1451
        %v1453 = vld [vmem:[%s4] sm:$0xf]
        %v1454 = vld [vmem:[%s4 + $0x4] sm:$0xf]
        %v1455 = vld [vmem:[%s4 + $0x8] sm:$0xf]
        %v1456 = vld [vmem:[%s4 + $0xc] sm:$0xf]
        %v1457 = vld [vmem:[%s4 + $0x10] sm:$0xf]
        %v1458 = vld [vmem:[%s4 + $0x14] sm:$0xf]
        %v1459 = vld [vmem:[%s4 + $0x18] sm:$0xf]
        %v1460 = vld [vmem:[%s4 + $0x1c] sm:$0xf]
        %v1461 = vld [vmem:[%s4 + $0x20] sm:$0xf]
        %v1462 = vld [vmem:[%s4 + $0x24] sm:$0xf]
        %v1463 = vld [vmem:[%s4 + $0x28] sm:$0xf]
        %v1464 = vld [vmem:[%s4 + $0x2c] sm:$0xf]
        %v1477 = vunpack.c.l.b16 %v1453
        %v1478 = vunpack.c.l.b16 %v1454
        %v1479 = vunpack.c.l.b16 %v1455
        %v1480 = vunpack.c.l.b16 %v1456
        %v1481 = vunpack.c.l.b16 %v1457
        %v1482 = vunpack.c.l.b16 %v1458
        %v1483 = vunpack.c.l.b16 %v1459
        %v1484 = vunpack.c.l.b16 %v1460
        %v1485 = vunpack.c.l.b16 %v1461
        %v1486 = vunpack.c.l.b16 %v1462
        %v1487 = vunpack.c.l.b16 %v1463
        %v1488 = vunpack.c.l.b16 %v1464
        %v1489 = vpack.c.b16 %v1478, %v1477
        %v1490 = vpack.c.b16 %v1480, %v1479
        %v1491 = vpack.c.b16 %v1482, %v1481
        %v1492 = vpack.c.b16 %v1484, %v1483
        %v1493 = vpack.c.b16 %v1486, %v1485
        %v1494 = vpack.c.b16 %v1488, %v1487
        %v1502 = vsel %vm1284, %v1452, 0
        %1504 = vmatprep.subr.bf16.mxu0 0
        %1505 = vmatpush1.bf16.msra.mxu0 %v1489
        %1506 = vmatprep.subr.bf16.mxu0 0
        %1507 = vmatpush1.bf16.msra.mxu0 %v1490
        %1508 = vmatprep.subr.bf16.mxu0 0
        %1509 = vmatpush1.bf16.msra.mxu0 %v1491
        %1510 = vmatprep.subr.bf16.mxu0 0
        %1511 = vmatpush1.bf16.msra.mxu0 %v1492
        %1512 = vmatprep.subr.bf16.mxu0 0
        %1513 = vmatpush1.bf16.msra.mxu0 %v1493
        %1514 = vmatprep.subr.bf16.mxu0 0
        %1515 = vmatpush1.bf16.msra.mxu0 %v1494
        %1516 = vmatprep.subr.bf16.mxu0 0
        %1517 = vmatpush1.bf16.msra.mxu0 0
        %1518 = vmatprep.subr.bf16.mxu0 0
        %1519 = vmatpush1.bf16.msra.mxu0 0
        %1520 = vmatprep.subr.bf16.mxu0 0
        %1521 = vmatpush1.bf16.msra.mxu0 0
        %1522 = vmatprep.subr.bf16.mxu0 0
        %1523 = vmatpush1.bf16.msra.mxu0 0
        %1524 = vmatprep.subr.bf16.mxu0 0
        %1525 = vmatpush1.bf16.msra.mxu0 0
        %1526 = vmatprep.subr.bf16.mxu0 0
        %1527 = vmatpush1.bf16.msra.mxu0 0
        %1528 = vmatprep.subr.bf16.mxu0 0
        %1529 = vmatpush1.bf16.msra.mxu0 0
        %1530 = vmatprep.subr.bf16.mxu0 0
        %1531 = vmatpush1.bf16.msra.mxu0 0
        %1532 = vmatprep.subr.bf16.mxu0 0
        %1533 = vmatpush1.bf16.msra.mxu0 0
        %1534 = vmatprep.subr.bf16.mxu0 0
        %1535 = vmatpush1.bf16.msra.mxu0 0
        %1536 = vmatprep.mubr.bf16.mxu0 0
        %1537 = vmatmul.mubr.bf16.gmra.mrb[0].mxu0 %v1502
        %v1538 = vpop.f32.mrb[0].mxu0
        %v1539 = vadd.f32 0.0, %v1538
        %v1540 = vpop.f32.mrb[0].mxu0
        %v1541 = vpop.f32.mrb[0].mxu0
        %v1542 = vpop.f32.mrb[0].mxu0
        %1543 = vdwg.mxu0
        %v1544 = vmul.f32 %v1323, %v1364
        %v1545 = vpack.c.bf16 %v1544, %v1544
        %v1547 = vsel %vm1284, %v1545, 0
        %1549 = vmatprep.subr.bf16.mxu0 0
        %1550 = vmatpush1.bf16.msra.mxu0 %v1489
        %1551 = vmatprep.subr.bf16.mxu0 0
        %1552 = vmatpush1.bf16.msra.mxu0 %v1490
        %1553 = vmatprep.subr.bf16.mxu0 0
        %1554 = vmatpush1.bf16.msra.mxu0 %v1491
        %1555 = vmatprep.subr.bf16.mxu0 0
        %1556 = vmatpush1.bf16.msra.mxu0 %v1492
        %1557 = vmatprep.subr.bf16.mxu0 0
        %1558 = vmatpush1.bf16.msra.mxu0 %v1493
        %1559 = vmatprep.subr.bf16.mxu0 0
        %1560 = vmatpush1.bf16.msra.mxu0 %v1494
        %1561 = vmatprep.subr.bf16.mxu0 0
        %1562 = vmatpush1.bf16.msra.mxu0 0
        %1563 = vmatprep.subr.bf16.mxu0 0
        %1564 = vmatpush1.bf16.msra.mxu0 0
        %1565 = vmatprep.subr.bf16.mxu0 0
        %1566 = vmatpush1.bf16.msra.mxu0 0
        %1567 = vmatprep.subr.bf16.mxu0 0
        %1568 = vmatpush1.bf16.msra.mxu0 0
        %1569 = vmatprep.subr.bf16.mxu0 0
        %1570 = vmatpush1.bf16.msra.mxu0 0
        %1571 = vmatprep.subr.bf16.mxu0 0
        %1572 = vmatpush1.bf16.msra.mxu0 0
        %1573 = vmatprep.subr.bf16.mxu0 0
        %1574 = vmatpush1.bf16.msra.mxu0 0
        %1575 = vmatprep.subr.bf16.mxu0 0
        %1576 = vmatpush1.bf16.msra.mxu0 0
        %1577 = vmatprep.subr.bf16.mxu0 0
        %1578 = vmatpush1.bf16.msra.mxu0 0
        %1579 = vmatprep.subr.bf16.mxu0 0
        %1580 = vmatpush1.bf16.msra.mxu0 0
        %1581 = vmatprep.mubr.bf16.mxu0 0
        %1582 = vmatmul.mubr.bf16.gmra.mrb[0].mxu0 %v1547
        %v1583 = vpop.f32.mrb[0].mxu0
        %v1584 = vadd.f32 0.0, %v1583
        %v1585 = vpop.f32.mrb[0].mxu0
        %v1586 = vpop.f32.mrb[0].mxu0
        %v1587 = vpop.f32.mrb[0].mxu0
        %1588 = vdwg.mxu0
        %v1589 = vmul.f32 %v1323, %v1366
        %v1590 = vpack.c.bf16 %v1589, %v1589
        %v1592 = vsel %vm1284, %v1590, 0
        %1594 = vmatprep.subr.bf16.mxu0 0
        %1595 = vmatpush1.bf16.msra.mxu0 %v1489
        %1596 = vmatprep.subr.bf16.mxu0 0
        %1597 = vmatpush1.bf16.msra.mxu0 %v1490
        %1598 = vmatprep.subr.bf16.mxu0 0
        %1599 = vmatpush1.bf16.msra.mxu0 %v1491
        %1600 = vmatprep.subr.bf16.mxu0 0
        %1601 = vmatpush1.bf16.msra.mxu0 %v1492
        %1602 = vmatprep.subr.bf16.mxu0 0
        %1603 = vmatpush1.bf16.msra.mxu0 %v1493
        %1604 = vmatprep.subr.bf16.mxu0 0
        %1605 = vmatpush1.bf16.msra.mxu0 %v1494
        %1606 = vmatprep.subr.bf16.mxu0 0
        %1607 = vmatpush1.bf16.msra.mxu0 0
        %1608 = vmatprep.subr.bf16.mxu0 0
        %1609 = vmatpush1.bf16.msra.mxu0 0
        %1610 = vmatprep.subr.bf16.mxu0 0
        %1611 = vmatpush1.bf16.msra.mxu0 0
        %1612 = vmatprep.subr.bf16.mxu0 0
        %1613 = vmatpush1.bf16.msra.mxu0 0
        %1614 = vmatprep.subr.bf16.mxu0 0
        %1615 = vmatpush1.bf16.msra.mxu0 0
        %1616 = vmatprep.subr.bf16.mxu0 0
        %1617 = vmatpush1.bf16.msra.mxu0 0
        %1618 = vmatprep.subr.bf16.mxu0 0
        %1619 = vmatpush1.bf16.msra.mxu0 0
        %1620 = vmatprep.subr.bf16.mxu0 0
        %1621 = vmatpush1.bf16.msra.mxu0 0
        %1622 = vmatprep.subr.bf16.mxu0 0
        %1623 = vmatpush1.bf16.msra.mxu0 0
        %1624 = vmatprep.subr.bf16.mxu0 0
        %1625 = vmatpush1.bf16.msra.mxu0 0
        %1626 = vmatprep.mubr.bf16.mxu0 0
        %1627 = vmatmul.mubr.bf16.gmra.mrb[0].mxu0 %v1592
        %v1628 = vpop.f32.mrb[0].mxu0
        %v1629 = vadd.f32 0.0, %v1628
        %v1630 = vpop.f32.mrb[0].mxu0
        %v1631 = vpop.f32.mrb[0].mxu0
        %v1632 = vpop.f32.mrb[0].mxu0
        %1633 = vdwg.mxu0
        %v1634 = vmax.f32 %v1539, %v1584
        %v1635 = vmax.f32 %v1634, %v1629
        %v1636 = vsub.f32 %v1539, %v1635
        %v1637 = vmul.f32 %v1636, 1.442695
        %v1638 = vpow.pop %v1637
        %v1639 = vsub.f32 %v1584, %v1635
        %v1640 = vmul.f32 %v1639, 1.442695
        %v1641 = vpow.pop %v1640
        %v1642 = vsub.f32 %v1629, %v1635
        %v1643 = vmul.f32 %v1642, 1.442695
        %v1644 = vpow.pop %v1643
        %v1645 = vadd.f32 %v1638, %v1641
        %v1646 = vadd.f32 %v1645, %v1644
        %v1647 = vrcp.pop %v1646
        %v1648 = vmul.f32 %v1638, %v1647
        %v1649 = vpack.c.bf16 %v1648, %v1648
        %v1650 = vld [vmem:[#allocation4] sm:$0xf]
        %v1651 = vld [vmem:[#allocation4 + $0x4] sm:$0x3]
        %v1654 = vunpack.c.l.b16 %v1650
        %v1655 = vunpack.c.l.b16 %v1651
        %v1656 = vpack.c.b16 %v1655, %v1654
        %vm1657 = vcmask 97280
        %v1659 = vsel %vm1657, %v1649, 0
        %vm1661 = vcmask 1045504
        %v1663 = vsel %vm1661, %v1656, 0
        %1665 = vmatprep.subr.bf16.mxu0 0
        %1666 = vmatpush1.bf16.msra.mxu0 %v1663
        %1667 = vmatprep.subr.bf16.mxu0 0
        %1668 = vmatpush1.bf16.msra.mxu0 0
        %1669 = vmatprep.subr.bf16.mxu0 0
        %1670 = vmatpush1.bf16.msra.mxu0 0
        %1671 = vmatprep.subr.bf16.mxu0 0
        %1672 = vmatpush1.bf16.msra.mxu0 0
        %1673 = vmatprep.subr.bf16.mxu0 0
        %1674 = vmatpush1.bf16.msra.mxu0 0
        %1675 = vmatprep.subr.bf16.mxu0 0
        %1676 = vmatpush1.bf16.msra.mxu0 0
        %1677 = vmatprep.subr.bf16.mxu0 0
        %1678 = vmatpush1.bf16.msra.mxu0 0
        %1679 = vmatprep.subr.bf16.mxu0 0
        %1680 = vmatpush1.bf16.msra.mxu0 0
        %1681 = vmatprep.subr.bf16.mxu0 0
        %1682 = vmatpush1.bf16.msra.mxu0 0
        %1683 = vmatprep.subr.bf16.mxu0 0
        %1684 = vmatpush1.bf16.msra.mxu0 0
        %1685 = vmatprep.subr.bf16.mxu0 0
        %1686 = vmatpush1.bf16.msra.mxu0 0
        %1687 = vmatprep.subr.bf16.mxu0 0
        %1688 = vmatpush1.bf16.msra.mxu0 0
        %1689 = vmatprep.subr.bf16.mxu0 0
        %1690 = vmatpush1.bf16.msra.mxu0 0
        %1691 = vmatprep.subr.bf16.mxu0 0
        %1692 = vmatpush1.bf16.msra.mxu0 0
        %1693 = vmatprep.subr.bf16.mxu0 0
        %1694 = vmatpush1.bf16.msra.mxu0 0
        %1695 = vmatprep.subr.bf16.mxu0 0
        %1696 = vmatpush1.bf16.msra.mxu0 0
        %1697 = vmatprep.mubr.bf16.mxu0 0
        %1698 = vmatmul.mubr.bf16.gmra.mrb[0].mxu0 %v1659
        %v1699 = vpop.f32.mrb[0].mxu0
        %v1700 = vadd.f32 0.0, %v1699
        %v1701 = vpop.f32.mrb[0].mxu0
        %v1702 = vpop.f32.mrb[0].mxu0
        %v1703 = vpop.f32.mrb[0].mxu0
        %1704 = vdwg.mxu0
        %v1705 = vmul.f32 %v1700, %v1405
        %v1706 = vmul.f32 %v1641, %v1647
        %v1707 = vpack.c.bf16 %v1706, %v1706
        %v1709 = vsel %vm1657, %v1707, 0
        %1711 = vmatprep.subr.bf16.mxu0 0
        %1712 = vmatpush1.bf16.msra.mxu0 %v1663
        %1713 = vmatprep.subr.bf16.mxu0 0
        %1714 = vmatpush1.bf16.msra.mxu0 0
        %1715 = vmatprep.subr.bf16.mxu0 0
        %1716 = vmatpush1.bf16.msra.mxu0 0
        %1717 = vmatprep.subr.bf16.mxu0 0
        %1718 = vmatpush1.bf16.msra.mxu0 0
        %1719 = vmatprep.subr.bf16.mxu0 0
        %1720 = vmatpush1.bf16.msra.mxu0 0
        %1721 = vmatprep.subr.bf16.mxu0 0
        %1722 = vmatpush1.bf16.msra.mxu0 0
        %1723 = vmatprep.subr.bf16.mxu0 0
        %1724 = vmatpush1.bf16.msra.mxu0 0
        %1725 = vmatprep.subr.bf16.mxu0 0
        %1726 = vmatpush1.bf16.msra.mxu0 0
        %1727 = vmatprep.subr.bf16.mxu0 0
        %1728 = vmatpush1.bf16.msra.mxu0 0
        %1729 = vmatprep.subr.bf16.mxu0 0
        %1730 = vmatpush1.bf16.msra.mxu0 0
        %1731 = vmatprep.subr.bf16.mxu0 0
        %1732 = vmatpush1.bf16.msra.mxu0 0
        %1733 = vmatprep.subr.bf16.mxu0 0
        %1734 = vmatpush1.bf16.msra.mxu0 0
        %1735 = vmatprep.subr.bf16.mxu0 0
        %1736 = vmatpush1.bf16.msra.mxu0 0
        %1737 = vmatprep.subr.bf16.mxu0 0
        %1738 = vmatpush1.bf16.msra.mxu0 0
        %1739 = vmatprep.subr.bf16.mxu0 0
        %1740 = vmatpush1.bf16.msra.mxu0 0
        %1741 = vmatprep.subr.bf16.mxu0 0
        %1742 = vmatpush1.bf16.msra.mxu0 0
        %1743 = vmatprep.mubr.bf16.mxu0 0
        %1744 = vmatmul.mubr.bf16.gmra.mrb[0].mxu0 %v1709
        %v1745 = vpop.f32.mrb[0].mxu0
        %v1746 = vadd.f32 0.0, %v1745
        %v1747 = vpop.f32.mrb[0].mxu0
        %v1748 = vpop.f32.mrb[0].mxu0
        %v1749 = vpop.f32.mrb[0].mxu0
        %1750 = vdwg.mxu0
        %v1751 = vmul.f32 %v1746, %v1407
        %v1752 = vadd.f32 %v1705, %v1751
        %v1753 = vmul.f32 %v1644, %v1647
        %v1754 = vpack.c.bf16 %v1753, %v1753
        %v1756 = vsel %vm1657, %v1754, 0
        %1758 = vmatprep.subr.bf16.mxu0 0
        %1759 = vmatpush1.bf16.msra.mxu0 %v1663
        %1760 = vmatprep.subr.bf16.mxu0 0
        %1761 = vmatpush1.bf16.msra.mxu0 0
        %1762 = vmatprep.subr.bf16.mxu0 0
        %1763 = vmatpush1.bf16.msra.mxu0 0
        %1764 = vmatprep.subr.bf16.mxu0 0
        %1765 = vmatpush1.bf16.msra.mxu0 0
        %1766 = vmatprep.subr.bf16.mxu0 0
        %1767 = vmatpush1.bf16.msra.mxu0 0
        %1768 = vmatprep.subr.bf16.mxu0 0
        %1769 = vmatpush1.bf16.msra.mxu0 0
        %1770 = vmatprep.subr.bf16.mxu0 0
        %1771 = vmatpush1.bf16.msra.mxu0 0
        %1772 = vmatprep.subr.bf16.mxu0 0
        %1773 = vmatpush1.bf16.msra.mxu0 0
        %1774 = vmatprep.subr.bf16.mxu0 0
        %1775 = vmatpush1.bf16.msra.mxu0 0
        %1776 = vmatprep.subr.bf16.mxu0 0
        %1777 = vmatpush1.bf16.msra.mxu0 0
        %1778 = vmatprep.subr.bf16.mxu0 0
        %1779 = vmatpush1.bf16.msra.mxu0 0
        %1780 = vmatprep.subr.bf16.mxu0 0
        %1781 = vmatpush1.bf16.msra.mxu0 0
        %1782 = vmatprep.subr.bf16.mxu0 0
        %1783 = vmatpush1.bf16.msra.mxu0 0
        %1784 = vmatprep.subr.bf16.mxu0 0
        %1785 = vmatpush1.bf16.msra.mxu0 0
        %1786 = vmatprep.subr.bf16.mxu0 0
        %1787 = vmatpush1.bf16.msra.mxu0 0
        %1788 = vmatprep.subr.bf16.mxu0 0
        %1789 = vmatpush1.bf16.msra.mxu0 0
        %1790 = vmatprep.mubr.bf16.mxu0 0
        %1791 = vmatmul.mubr.bf16.gmra.mrb[0].mxu0 %v1756
        %v1792 = vpop.f32.mrb[0].mxu0
        %v1793 = vadd.f32 0.0, %v1792
        %v1794 = vpop.f32.mrb[0].mxu0
        %v1795 = vpop.f32.mrb[0].mxu0
        %v1796 = vpop.f32.mrb[0].mxu0
        %1797 = vdwg.mxu0
        %v1798 = vmul.f32 %v1793, %v1446
        %v1799 = vadd.f32 %v1752, %v1798
        %v1800 = vpack.c.bf16 %v1799, %v1799
        %v1801 = vld [vmem:[#allocation6] sm:$0xf]
        %v1802 = vld [vmem:[#allocation6 + $0x4] sm:$0xf]
        %v1803 = vld [vmem:[#allocation6 + $0x8] sm:$0xf]
        %v1804 = vld [vmem:[#allocation6 + $0xc] sm:$0xf]
        %v1805 = vld [vmem:[#allocation6 + $0x10] sm:$0xf]
        %v1806 = vld [vmem:[#allocation6 + $0x14] sm:$0xf]
        %v1807 = vld [vmem:[#allocation6 + $0x18] sm:$0xf]
        %v1808 = vld [vmem:[#allocation6 + $0x1c] sm:$0xf]
        %v1809 = vld [vmem:[#allocation6 + $0x20] sm:$0xf]
        %v1810 = vld [vmem:[#allocation6 + $0x24] sm:$0xf]
        %v1811 = vld [vmem:[#allocation6 + $0x28] sm:$0xf]
        %v1812 = vld [vmem:[#allocation6 + $0x2c] sm:$0xf]
        %v1825 = vunpack.c.l.b16 %v1801
        %v1826 = vunpack.c.l.b16 %v1802
        %v1827 = vunpack.c.l.b16 %v1803
        %v1828 = vunpack.c.l.b16 %v1804
        %v1829 = vunpack.c.l.b16 %v1805
        %v1830 = vunpack.c.l.b16 %v1806
        %v1831 = vunpack.c.l.b16 %v1807
        %v1832 = vunpack.c.l.b16 %v1808
        %v1833 = vunpack.c.l.b16 %v1809
        %v1834 = vunpack.c.l.b16 %v1810
        %v1835 = vunpack.c.l.b16 %v1811
        %v1836 = vunpack.c.l.b16 %v1812
        %v1837 = vpack.c.b16 %v1826, %v1825
        %v1838 = vpack.c.b16 %v1828, %v1827
        %v1839 = vpack.c.b16 %v1830, %v1829
        %v1840 = vpack.c.b16 %v1832, %v1831
        %v1841 = vpack.c.b16 %v1834, %v1833
        %v1842 = vpack.c.b16 %v1836, %v1835
        %v1850 = vsel %vm1284, %v1800, 0
        %1852 = vmatprep.subr.bf16.mxu0 0
        %1853 = vmatpush1.bf16.msra.mxu0 %v1837
        %1854 = vmatprep.subr.bf16.mxu0 0
        %1855 = vmatpush1.bf16.msra.mxu0 %v1838
        %1856 = vmatprep.subr.bf16.mxu0 0
        %1857 = vmatpush1.bf16.msra.mxu0 %v1839
        %1858 = vmatprep.subr.bf16.mxu0 0
        %1859 = vmatpush1.bf16.msra.mxu0 %v1840
        %1860 = vmatprep.subr.bf16.mxu0 0
        %1861 = vmatpush1.bf16.msra.mxu0 %v1841
        %1862 = vmatprep.subr.bf16.mxu0 0
        %1863 = vmatpush1.bf16.msra.mxu0 %v1842
        %1864 = vmatprep.subr.bf16.mxu0 0
        %1865 = vmatpush1.bf16.msra.mxu0 0
        %1866 = vmatprep.subr.bf16.mxu0 0
        %1867 = vmatpush1.bf16.msra.mxu0 0
        %1868 = vmatprep.subr.bf16.mxu0 0
        %1869 = vmatpush1.bf16.msra.mxu0 0
        %1870 = vmatprep.subr.bf16.mxu0 0
        %1871 = vmatpush1.bf16.msra.mxu0 0
        %1872 = vmatprep.subr.bf16.mxu0 0
        %1873 = vmatpush1.bf16.msra.mxu0 0
        %1874 = vmatprep.subr.bf16.mxu0 0
        %1875 = vmatpush1.bf16.msra.mxu0 0
        %1876 = vmatprep.subr.bf16.mxu0 0
        %1877 = vmatpush1.bf16.msra.mxu0 0
        %1878 = vmatprep.subr.bf16.mxu0 0
        %1879 = vmatpush1.bf16.msra.mxu0 0
        %1880 = vmatprep.subr.bf16.mxu0 0
        %1881 = vmatpush1.bf16.msra.mxu0 0
        %1882 = vmatprep.subr.bf16.mxu0 0
        %1883 = vmatpush1.bf16.msra.mxu0 0
        %1884 = vmatprep.mubr.bf16.mxu0 0
        %1885 = vmatmul.mubr.bf16.gmra.mrb[0].mxu0 %v1850
        %v1886 = vpop.f32.mrb[0].mxu0
        %v1887 = vadd.f32 0.0, %v1886
        %v1888 = vpop.f32.mrb[0].mxu0
        %v1889 = vpop.f32.mrb[0].mxu0
        %v1890 = vpop.f32.mrb[0].mxu0
        %1891 = vdwg.mxu0
        %v1892 = vadd.f32 %v978, %v1887
        %v1893 = vld [vmem:[#allocation18 + $0x5] ss:$0 sm:$0xff]
        %v1894 = vadd.f32 %v1892, %v1893
        %v1895 = vpack.c.bf16 %v1894, %v1894
        %v1896 = vld [vmem:[#allocation7] sm:$0xf]
        %v1897 = vld [vmem:[#allocation7 + $0x4] sm:$0xf]
        %v1898 = vld [vmem:[#allocation7 + $0x8] sm:$0xf]
        %v1899 = vld [vmem:[#allocation7 + $0xc] sm:$0xf]
        %v1900 = vld [vmem:[#allocation7 + $0x10] sm:$0xf]
        %v1901 = vld [vmem:[#allocation7 + $0x14] sm:$0xf]
        %v1902 = vld [vmem:[#allocation7 + $0x18] sm:$0xf]
        %v1903 = vld [vmem:[#allocation7 + $0x1c] sm:$0xf]
        %v1904 = vld [vmem:[#allocation7 + $0x20] sm:$0xf]
        %v1905 = vld [vmem:[#allocation7 + $0x24] sm:$0xf]
        %v1906 = vld [vmem:[#allocation7 + $0x28] sm:$0xf]
        %v1907 = vld [vmem:[#allocation7 + $0x2c] sm:$0xf]
        %v1920 = vunpack.c.l.b16 %v1896
        %v1921 = vunpack.c.l.b16 %v1897
        %v1922 = vunpack.c.l.b16 %v1898
        %v1923 = vunpack.c.l.b16 %v1899
        %v1924 = vunpack.c.l.b16 %v1900
        %v1925 = vunpack.c.l.b16 %v1901
        %v1926 = vunpack.c.l.b16 %v1902
        %v1927 = vunpack.c.l.b16 %v1903
        %v1928 = vunpack.c.l.b16 %v1904
        %v1929 = vunpack.c.l.b16 %v1905
        %v1930 = vunpack.c.l.b16 %v1906
        %v1931 = vunpack.c.l.b16 %v1907
        %v1932 = vpack.c.b16 %v1921, %v1920
        %v1933 = vpack.c.b16 %v1923, %v1922
        %v1934 = vpack.c.b16 %v1925, %v1924
        %v1935 = vpack.c.b16 %v1927, %v1926
        %v1936 = vpack.c.b16 %v1929, %v1928
        %v1937 = vpack.c.b16 %v1931, %v1930
        %v1945 = vsel %vm1284, %v1895, 0
        %1947 = vmatprep.subr.bf16.mxu0 0
        %1948 = vmatpush1.bf16.msra.mxu0 %v1932
        %1949 = vmatprep.subr.bf16.mxu0 0
        %1950 = vmatpush1.bf16.msra.mxu0 %v1933
        %1951 = vmatprep.subr.bf16.mxu0 0
        %1952 = vmatpush1.bf16.msra.mxu0 %v1934
        %1953 = vmatprep.subr.bf16.mxu0 0
        %1954 = vmatpush1.bf16.msra.mxu0 %v1935
        %1955 = vmatprep.subr.bf16.mxu0 0
        %1956 = vmatpush1.bf16.msra.mxu0 %v1936
        %1957 = vmatprep.subr.bf16.mxu0 0
        %1958 = vmatpush1.bf16.msra.mxu0 %v1937
        %1959 = vmatprep.subr.bf16.mxu0 0
        %1960 = vmatpush1.bf16.msra.mxu0 0
        %1961 = vmatprep.subr.bf16.mxu0 0
        %1962 = vmatpush1.bf16.msra.mxu0 0
        %1963 = vmatprep.subr.bf16.mxu0 0
        %1964 = vmatpush1.bf16.msra.mxu0 0
        %1965 = vmatprep.subr.bf16.mxu0 0
        %1966 = vmatpush1.bf16.msra.mxu0 0
        %1967 = vmatprep.subr.bf16.mxu0 0
        %1968 = vmatpush1.bf16.msra.mxu0 0
        %1969 = vmatprep.subr.bf16.mxu0 0
        %1970 = vmatpush1.bf16.msra.mxu0 0
        %1971 = vmatprep.subr.bf16.mxu0 0
        %1972 = vmatpush1.bf16.msra.mxu0 0
        %1973 = vmatprep.subr.bf16.mxu0 0
        %1974 = vmatpush1.bf16.msra.mxu0 0
        %1975 = vmatprep.subr.bf16.mxu0 0
        %1976 = vmatpush1.bf16.msra.mxu0 0
        %1977 = vmatprep.subr.bf16.mxu0 0
        %1978 = vmatpush1.bf16.msra.mxu0 0
        %1979 = vmatprep.mubr.bf16.mxu0 0
        %1980 = vmatmul.mubr.bf16.gmra.mrb[0].mxu0 %v1945
        %v1981 = vpop.f32.mrb[0].mxu0
        %v1982 = vadd.f32 0.0, %v1981
        %v1983 = vpop.f32.mrb[0].mxu0
        %v1984 = vpop.f32.mrb[0].mxu0
        %v1985 = vpop.f32.mrb[0].mxu0
        %1986 = vdwg.mxu0
        %v1987 = vsub.f32 %v1894, %v1982
        %v1988 = vmul.f32 %v1987, %v1987
        %v1989 = vpack.c.bf16 %v1988, %v1988
        %v1991 = vsel %vm1284, %v1989, 0
        %1993 = vmatprep.subr.bf16.mxu0 0
        %1994 = vmatpush1.bf16.msra.mxu0 %v1932
        %1995 = vmatprep.subr.bf16.mxu0 0
        %1996 = vmatpush1.bf16.msra.mxu0 %v1933
        %1997 = vmatprep.subr.bf16.mxu0 0
        %1998 = vmatpush1.bf16.msra.mxu0 %v1934
        %1999 = vmatprep.subr.bf16.mxu0 0
        %2000 = vmatpush1.bf16.msra.mxu0 %v1935
        %2001 = vmatprep.subr.bf16.mxu0 0
        %2002 = vmatpush1.bf16.msra.mxu0 %v1936
        %2003 = vmatprep.subr.bf16.mxu0 0
        %2004 = vmatpush1.bf16.msra.mxu0 %v1937
        %2005 = vmatprep.subr.bf16.mxu0 0
        %2006 = vmatpush1.bf16.msra.mxu0 0
        %2007 = vmatprep.subr.bf16.mxu0 0
        %2008 = vmatpush1.bf16.msra.mxu0 0
        %2009 = vmatprep.subr.bf16.mxu0 0
        %2010 = vmatpush1.bf16.msra.mxu0 0
        %2011 = vmatprep.subr.bf16.mxu0 0
        %2012 = vmatpush1.bf16.msra.mxu0 0
        %2013 = vmatprep.subr.bf16.mxu0 0
        %2014 = vmatpush1.bf16.msra.mxu0 0
        %2015 = vmatprep.subr.bf16.mxu0 0
        %2016 = vmatpush1.bf16.msra.mxu0 0
        %2017 = vmatprep.subr.bf16.mxu0 0
        %2018 = vmatpush1.bf16.msra.mxu0 0
        %2019 = vmatprep.subr.bf16.mxu0 0
        %2020 = vmatpush1.bf16.msra.mxu0 0
        %2021 = vmatprep.subr.bf16.mxu0 0
        %2022 = vmatpush1.bf16.msra.mxu0 0
        %2023 = vmatprep.subr.bf16.mxu0 0
        %2024 = vmatpush1.bf16.msra.mxu0 0
        %2025 = vmatprep.mubr.bf16.mxu0 0
        %2026 = vmatmul.mubr.bf16.gmra.mrb[0].mxu0 %v1991
        %v2027 = vpop.f32.mrb[0].mxu0
        %v2028 = vadd.f32 1e-05, %v2027
        %v2029 = vpop.f32.mrb[0].mxu0
        %v2030 = vpop.f32.mrb[0].mxu0
        %v2031 = vpop.f32.mrb[0].mxu0
        %2032 = vdwg.mxu0
        %v2033 = vrsqrt.pop %v2028
        %v2034 = vmul.f32 %v1987, %v2033
        %v2035 = vld [vmem:[#allocation18 + $0x6] ss:$0 sm:$0xff]
        %v2036 = vmul.f32 %v2034, %v2035
        %v2037 = vld [vmem:[#allocation18 + $0x7] ss:$0 sm:$0xff]
        %v2038 = vadd.f32 %v2036, %v2037
        %v2039 = vpack.c.bf16 %v2038, %v2038
        %v2040 = vld [vmem:[#allocation9] sm:$0xff]
        %v2041 = vld [vmem:[#allocation9 + $0x8] sm:$0xff]
        %v2042 = vld [vmem:[#allocation9 + $0x10] sm:$0xff]
        %v2043 = vld [vmem:[#allocation9 + $0x18] sm:$0xff]
        %v2044 = vld [vmem:[#allocation9 + $0x20] sm:$0xff]
        %v2045 = vld [vmem:[#allocation9 + $0x28] sm:$0xff]
        %v2046 = vld [vmem:[#allocation9 + $0x30] sm:$0xff]
        %v2047 = vld [vmem:[#allocation9 + $0x38] sm:$0xff]
        %v2048 = vld [vmem:[#allocation9 + $0x40] sm:$0xff]
        %v2049 = vld [vmem:[#allocation9 + $0x48] sm:$0xff]
        %v2050 = vld [vmem:[#allocation9 + $0x50] sm:$0xff]
        %v2051 = vld [vmem:[#allocation9 + $0x58] sm:$0xff]
        %s2052 = scalar_lea.vmem [#allocation18], 56
        %v2053 = vld [vmem:[%s2052] ss:$8 sm:$0x3]
        %v2055 = vlaneseq
        %v2056 = vshrl.u32 %v2055, 7
        %v2057 = vsub.s32 0, %v2056
        %v2058 = vrot.slane %v2053, %v2057
        %v2059 = vlaneseq
        %v2060 = vshrl.u32 %v2059, 7
        %v2061 = vsub.s32 1, %v2060
        %v2062 = vrot.slane %v2053, %v2061
        %v2077 = vunpack.c.l.b16 %v2040
        %v2078 = vunpack.c.h.b16 %v2040
        %v2079 = vunpack.c.l.b16 %v2041
        %v2080 = vunpack.c.h.b16 %v2041
        %v2081 = vunpack.c.l.b16 %v2042
        %v2082 = vunpack.c.h.b16 %v2042
        %v2083 = vunpack.c.l.b16 %v2043
        %v2084 = vunpack.c.h.b16 %v2043
        %v2085 = vunpack.c.l.b16 %v2044
        %v2086 = vunpack.c.h.b16 %v2044
        %v2087 = vunpack.c.l.b16 %v2045
        %v2088 = vunpack.c.h.b16 %v2045
        %v2089 = vunpack.c.l.b16 %v2046
        %v2090 = vunpack.c.h.b16 %v2046
        %v2091 = vunpack.c.l.b16 %v2047
        %v2092 = vunpack.c.h.b16 %v2047
        %v2093 = vunpack.c.l.b16 %v2048
        %v2094 = vunpack.c.h.b16 %v2048
        %v2095 = vunpack.c.l.b16 %v2049
        %v2096 = vunpack.c.h.b16 %v2049
        %v2097 = vunpack.c.l.b16 %v2050
        %v2098 = vunpack.c.h.b16 %v2050
        %v2099 = vunpack.c.l.b16 %v2051
        %v2100 = vunpack.c.h.b16 %v2051
        %v2101 = vpack.c.b16 %v2079, %v2077
        %v2102 = vpack.c.b16 %v2080, %v2078
        %v2103 = vpack.c.b16 %v2083, %v2081
        %v2104 = vpack.c.b16 %v2084, %v2082
        %v2105 = vpack.c.b16 %v2087, %v2085
        %v2106 = vpack.c.b16 %v2088, %v2086
        %v2107 = vpack.c.b16 %v2091, %v2089
        %v2108 = vpack.c.b16 %v2092, %v2090
        %v2109 = vpack.c.b16 %v2095, %v2093
        %v2110 = vpack.c.b16 %v2096, %v2094
        %v2111 = vpack.c.b16 %v2099, %v2097
        %v2112 = vpack.c.b16 %v2100, %v2098
        %v2126 = vsel %vm1284, %v2039, 0
        %2128 = vmatprep.subr.bf16.mxu0 %v2102
        %2129 = vmatpush1.bf16.msra.mxu0 %v2101
        %2130 = vmatprep.subr.bf16.mxu0 %v2104
        %2131 = vmatpush1.bf16.msra.mxu0 %v2103
        %2132 = vmatprep.subr.bf16.mxu0 %v2106
        %2133 = vmatpush1.bf16.msra.mxu0 %v2105
        %2134 = vmatprep.subr.bf16.mxu0 %v2108
        %2135 = vmatpush1.bf16.msra.mxu0 %v2107
        %2136 = vmatprep.subr.bf16.mxu0 %v2110
        %2137 = vmatpush1.bf16.msra.mxu0 %v2109
        %2138 = vmatprep.subr.bf16.mxu0 %v2112
        %2139 = vmatpush1.bf16.msra.mxu0 %v2111
        %2140 = vmatprep.subr.bf16.mxu0 0
        %2141 = vmatpush1.bf16.msra.mxu0 0
        %2142 = vmatprep.subr.bf16.mxu0 0
        %2143 = vmatpush1.bf16.msra.mxu0 0
        %2144 = vmatprep.subr.bf16.mxu0 0
        %2145 = vmatpush1.bf16.msra.mxu0 0
        %2146 = vmatprep.subr.bf16.mxu0 0
        %2147 = vmatpush1.bf16.msra.mxu0 0
        %2148 = vmatprep.subr.bf16.mxu0 0
        %2149 = vmatpush1.bf16.msra.mxu0 0
        %2150 = vmatprep.subr.bf16.mxu0 0
        %2151 = vmatpush1.bf16.msra.mxu0 0
        %2152 = vmatprep.subr.bf16.mxu0 0
        %2153 = vmatpush1.bf16.msra.mxu0 0
        %2154 = vmatprep.subr.bf16.mxu0 0
        %2155 = vmatpush1.bf16.msra.mxu0 0
        %2156 = vmatprep.subr.bf16.mxu0 0
        %2157 = vmatpush1.bf16.msra.mxu0 0
        %2158 = vmatprep.subr.bf16.mxu0 0
        %2159 = vmatpush1.bf16.msra.mxu0 0
        %2160 = vmatprep.mubr.bf16.mxu0 0
        %2161 = vmatmul.mubr.bf16.gmra.mrb[0].mxu0 %v2126
        %v2162 = vpop.f32.mrb[0].mxu0
        %v2163 = vadd.f32 %v2058, %v2162
        %v2164 = vpop.f32.mrb[0].mxu0
        %v2165 = vadd.f32 %v2062, %v2164
        %v2166 = vpop.f32.mrb[0].mxu0
        %v2167 = vpop.f32.mrb[0].mxu0
        %2168 = vdwg.mxu0
        %v2169 = vmax.f32 %v2163, 0.0
        %v2170 = vmax.f32 %v2165, 0.0
        %v2171 = vpack.c.bf16 %v2169, %v2169
        %v2172 = vpack.c.bf16 %v2170, %v2170
        %v2173 = vld [vmem:[#allocation10] sm:$0xf]
        %v2174 = vld [vmem:[#allocation10 + $0x4] sm:$0xf]
        %v2175 = vld [vmem:[#allocation10 + $0x8] sm:$0xf]
        %v2176 = vld [vmem:[#allocation10 + $0xc] sm:$0xf]
        %v2177 = vld [vmem:[#allocation10 + $0x10] sm:$0xf]
        %v2178 = vld [vmem:[#allocation10 + $0x14] sm:$0xf]
        %v2179 = vld [vmem:[#allocation10 + $0x18] sm:$0xf]
        %v2180 = vld [vmem:[#allocation10 + $0x1c] sm:$0xf]
        %v2181 = vld [vmem:[#allocation10 + $0x20] sm:$0xf]
        %v2182 = vld [vmem:[#allocation10 + $0x24] sm:$0xf]
        %v2183 = vld [vmem:[#allocation10 + $0x28] sm:$0xf]
        %v2184 = vld [vmem:[#allocation10 + $0x2c] sm:$0xf]
        %v2185 = vld [vmem:[#allocation10 + $0x30] sm:$0xf]
        %v2186 = vld [vmem:[#allocation10 + $0x34] sm:$0xf]
        %v2187 = vld [vmem:[#allocation10 + $0x38] sm:$0xf]
        %v2188 = vld [vmem:[#allocation10 + $0x3c] sm:$0xf]
        %v2189 = vld [vmem:[#allocation10 + $0x40] sm:$0xf]
        %v2190 = vld [vmem:[#allocation10 + $0x44] sm:$0xf]
        %v2191 = vld [vmem:[#allocation10 + $0x48] sm:$0xf]
        %v2192 = vld [vmem:[#allocation10 + $0x4c] sm:$0xf]
        %v2193 = vld [vmem:[#allocation10 + $0x50] sm:$0xf]
        %v2194 = vld [vmem:[#allocation10 + $0x54] sm:$0xf]
        %v2195 = vld [vmem:[#allocation10 + $0x58] sm:$0xf]
        %v2196 = vld [vmem:[#allocation10 + $0x5c] sm:$0xf]
        %v2221 = vunpack.c.l.b16 %v2173
        %v2222 = vunpack.c.l.b16 %v2174
        %v2223 = vunpack.c.l.b16 %v2175
        %v2224 = vunpack.c.l.b16 %v2176
        %v2225 = vunpack.c.l.b16 %v2177
        %v2226 = vunpack.c.l.b16 %v2178
        %v2227 = vunpack.c.l.b16 %v2179
        %v2228 = vunpack.c.l.b16 %v2180
        %v2229 = vunpack.c.l.b16 %v2181
        %v2230 = vunpack.c.l.b16 %v2182
        %v2231 = vunpack.c.l.b16 %v2183
        %v2232 = vunpack.c.l.b16 %v2184
        %v2233 = vunpack.c.l.b16 %v2185
        %v2234 = vunpack.c.l.b16 %v2186
        %v2235 = vunpack.c.l.b16 %v2187
        %v2236 = vunpack.c.l.b16 %v2188
        %v2237 = vunpack.c.l.b16 %v2189
        %v2238 = vunpack.c.l.b16 %v2190
        %v2239 = vunpack.c.l.b16 %v2191
        %v2240 = vunpack.c.l.b16 %v2192
        %v2241 = vunpack.c.l.b16 %v2193
        %v2242 = vunpack.c.l.b16 %v2194
        %v2243 = vunpack.c.l.b16 %v2195
        %v2244 = vunpack.c.l.b16 %v2196
        %v2245 = vpack.c.b16 %v2222, %v2221
        %v2246 = vpack.c.b16 %v2224, %v2223
        %v2247 = vpack.c.b16 %v2226, %v2225
        %v2248 = vpack.c.b16 %v2228, %v2227
        %v2249 = vpack.c.b16 %v2230, %v2229
        %v2250 = vpack.c.b16 %v2232, %v2231
        %v2251 = vpack.c.b16 %v2234, %v2233
        %v2252 = vpack.c.b16 %v2236, %v2235
        %v2253 = vpack.c.b16 %v2238, %v2237
        %v2254 = vpack.c.b16 %v2240, %v2239
        %v2255 = vpack.c.b16 %v2242, %v2241
        %v2256 = vpack.c.b16 %v2244, %v2243
        %v2270 = vsel %vm930, %v2172, 0
        %2272 = vmatprep.subr.bf16.mxu0 0
        %2273 = vmatpush1.bf16.msra.mxu0 %v2245
        %2274 = vmatprep.subr.bf16.mxu0 0
        %2275 = vmatpush1.bf16.msra.mxu0 %v2246
        %2276 = vmatprep.subr.bf16.mxu0 0
        %2277 = vmatpush1.bf16.msra.mxu0 %v2247
        %2278 = vmatprep.subr.bf16.mxu0 0
        %2279 = vmatpush1.bf16.msra.mxu0 %v2248
        %2280 = vmatprep.subr.bf16.mxu0 0
        %2281 = vmatpush1.bf16.msra.mxu0 %v2249
        %2282 = vmatprep.subr.bf16.mxu0 0
        %2283 = vmatpush1.bf16.msra.mxu0 %v2250
        %2284 = vmatprep.subr.bf16.mxu0 0
        %2285 = vmatpush1.bf16.msra.mxu0 %v2251
        %2286 = vmatprep.subr.bf16.mxu0 0
        %2287 = vmatpush1.bf16.msra.mxu0 %v2252
        %2288 = vmatprep.subr.bf16.mxu0 0
        %2289 = vmatpush1.bf16.msra.mxu0 %v2253
        %2290 = vmatprep.subr.bf16.mxu0 0
        %2291 = vmatpush1.bf16.msra.mxu0 %v2254
        %2292 = vmatprep.subr.bf16.mxu0 0
        %2293 = vmatpush1.bf16.msra.mxu0 %v2255
        %2294 = vmatprep.subr.bf16.mxu0 0
        %2295 = vmatpush1.bf16.msra.mxu0 %v2256
        %2296 = vmatprep.subr.bf16.mxu0 0
        %2297 = vmatpush1.bf16.msra.mxu0 0
        %2298 = vmatprep.subr.bf16.mxu0 0
        %2299 = vmatpush1.bf16.msra.mxu0 0
        %2300 = vmatprep.subr.bf16.mxu0 0
        %2301 = vmatpush1.bf16.msra.mxu0 0
        %2302 = vmatprep.subr.bf16.mxu0 0
        %2303 = vmatpush1.bf16.msra.mxu0 0
        %2304 = vmatprep.mubr.bf16.mxu0 %v2270
        %2305 = vmatmul.mubr.bf16.gmra.mrb[0].mxu0 %v2171
        %v2306 = vpop.f32.mrb[0].mxu0
        %v2307 = vadd.f32 0.0, %v2306
        %v2308 = vpop.f32.mrb[0].mxu0
        %v2309 = vpop.f32.mrb[0].mxu0
        %v2310 = vpop.f32.mrb[0].mxu0
        %2311 = vdwg.mxu0
        %v2312 = vadd.f32 %v2038, %v2307
        %v2313 = vld [vmem:[#allocation18 + $0x39] ss:$0 sm:$0xff]
        %v2314 = vadd.f32 %v2312, %v2313
        %v2315 = vpack.c.bf16 %v2314, %v2314
        %v2317 = vsel %vm1284, %v2315, 0
        %2319 = vmatprep.subr.bf16.mxu0 0
        %2320 = vmatpush1.bf16.msra.mxu0 %v1932
        %2321 = vmatprep.subr.bf16.mxu0 0
        %2322 = vmatpush1.bf16.msra.mxu0 %v1933
        %2323 = vmatprep.subr.bf16.mxu0 0
        %2324 = vmatpush1.bf16.msra.mxu0 %v1934
        %2325 = vmatprep.subr.bf16.mxu0 0
        %2326 = vmatpush1.bf16.msra.mxu0 %v1935
        %2327 = vmatprep.subr.bf16.mxu0 0
        %2328 = vmatpush1.bf16.msra.mxu0 %v1936
        %2329 = vmatprep.subr.bf16.mxu0 0
        %2330 = vmatpush1.bf16.msra.mxu0 %v1937
        %2331 = vmatprep.subr.bf16.mxu0 0
        %2332 = vmatpush1.bf16.msra.mxu0 0
        %2333 = vmatprep.subr.bf16.mxu0 0
        %2334 = vmatpush1.bf16.msra.mxu0 0
        %2335 = vmatprep.subr.bf16.mxu0 0
        %2336 = vmatpush1.bf16.msra.mxu0 0
        %2337 = vmatprep.subr.bf16.mxu0 0
        %2338 = vmatpush1.bf16.msra.mxu0 0
        %2339 = vmatprep.subr.bf16.mxu0 0
        %2340 = vmatpush1.bf16.msra.mxu0 0
        %2341 = vmatprep.subr.bf16.mxu0 0
        %2342 = vmatpush1.bf16.msra.mxu0 0
        %2343 = vmatprep.subr.bf16.mxu0 0
        %2344 = vmatpush1.bf16.msra.mxu0 0
        %2345 = vmatprep.subr.bf16.mxu0 0
        %2346 = vmatpush1.bf16.msra.mxu0 0
        %2347 = vmatprep.subr.bf16.mxu0 0
        %2348 = vmatpush1.bf16.msra.mxu0 0
        %2349 = vmatprep.subr.bf16.mxu0 0
        %2350 = vmatpush1.bf16.msra.mxu0 0
        %2351 = vmatprep.mubr.bf16.mxu0 0
        %2352 = vmatmul.mubr.bf16.gmra.mrb[0].mxu0 %v2317
        %v2353 = vpop.f32.mrb[0].mxu0
        %v2354 = vadd.f32 0.0, %v2353
        %v2355 = vpop.f32.mrb[0].mxu0
        %v2356 = vpop.f32.mrb[0].mxu0
        %v2357 = vpop.f32.mrb[0].mxu0
        %2358 = vdwg.mxu0
        %v2359 = vsub.f32 %v2314, %v2354
        %v2360 = vmul.f32 %v2359, %v2359
        %v2361 = vpack.c.bf16 %v2360, %v2360
        %v2363 = vsel %vm1284, %v2361, 0
        %2365 = vmatprep.subr.bf16.mxu0 0
        %2366 = vmatpush1.bf16.msra.mxu0 %v1932
        %2367 = vmatprep.subr.bf16.mxu0 0
        %2368 = vmatpush1.bf16.msra.mxu0 %v1933
        %2369 = vmatprep.subr.bf16.mxu0 0
        %2370 = vmatpush1.bf16.msra.mxu0 %v1934
        %2371 = vmatprep.subr.bf16.mxu0 0
        %2372 = vmatpush1.bf16.msra.mxu0 %v1935
        %2373 = vmatprep.subr.bf16.mxu0 0
        %2374 = vmatpush1.bf16.msra.mxu0 %v1936
        %2375 = vmatprep.subr.bf16.mxu0 0
        %2376 = vmatpush1.bf16.msra.mxu0 %v1937
        %2377 = vmatprep.subr.bf16.mxu0 0
        %2378 = vmatpush1.bf16.msra.mxu0 0
        %2379 = vmatprep.subr.bf16.mxu0 0
        %2380 = vmatpush1.bf16.msra.mxu0 0
        %2381 = vmatprep.subr.bf16.mxu0 0
        %2382 = vmatpush1.bf16.msra.mxu0 0
        %2383 = vmatprep.subr.bf16.mxu0 0
        %2384 = vmatpush1.bf16.msra.mxu0 0
        %2385 = vmatprep.subr.bf16.mxu0 0
        %2386 = vmatpush1.bf16.msra.mxu0 0
        %2387 = vmatprep.subr.bf16.mxu0 0
        %2388 = vmatpush1.bf16.msra.mxu0 0
        %2389 = vmatprep.subr.bf16.mxu0 0
        %2390 = vmatpush1.bf16.msra.mxu0 0
        %2391 = vmatprep.subr.bf16.mxu0 0
        %2392 = vmatpush1.bf16.msra.mxu0 0
        %2393 = vmatprep.subr.bf16.mxu0 0
        %2394 = vmatpush1.bf16.msra.mxu0 0
        %2395 = vmatprep.subr.bf16.mxu0 0
        %2396 = vmatpush1.bf16.msra.mxu0 0
        %2397 = vmatprep.mubr.bf16.mxu0 0
        %2398 = vmatmul.mubr.bf16.gmra.mrb[0].mxu0 %v2363
        %v2399 = vpop.f32.mrb[0].mxu0
        %v2400 = vadd.f32 1e-05, %v2399
        %v2401 = vpop.f32.mrb[0].mxu0
        %v2402 = vpop.f32.mrb[0].mxu0
        %v2403 = vpop.f32.mrb[0].mxu0
        %2404 = vdwg.mxu0
        %v2405 = vrsqrt.pop %v2400
        %v2406 = vmul.f32 %v2359, %v2405
        %v2407 = vld [vmem:[#allocation18 + $0x3a] ss:$0 sm:$0xff]
        %v2408 = vmul.f32 %v2406, %v2407
        %v2409 = vld [vmem:[#allocation18 + $0x3b] ss:$0 sm:$0xff]
        %v2410 = vadd.f32 %v2408, %v2409
        %v2411 = vpack.c.bf16 %v2410, %v2410
        %v2412 = vld [vmem:[#allocation12] sm:$0xff]
        %v2413 = vld [vmem:[#allocation12 + $0x8] sm:$0xff]
        %v2414 = vld [vmem:[#allocation12 + $0x10] sm:$0xff]
        %v2415 = vld [vmem:[#allocation12 + $0x18] sm:$0xff]
        %v2416 = vld [vmem:[#allocation12 + $0x20] sm:$0xff]
        %v2417 = vld [vmem:[#allocation12 + $0x28] sm:$0xff]
        %v2418 = vld [vmem:[#allocation12 + $0x30] sm:$0xff]
        %v2419 = vld [vmem:[#allocation12 + $0x38] sm:$0xff]
        %v2420 = vld [vmem:[#allocation12 + $0x40] sm:$0xff]
        %v2421 = vld [vmem:[#allocation12 + $0x48] sm:$0xff]
        %v2422 = vld [vmem:[#allocation12 + $0x50] sm:$0xff]
        %v2423 = vld [vmem:[#allocation12 + $0x58] sm:$0xff]
        %v2424 = vld [vmem:[#allocation13] sm:$0xff]
        %v2425 = vld [vmem:[#allocation13 + $0x8] sm:$0xff]
        %v2426 = vld [vmem:[#allocation13 + $0x10] sm:$0xff]
        %v2427 = vld [vmem:[#allocation13 + $0x18] sm:$0xff]
        %v2428 = vld [vmem:[#allocation13 + $0x20] sm:$0xff]
        %v2429 = vld [vmem:[#allocation13 + $0x28] sm:$0xff]
        %v2430 = vld [vmem:[#allocation13 + $0x30] sm:$0xff]
        %v2431 = vld [vmem:[#allocation13 + $0x38] sm:$0xff]
        %v2432 = vld [vmem:[#allocation13 + $0x40] sm:$0xff]
        %v2433 = vld [vmem:[#allocation13 + $0x48] sm:$0xff]
        %v2434 = vld [vmem:[#allocation13 + $0x50] sm:$0xff]
        %v2435 = vld [vmem:[#allocation13 + $0x58] sm:$0xff]
        %v2436 = vld [vmem:[#allocation13 + $0x60] sm:$0xff]
        %v2437 = vld [vmem:[#allocation13 + $0x68] sm:$0xff]
        %v2438 = vld [vmem:[#allocation13 + $0x70] sm:$0xff]
        %v2439 = vld [vmem:[#allocation13 + $0x78] sm:$0xff]
        %v2456 = vunpack.c.l.b16 %v2424
        %v2457 = vunpack.c.h.b16 %v2424
        %v2458 = vunpack.c.l.b16 %v2425
        %v2459 = vunpack.c.h.b16 %v2425
        %v2460 = vunpack.c.l.b16 %v2426
        %v2461 = vunpack.c.h.b16 %v2426
        %v2462 = vunpack.c.l.b16 %v2427
        %v2463 = vunpack.c.h.b16 %v2427
        %v2464 = vunpack.c.l.b16 %v2428
        %v2465 = vunpack.c.h.b16 %v2428
        %v2466 = vunpack.c.l.b16 %v2429
        %v2467 = vunpack.c.h.b16 %v2429
        %v2468 = vunpack.c.l.b16 %v2430
        %v2469 = vunpack.c.h.b16 %v2430
        %v2470 = vunpack.c.l.b16 %v2431
        %v2471 = vunpack.c.h.b16 %v2431
        %v2472 = vunpack.c.l.b16 %v2432
        %v2473 = vunpack.c.h.b16 %v2432
        %v2474 = vunpack.c.l.b16 %v2433
        %v2475 = vunpack.c.h.b16 %v2433
        %v2476 = vunpack.c.l.b16 %v2434
        %v2477 = vunpack.c.h.b16 %v2434
        %v2478 = vunpack.c.l.b16 %v2435
        %v2479 = vunpack.c.h.b16 %v2435
        %v2480 = vunpack.c.l.b16 %v2436
        %v2481 = vunpack.c.h.b16 %v2436
        %v2482 = vunpack.c.l.b16 %v2437
        %v2483 = vunpack.c.h.b16 %v2437
        %v2484 = vunpack.c.l.b16 %v2438
        %v2485 = vunpack.c.h.b16 %v2438
        %v2486 = vunpack.c.l.b16 %v2439
        %v2487 = vunpack.c.h.b16 %v2439
        %v2488 = vpack.c.b16 %v2458, %v2456
        %v2489 = vpack.c.b16 %v2459, %v2457
        %v2490 = vpack.c.b16 %v2462, %v2460
        %v2491 = vpack.c.b16 %v2463, %v2461
        %v2492 = vpack.c.b16 %v2466, %v2464
        %v2493 = vpack.c.b16 %v2467, %v2465
        %v2494 = vpack.c.b16 %v2470, %v2468
        %v2495 = vpack.c.b16 %v2471, %v2469
        %v2496 = vpack.c.b16 %v2474, %v2472
        %v2497 = vpack.c.b16 %v2475, %v2473
        %v2498 = vpack.c.b16 %v2478, %v2476
        %v2499 = vpack.c.b16 %v2479, %v2477
        %v2500 = vpack.c.b16 %v2482, %v2480
        %v2501 = vpack.c.b16 %v2483, %v2481
        %v2502 = vpack.c.b16 %v2486, %v2484
        %v2503 = vpack.c.b16 %v2487, %v2485
        %2520 = vmatprep.subr.bf16.mxu0 %v2489
        %2521 = vmatpush1.bf16.msra.mxu0 %v2488
        %2522 = vmatprep.subr.bf16.mxu0 %v2491
        %2523 = vmatpush1.bf16.msra.mxu0 %v2490
        %2524 = vmatprep.subr.bf16.mxu0 %v2493
        %2525 = vmatpush1.bf16.msra.mxu0 %v2492
        %2526 = vmatprep.subr.bf16.mxu0 %v2495
        %2527 = vmatpush1.bf16.msra.mxu0 %v2494
        %2528 = vmatprep.subr.bf16.mxu0 %v2497
        %2529 = vmatpush1.bf16.msra.mxu0 %v2496
        %2530 = vmatprep.subr.bf16.mxu0 %v2499
        %2531 = vmatpush1.bf16.msra.mxu0 %v2498
        %2532 = vmatprep.subr.bf16.mxu0 %v2501
        %2533 = vmatpush1.bf16.msra.mxu0 %v2500
        %2534 = vmatprep.subr.bf16.mxu0 %v2503
        %2535 = vmatpush1.bf16.msra.mxu0 %v2502
        %2536 = vmatprep.subr.bf16.mxu0 0
        %2537 = vmatpush1.bf16.msra.mxu0 0
        %2538 = vmatprep.subr.bf16.mxu0 0
        %2539 = vmatpush1.bf16.msra.mxu0 0
        %2540 = vmatprep.subr.bf16.mxu0 0
        %2541 = vmatpush1.bf16.msra.mxu0 0
        %2542 = vmatprep.subr.bf16.mxu0 0
        %2543 = vmatpush1.bf16.msra.mxu0 0
        %2544 = vmatprep.subr.bf16.mxu0 0
        %2545 = vmatpush1.bf16.msra.mxu0 0
        %2546 = vmatprep.subr.bf16.mxu0 0
        %2547 = vmatpush1.bf16.msra.mxu0 0
        %2548 = vmatprep.subr.bf16.mxu0 0
        %2549 = vmatpush1.bf16.msra.mxu0 0
        %2550 = vmatprep.subr.bf16.mxu0 0
        %2551 = vmatpush1.bf16.msra.mxu0 0
        %2552 = vmatprep.mubr.bf16.mxu0 0
        %2553 = vmatmul.mubr.bf16.gmra.mrb[0].mxu0 %v679
        %v2554 = vpop.f32.mrb[0].mxu0
        %v2555 = vadd.f32 0.0, %v2554
        %v2556 = vpop.f32.mrb[0].mxu0
        %v2557 = vadd.f32 0.0, %v2556
        %v2558 = vpop.f32.mrb[0].mxu0
        %v2559 = vpop.f32.mrb[0].mxu0
        %2560 = vdwg.mxu0
        %v2573 = vunpack.c.l.b16 %v2412
        %v2574 = vunpack.c.h.b16 %v2412
        %v2575 = vunpack.c.l.b16 %v2413
        %v2576 = vunpack.c.h.b16 %v2413
        %v2577 = vunpack.c.l.b16 %v2414
        %v2578 = vunpack.c.h.b16 %v2414
        %v2579 = vunpack.c.l.b16 %v2415
        %v2580 = vunpack.c.h.b16 %v2415
        %v2581 = vunpack.c.l.b16 %v2416
        %v2582 = vunpack.c.h.b16 %v2416
        %v2583 = vunpack.c.l.b16 %v2417
        %v2584 = vunpack.c.h.b16 %v2417
        %v2585 = vunpack.c.l.b16 %v2418
        %v2586 = vunpack.c.h.b16 %v2418
        %v2587 = vunpack.c.l.b16 %v2419
        %v2588 = vunpack.c.h.b16 %v2419
        %v2589 = vunpack.c.l.b16 %v2420
        %v2590 = vunpack.c.h.b16 %v2420
        %v2591 = vunpack.c.l.b16 %v2421
        %v2592 = vunpack.c.h.b16 %v2421
        %v2593 = vunpack.c.l.b16 %v2422
        %v2594 = vunpack.c.h.b16 %v2422
        %v2595 = vunpack.c.l.b16 %v2423
        %v2596 = vunpack.c.h.b16 %v2423
        %v2597 = vpack.c.b16 %v2575, %v2573
        %v2598 = vpack.c.b16 %v2576, %v2574
        %v2599 = vpack.c.b16 %v2579, %v2577
        %v2600 = vpack.c.b16 %v2580, %v2578
        %v2601 = vpack.c.b16 %v2583, %v2581
        %v2602 = vpack.c.b16 %v2584, %v2582
        %v2603 = vpack.c.b16 %v2587, %v2585
        %v2604 = vpack.c.b16 %v2588, %v2586
        %v2605 = vpack.c.b16 %v2591, %v2589
        %v2606 = vpack.c.b16 %v2592, %v2590
        %v2607 = vpack.c.b16 %v2595, %v2593
        %v2608 = vpack.c.b16 %v2596, %v2594
        %v2622 = vsel %vm1284, %v2411, 0
        %2624 = vmatprep.subr.bf16.mxu0 %v2598
        %2625 = vmatpush1.bf16.msra.mxu0 %v2597
        %2626 = vmatprep.subr.bf16.mxu0 %v2600
        %2627 = vmatpush1.bf16.msra.mxu0 %v2599
        %2628 = vmatprep.subr.bf16.mxu0 %v2602
        %2629 = vmatpush1.bf16.msra.mxu0 %v2601
        %2630 = vmatprep.subr.bf16.mxu0 %v2604
        %2631 = vmatpush1.bf16.msra.mxu0 %v2603
        %2632 = vmatprep.subr.bf16.mxu0 %v2606
        %2633 = vmatpush1.bf16.msra.mxu0 %v2605
        %2634 = vmatprep.subr.bf16.mxu0 %v2608
        %2635 = vmatpush1.bf16.msra.mxu0 %v2607
        %2636 = vmatprep.subr.bf16.mxu0 0
        %2637 = vmatpush1.bf16.msra.mxu0 0
        %2638 = vmatprep.subr.bf16.mxu0 0
        %2639 = vmatpush1.bf16.msra.mxu0 0
        %2640 = vmatprep.subr.bf16.mxu0 0
        %2641 = vmatpush1.bf16.msra.mxu0 0
        %2642 = vmatprep.subr.bf16.mxu0 0
        %2643 = vmatpush1.bf16.msra.mxu0 0
        %2644 = vmatprep.subr.bf16.mxu0 0
        %2645 = vmatpush1.bf16.msra.mxu0 0
        %2646 = vmatprep.subr.bf16.mxu0 0
        %2647 = vmatpush1.bf16.msra.mxu0 0
        %2648 = vmatprep.subr.bf16.mxu0 0
        %2649 = vmatpush1.bf16.msra.mxu0 0
        %2650 = vmatprep.subr.bf16.mxu0 0
        %2651 = vmatpush1.bf16.msra.mxu0 0
        %2652 = vmatprep.subr.bf16.mxu0 0
        %2653 = vmatpush1.bf16.msra.mxu0 0
        %2654 = vmatprep.subr.bf16.mxu0 0
        %2655 = vmatpush1.bf16.msra.mxu0 0
        %2656 = vmatprep.mubr.bf16.mxu0 0
        %2657 = vmatmul.mubr.bf16.gmra.mrb[0].mxu0 %v2622
        %v2658 = vpop.f32.mrb[0].mxu0
        %v2659 = vadd.f32 %v2555, %v2658
        %v2660 = vpop.f32.mrb[0].mxu0
        %v2661 = vadd.f32 %v2557, %v2660
        %v2662 = vpop.f32.mrb[0].mxu0
        %v2663 = vpop.f32.mrb[0].mxu0
        %2664 = vdwg.mxu0
        %s2665 = scalar_lea.vmem [#allocation18], 60
        %v2666 = vld [vmem:[%s2665] ss:$8 sm:$0x3]
        %v2668 = vlaneseq
        %v2669 = vshrl.u32 %v2668, 7
        %v2670 = vsub.s32 0, %v2669
        %v2671 = vrot.slane %v2666, %v2670
        %v2672 = vlaneseq
        %v2673 = vshrl.u32 %v2672, 7
        %v2674 = vsub.s32 1, %v2673
        %v2675 = vrot.slane %v2666, %v2674
        %v2678 = vadd.f32 %v2659, %v2671
        %v2679 = vadd.f32 %v2661, %v2675
        %v2680 = vmax.f32 %v2678, 0.0
        %v2681 = vmax.f32 %v2679, 0.0
        %v2682 = vpack.c.bf16 %v2680, %v2680
        %v2683 = vpack.c.bf16 %v2681, %v2681
        %v2684 = vld [vmem:[#allocation15] sm:$0xf]
        %v2685 = vld [vmem:[#allocation15 + $0x4] sm:$0xf]
        %v2686 = vld [vmem:[#allocation15 + $0x8] sm:$0xf]
        %v2687 = vld [vmem:[#allocation15 + $0xc] sm:$0xf]
        %v2688 = vld [vmem:[#allocation15 + $0x10] sm:$0xf]
        %v2689 = vld [vmem:[#allocation15 + $0x14] sm:$0xf]
        %v2690 = vld [vmem:[#allocation15 + $0x18] sm:$0xf]
        %v2691 = vld [vmem:[#allocation15 + $0x1c] sm:$0xf]
        %v2692 = vld [vmem:[#allocation15 + $0x20] sm:$0xf]
        %v2693 = vld [vmem:[#allocation15 + $0x24] sm:$0xf]
        %v2694 = vld [vmem:[#allocation15 + $0x28] sm:$0xf]
        %v2695 = vld [vmem:[#allocation15 + $0x2c] sm:$0xf]
        %v2696 = vld [vmem:[#allocation15 + $0x30] sm:$0xf]
        %v2697 = vld [vmem:[#allocation15 + $0x34] sm:$0xf]
        %v2698 = vld [vmem:[#allocation15 + $0x38] sm:$0xf]
        %v2699 = vld [vmem:[#allocation15 + $0x3c] sm:$0xf]
        %v2700 = vld [vmem:[#allocation15 + $0x40] sm:$0xf]
        %v2701 = vld [vmem:[#allocation15 + $0x44] sm:$0xf]
        %v2702 = vld [vmem:[#allocation15 + $0x48] sm:$0xf]
        %v2703 = vld [vmem:[#allocation15 + $0x4c] sm:$0xf]
        %v2704 = vld [vmem:[#allocation15 + $0x50] sm:$0xf]
        %v2705 = vld [vmem:[#allocation15 + $0x54] sm:$0xf]
        %v2706 = vld [vmem:[#allocation15 + $0x58] sm:$0xf]
        %v2707 = vld [vmem:[#allocation15 + $0x5c] sm:$0xf]
        %v2708 = vld [vmem:[#allocation15 + $0x60] sm:$0xf]
        %v2709 = vld [vmem:[#allocation15 + $0x64] sm:$0xf]
        %v2710 = vld [vmem:[#allocation15 + $0x68] sm:$0xf]
        %v2711 = vld [vmem:[#allocation15 + $0x6c] sm:$0xf]
        %v2712 = vld [vmem:[#allocation15 + $0x70] sm:$0xf]
        %v2713 = vld [vmem:[#allocation15 + $0x74] sm:$0xf]
        %v2714 = vld [vmem:[#allocation15 + $0x78] sm:$0xf]
        %v2715 = vld [vmem:[#allocation15 + $0x7c] sm:$0xf]
        %v2716 = vld [vmem:[#allocation18 + $0x3d] ss:$0 sm:$0xff]
        %v2749 = vunpack.c.l.b16 %v2684
        %v2750 = vunpack.c.l.b16 %v2685
        %v2751 = vunpack.c.l.b16 %v2686
        %v2752 = vunpack.c.l.b16 %v2687
        %v2753 = vunpack.c.l.b16 %v2688
        %v2754 = vunpack.c.l.b16 %v2689
        %v2755 = vunpack.c.l.b16 %v2690
        %v2756 = vunpack.c.l.b16 %v2691
        %v2757 = vunpack.c.l.b16 %v2692
        %v2758 = vunpack.c.l.b16 %v2693
        %v2759 = vunpack.c.l.b16 %v2694
        %v2760 = vunpack.c.l.b16 %v2695
        %v2761 = vunpack.c.l.b16 %v2696
        %v2762 = vunpack.c.l.b16 %v2697
        %v2763 = vunpack.c.l.b16 %v2698
        %v2764 = vunpack.c.l.b16 %v2699
        %v2765 = vunpack.c.l.b16 %v2700
        %v2766 = vunpack.c.l.b16 %v2701
        %v2767 = vunpack.c.l.b16 %v2702
        %v2768 = vunpack.c.l.b16 %v2703
        %v2769 = vunpack.c.l.b16 %v2704
        %v2770 = vunpack.c.l.b16 %v2705
        %v2771 = vunpack.c.l.b16 %v2706
        %v2772 = vunpack.c.l.b16 %v2707
        %v2773 = vunpack.c.l.b16 %v2708
        %v2774 = vunpack.c.l.b16 %v2709
        %v2775 = vunpack.c.l.b16 %v2710
        %v2776 = vunpack.c.l.b16 %v2711
        %v2777 = vunpack.c.l.b16 %v2712
        %v2778 = vunpack.c.l.b16 %v2713
        %v2779 = vunpack.c.l.b16 %v2714
        %v2780 = vunpack.c.l.b16 %v2715
        %v2781 = vpack.c.b16 %v2750, %v2749
        %v2782 = vpack.c.b16 %v2752, %v2751
        %v2783 = vpack.c.b16 %v2754, %v2753
        %v2784 = vpack.c.b16 %v2756, %v2755
        %v2785 = vpack.c.b16 %v2758, %v2757
        %v2786 = vpack.c.b16 %v2760, %v2759
        %v2787 = vpack.c.b16 %v2762, %v2761
        %v2788 = vpack.c.b16 %v2764, %v2763
        %v2789 = vpack.c.b16 %v2766, %v2765
        %v2790 = vpack.c.b16 %v2768, %v2767
        %v2791 = vpack.c.b16 %v2770, %v2769
        %v2792 = vpack.c.b16 %v2772, %v2771
        %v2793 = vpack.c.b16 %v2774, %v2773
        %v2794 = vpack.c.b16 %v2776, %v2775
        %v2795 = vpack.c.b16 %v2778, %v2777
        %v2796 = vpack.c.b16 %v2780, %v2779
        %2813 = vmatprep.subr.bf16.mxu0 0
        %2814 = vmatpush1.bf16.msra.mxu0 %v2781
        %2815 = vmatprep.subr.bf16.mxu0 0
        %2816 = vmatpush1.bf16.msra.mxu0 %v2782
        %2817 = vmatprep.subr.bf16.mxu0 0
        %2818 = vmatpush1.bf16.msra.mxu0 %v2783
        %2819 = vmatprep.subr.bf16.mxu0 0
        %2820 = vmatpush1.bf16.msra.mxu0 %v2784
        %2821 = vmatprep.subr.bf16.mxu0 0
        %2822 = vmatpush1.bf16.msra.mxu0 %v2785
        %2823 = vmatprep.subr.bf16.mxu0 0
        %2824 = vmatpush1.bf16.msra.mxu0 %v2786
        %2825 = vmatprep.subr.bf16.mxu0 0
        %2826 = vmatpush1.bf16.msra.mxu0 %v2787
        %2827 = vmatprep.subr.bf16.mxu0 0
        %2828 = vmatpush1.bf16.msra.mxu0 %v2788
        %2829 = vmatprep.subr.bf16.mxu0 0
        %2830 = vmatpush1.bf16.msra.mxu0 %v2789
        %2831 = vmatprep.subr.bf16.mxu0 0
        %2832 = vmatpush1.bf16.msra.mxu0 %v2790
        %2833 = vmatprep.subr.bf16.mxu0 0
        %2834 = vmatpush1.bf16.msra.mxu0 %v2791
        %2835 = vmatprep.subr.bf16.mxu0 0
        %2836 = vmatpush1.bf16.msra.mxu0 %v2792
        %2837 = vmatprep.subr.bf16.mxu0 0
        %2838 = vmatpush1.bf16.msra.mxu0 %v2793
        %2839 = vmatprep.subr.bf16.mxu0 0
        %2840 = vmatpush1.bf16.msra.mxu0 %v2794
        %2841 = vmatprep.subr.bf16.mxu0 0
        %2842 = vmatpush1.bf16.msra.mxu0 %v2795
        %2843 = vmatprep.subr.bf16.mxu0 0
        %2844 = vmatpush1.bf16.msra.mxu0 %v2796
        %2845 = vmatprep.mubr.bf16.mxu0 %v2683
        %2846 = vmatmul.mubr.bf16.gmra.mrb[0].mxu0 %v2682
        %v2847 = vpop.f32.mrb[0].mxu0
        %v2848 = vadd.f32 %v2716, %v2847
        %v2849 = vpop.f32.mrb[0].mxu0
        %v2850 = vpop.f32.mrb[0].mxu0
        %v2851 = vpop.f32.mrb[0].mxu0
        %2852 = vdwg.mxu0
        %v2853 = vmax.f32 %v2848, 0.0
        %v2854 = vpack.c.bf16 %v2853, %v2853
        %v2855 = vld [vmem:[%s13] sm:$0xf]
        %v2856 = vld [vmem:[%s13 + $0x4] sm:$0xf]
        %v2857 = vld [vmem:[%s13 + $0x8] sm:$0xf]
        %v2858 = vld [vmem:[%s13 + $0xc] sm:$0xf]
        %v2859 = vld [vmem:[%s13 + $0x10] sm:$0xf]
        %v2860 = vld [vmem:[%s13 + $0x14] sm:$0xf]
        %v2861 = vld [vmem:[%s13 + $0x18] sm:$0xf]
        %v2862 = vld [vmem:[%s13 + $0x1c] sm:$0xf]
        %v2863 = vld [vmem:[%s13 + $0x20] sm:$0xf]
        %v2864 = vld [vmem:[%s13 + $0x24] sm:$0xf]
        %v2865 = vld [vmem:[%s13 + $0x28] sm:$0xf]
        %v2866 = vld [vmem:[%s13 + $0x2c] sm:$0xf]
        %v2867 = vld [vmem:[%s13 + $0x30] sm:$0xf]
        %v2868 = vld [vmem:[%s13 + $0x34] sm:$0xf]
        %v2869 = vld [vmem:[%s13 + $0x38] sm:$0xf]
        %v2870 = vld [vmem:[%s13 + $0x3c] sm:$0xf]
        %v2871 = vld [vmem:[#allocation16] sm:$0xf]
        %v2872 = vld [vmem:[#allocation16 + $0x4] sm:$0xf]
        %v2873 = vld [vmem:[#allocation16 + $0x8] sm:$0xf]
        %v2874 = vld [vmem:[#allocation16 + $0xc] sm:$0xf]
        %v2875 = vld [vmem:[#allocation16 + $0x10] sm:$0xf]
        %v2876 = vld [vmem:[#allocation16 + $0x14] sm:$0xf]
        %v2877 = vld [vmem:[#allocation16 + $0x18] sm:$0xf]
        %v2878 = vld [vmem:[#allocation16 + $0x1c] sm:$0xf]
        %v2879 = vld [vmem:[#allocation16 + $0x20] sm:$0xf]
        %v2880 = vld [vmem:[#allocation16 + $0x24] sm:$0xf]
        %v2881 = vld [vmem:[#allocation16 + $0x28] sm:$0xf]
        %v2882 = vld [vmem:[#allocation16 + $0x2c] sm:$0xf]
        %v2895 = vunpack.c.l.b16 %v2871
        %v2896 = vunpack.c.l.b16 %v2872
        %v2897 = vunpack.c.l.b16 %v2873
        %v2898 = vunpack.c.l.b16 %v2874
        %v2899 = vunpack.c.l.b16 %v2875
        %v2900 = vunpack.c.l.b16 %v2876
        %v2901 = vunpack.c.l.b16 %v2877
        %v2902 = vunpack.c.l.b16 %v2878
        %v2903 = vunpack.c.l.b16 %v2879
        %v2904 = vunpack.c.l.b16 %v2880
        %v2905 = vunpack.c.l.b16 %v2881
        %v2906 = vunpack.c.l.b16 %v2882
        %v2907 = vpack.c.b16 %v2896, %v2895
        %v2908 = vpack.c.b16 %v2898, %v2897
        %v2909 = vpack.c.b16 %v2900, %v2899
        %v2910 = vpack.c.b16 %v2902, %v2901
        %v2911 = vpack.c.b16 %v2904, %v2903
        %v2912 = vpack.c.b16 %v2906, %v2905
        %2919 = vmatprep.subr.bf16.mxu0 0
        %2920 = vmatpush1.bf16.msra.mxu0 %v2907
        %2921 = vmatprep.subr.bf16.mxu0 0
        %2922 = vmatpush1.bf16.msra.mxu0 %v2908
        %2923 = vmatprep.subr.bf16.mxu0 0
        %2924 = vmatpush1.bf16.msra.mxu0 %v2909
        %2925 = vmatprep.subr.bf16.mxu0 0
        %2926 = vmatpush1.bf16.msra.mxu0 %v2910
        %2927 = vmatprep.subr.bf16.mxu0 0
        %2928 = vmatpush1.bf16.msra.mxu0 %v2911
        %2929 = vmatprep.subr.bf16.mxu0 0
        %2930 = vmatpush1.bf16.msra.mxu0 %v2912
        %2931 = vmatprep.subr.bf16.mxu0 0
        %2932 = vmatpush1.bf16.msra.mxu0 0
        %2933 = vmatprep.subr.bf16.mxu0 0
        %2934 = vmatpush1.bf16.msra.mxu0 0
        %2935 = vmatprep.subr.bf16.mxu0 0
        %2936 = vmatpush1.bf16.msra.mxu0 0
        %2937 = vmatprep.subr.bf16.mxu0 0
        %2938 = vmatpush1.bf16.msra.mxu0 0
        %2939 = vmatprep.subr.bf16.mxu0 0
        %2940 = vmatpush1.bf16.msra.mxu0 0
        %2941 = vmatprep.subr.bf16.mxu0 0
        %2942 = vmatpush1.bf16.msra.mxu0 0
        %2943 = vmatprep.subr.bf16.mxu0 0
        %2944 = vmatpush1.bf16.msra.mxu0 0
        %2945 = vmatprep.subr.bf16.mxu0 0
        %2946 = vmatpush1.bf16.msra.mxu0 0
        %2947 = vmatprep.subr.bf16.mxu0 0
        %2948 = vmatpush1.bf16.msra.mxu0 0
        %2949 = vmatprep.subr.bf16.mxu0 0
        %2950 = vmatpush1.bf16.msra.mxu0 0
        %2951 = vmatprep.mubr.bf16.mxu0 0
        %2952 = vmatmul.mubr.bf16.gmra.mrb[0].mxu0 %v1286
        %v2953 = vpop.f32.mrb[0].mxu0
        %v2954 = vadd.f32 0.0, %v2953
        %v2955 = vpop.f32.mrb[0].mxu0
        %v2956 = vpop.f32.mrb[0].mxu0
        %v2957 = vpop.f32.mrb[0].mxu0
        %2958 = vdwg.mxu0
        %v2975 = vunpack.c.l.b16 %v2855
        %v2976 = vunpack.c.l.b16 %v2856
        %v2977 = vunpack.c.l.b16 %v2857
        %v2978 = vunpack.c.l.b16 %v2858
        %v2979 = vunpack.c.l.b16 %v2859
        %v2980 = vunpack.c.l.b16 %v2860
        %v2981 = vunpack.c.l.b16 %v2861
        %v2982 = vunpack.c.l.b16 %v2862
        %v2983 = vunpack.c.l.b16 %v2863
        %v2984 = vunpack.c.l.b16 %v2864
        %v2985 = vunpack.c.l.b16 %v2865
        %v2986 = vunpack.c.l.b16 %v2866
        %v2987 = vunpack.c.l.b16 %v2867
        %v2988 = vunpack.c.l.b16 %v2868
        %v2989 = vunpack.c.l.b16 %v2869
        %v2990 = vunpack.c.l.b16 %v2870
        %v2991 = vpack.c.b16 %v2976, %v2975
        %v2992 = vpack.c.b16 %v2978, %v2977
        %v2993 = vpack.c.b16 %v2980, %v2979
        %v2994 = vpack.c.b16 %v2982, %v2981
        %v2995 = vpack.c.b16 %v2984, %v2983
        %v2996 = vpack.c.b16 %v2986, %v2985
        %v2997 = vpack.c.b16 %v2988, %v2987
        %v2998 = vpack.c.b16 %v2990, %v2989
        %3007 = vmatprep.subr.bf16.mxu0 0
        %3008 = vmatpush1.bf16.msra.mxu0 %v2991
        %3009 = vmatprep.subr.bf16.mxu0 0
        %3010 = vmatpush1.bf16.msra.mxu0 %v2992
        %3011 = vmatprep.subr.bf16.mxu0 0
        %3012 = vmatpush1.bf16.msra.mxu0 %v2993
        %3013 = vmatprep.subr.bf16.mxu0 0
        %3014 = vmatpush1.bf16.msra.mxu0 %v2994
        %3015 = vmatprep.subr.bf16.mxu0 0
        %3016 = vmatpush1.bf16.msra.mxu0 %v2995
        %3017 = vmatprep.subr.bf16.mxu0 0
        %3018 = vmatpush1.bf16.msra.mxu0 %v2996
        %3019 = vmatprep.subr.bf16.mxu0 0
        %3020 = vmatpush1.bf16.msra.mxu0 %v2997
        %3021 = vmatprep.subr.bf16.mxu0 0
        %3022 = vmatpush1.bf16.msra.mxu0 %v2998
        %3023 = vmatprep.subr.bf16.mxu0 0
        %3024 = vmatpush1.bf16.msra.mxu0 0
        %3025 = vmatprep.subr.bf16.mxu0 0
        %3026 = vmatpush1.bf16.msra.mxu0 0
        %3027 = vmatprep.subr.bf16.mxu0 0
        %3028 = vmatpush1.bf16.msra.mxu0 0
        %3029 = vmatprep.subr.bf16.mxu0 0
        %3030 = vmatpush1.bf16.msra.mxu0 0
        %3031 = vmatprep.subr.bf16.mxu0 0
        %3032 = vmatpush1.bf16.msra.mxu0 0
        %3033 = vmatprep.subr.bf16.mxu0 0
        %3034 = vmatpush1.bf16.msra.mxu0 0
        %3035 = vmatprep.subr.bf16.mxu0 0
        %3036 = vmatpush1.bf16.msra.mxu0 0
        %3037 = vmatprep.subr.bf16.mxu0 0
        %3038 = vmatpush1.bf16.msra.mxu0 0
        %3039 = vmatprep.mubr.bf16.mxu0 0
        %3040 = vmatmul.mubr.bf16.gmra.mrb[0].mxu0 %v2854
        %v3041 = vpop.f32.mrb[0].mxu0
        %v3042 = vadd.f32 %v2954, %v3041
        %v3043 = vpop.f32.mrb[0].mxu0
        %v3044 = vpop.f32.mrb[0].mxu0
        %v3045 = vpop.f32.mrb[0].mxu0
        %3046 = vdwg.mxu0
        %v3047 = vld [vmem:[#allocation18 + $0x3e] ss:$0 sm:$0xff]
        %v3048 = vadd.f32 %v3042, %v3047
        %3049 = vst [vmem:[%s676] sm:$0xff] %v3048
        %p3050 = scmp.lt.s32.totalorder %s33, 1
        %s3051 = scalar_select %p3050, %s33, 1
        %s3052 = smul.addr %s3051, 8
        %s3053 = scalar_lea.vmem %s16, %s3052
        // Predicated region
        $region129: #{ord_tri_forward.1} parent=83 // pred_check
          %p3054 = pneg %p392
        $region130: #{ord_tri_forward.1} parent=83 // pred_check_branch
          %3056 = sbr.rel (%p3054) target = $region132
        $region131: #{ord_tri_forward.1} parent=83 // pred_region
          _
        $region132: #{ord_tri_forward.1} parent=83 // pred_fallthru
          _
      $region84: #{ord_tri_forward.1} parent=5 // pred_fallthru
        _
      %p3057 = scmp.le.s32.totalorder 2, %s28
      // Predicated region
      $region133: #{ord_tri_forward.1} parent=5 // pred_check
        %p3058 = pneg %p3057
      $region134: #{ord_tri_forward.1} parent=5 // pred_check_branch
        %3060 = sbr.rel (%p3058) target = $region136
      $region135: #{ord_tri_forward.1} parent=5 // pred_region
        %s3061 = ssub.s32 %s28, 2
        // Predicated region
        $region137: #{ord_tri_forward.1} parent=135 // pred_check
          %p3062 = pneg %p398
        $region138: #{ord_tri_forward.1} parent=135 // pred_check_branch
          %3064 = sbr.rel (%p3062) target = $region140
        $region139: #{ord_tri_forward.1} parent=135 // pred_region
          %p3065 = scmp.lt.s32.totalorder %s34, 1
          %s3066 = scalar_select %p3065, %s34, 1
          %s3067 = smul.addr %s3066, 8
          %s3068 = scalar_lea.vmem %s16, %s3067
        $region140: #{ord_tri_forward.1} parent=135 // pred_fallthru
          _
      $region136: #{ord_tri_forward.1} parent=5 // pred_fallthru
        _
    $region6: #{ord_tri_forward.1} parent=1 // loop_footer
      %s32 = sadd.s32 1, %s28
    $region7: #{ord_tri_forward.1} parent=1 // loop_footer_branch
      %27 = sbr.rel target = $region3
    $region8: #{ord_tri_forward.1} parent=1 // loop_exit
      _
    %3069 = vsyncpa [#allocation3], 1
    %s3070 = scalar_lea.sflag [#allocation3], 1
    %3071 = vsyncpa %s3070, 1
    %3072 = vsyncpa [#allocation5], 1
    %3073 = vsyncpa [#allocation8], 1
    %3074 = vsyncpa [#allocation11], 1
    %3075 = vsyncpa [#allocation14], 1
    %3076 = vsyncpa [#allocation17], 1

</llo_original>
